<compile_context>
chip_gen: v5e
topology: v5e:2x2
jax: 0.10.0
libtpu: 0.0.40
codegen_flags: <defaults>
</compile_context>

<pallas_src>
import functools

import jax
import jax.numpy as jnp
from jax.experimental import pallas as pl
from jax.experimental.pallas import tpu as pltpu


# ---------------------------------------------------------------------------
# Pallas kernel: one image, relu(conv + bias), accumulating kh row-taps on MXU
# ---------------------------------------------------------------------------
def _conv_row_kernel(xw_ref, w_ref, b_ref, o_ref, *, kh, stride, Ho):
    """relu(conv2d(x) + b) for a single image.

    xw_ref: [1, H_used, Wo, kw*Cin] (bf16)  W-gathered input columns
    w_ref:  [kh, kw*Cin, Cout]      (bf16)  VMEM-resident weights
    b_ref:  [1, Cout]               (f32)   VMEM-resident bias
    o_ref:  [1, Ho, Wo, Cout]       (bf16)  true-Cout output (no lane padding)
    """
    Wo, Cout = o_ref.shape[2], o_ref.shape[3]
    bias = b_ref[...]                                   # [1, Cout] f32
    for y in range(Ho):                                 # static loop, Ho small
        acc = jnp.zeros((Wo, Cout), jnp.float32) + bias
        for i in range(kh):                             # static loop over kernel rows
            row = xw_ref[0, stride * y + i]             # [Wo, kw*Cin] bf16 (safe int index)
            acc = acc + jnp.dot(row, w_ref[i],
                                preferred_element_type=jnp.float32)
        o_ref[0, y] = jnp.maximum(acc, 0.0).astype(o_ref.dtype)


# ---------------------------------------------------------------------------
# Conv2d (valid padding) + ReLU on NHWC bf16 activations
# ---------------------------------------------------------------------------
def conv2d_relu_nhwc(x_nhwc, weight, bias, stride):
    """PyTorch-equivalent Conv2d(VALID) + ReLU; NHWC in, NHWC bf16 out."""
    N, H, W, Cin = x_nhwc.shape
    Cout, Cin_w, kh, kw = weight.shape
    assert Cin == Cin_w
    Ho = (H - kh) // stride + 1
    Wo = (W - kw) // stride + 1
    H_used = stride * (Ho - 1) + kh

    x = x_nhwc.astype(jnp.bfloat16)

    # Cheap W-axis column gather (kw strided slices in XLA).  K ordering is
    # (kw slow, Cin fast); the kh row taps are resolved inside the kernel.
    # TODO(synk): pull this gather into the kernel too (strided pl.ds reads)
    # to remove the remaining ~1.5x input-size wrapper pass.
    cols = [x[:, :H_used, j:j + stride * (Wo - 1) + 1:stride, :] for j in range(kw)]
    xw = jnp.concatenate(cols, axis=-1)                 # [N, H_used, Wo, kw*Cin]

    # [Cout, Cin, kh, kw] -> [kh, kw, Cin, Cout] -> [kh, kw*Cin, Cout]
    wmat = jnp.transpose(weight, (2, 3, 1, 0)).reshape(kh, kw * Cin, Cout)
    wmat = wmat.astype(jnp.bfloat16)
    bvec = bias.astype(jnp.float32).reshape(1, Cout)

    kernel = functools.partial(_conv_row_kernel, kh=kh, stride=stride, Ho=Ho)

    return pl.pallas_call(
        kernel,
        out_shape=jax.ShapeDtypeStruct((N, Ho, Wo, Cout), jnp.bfloat16),
        grid=(N,),
        in_specs=[
            pl.BlockSpec((1, H_used, Wo, kw * Cin), lambda n: (n, 0, 0, 0)),  # streamed
            pl.BlockSpec((kh, kw * Cin, Cout), lambda n: (0, 0, 0)),          # resident
            pl.BlockSpec((1, Cout), lambda n: (0, 0)),                        # resident
        ],
        out_specs=pl.BlockSpec((1, Ho, Wo, Cout), lambda n: (n, 0, 0, 0)),
        compiler_params=pltpu.CompilerParams(
            dimension_semantics=("parallel",),          # shards batch across TCs on v7x
        ),
    )(xw, wmat, bvec)


# ---------------------------------------------------------------------------
# FeatureExtractor module (PyTorch-facing I/O stays NCHW, f32)
# ---------------------------------------------------------------------------
def init_params(key, input_channels):
    def conv_init(k, cout, cin, ksz):
        kw_, kb_ = jax.random.split(k)
        fan_in = cin * ksz * ksz
        bound = 1.0 / jnp.sqrt(fan_in)
        w = jax.random.uniform(kw_, (cout, cin, ksz, ksz), jnp.float32, -bound, bound)
        b = jax.random.uniform(kb_, (cout,), jnp.float32, -bound, bound)
        return w, b

    k1, k2, k3 = jax.random.split(key, 3)
    return {
        "conv1": conv_init(k1, 32, input_channels, 8),
        "conv2": conv_init(k2, 64, 32, 4),
        "conv3": conv_init(k3, 64, 64, 3),
    }


def feature_extractor(params, x_nchw):
    x = jnp.transpose(x_nchw, (0, 2, 3, 1)).astype(jnp.bfloat16)  # NCHW->NHWC + bf16, once
    x = conv2d_relu_nhwc(x, *params["conv1"], stride=4)
    x = conv2d_relu_nhwc(x, *params["conv2"], stride=2)
    x = conv2d_relu_nhwc(x, *params["conv3"], stride=1)
    return jnp.transpose(x, (0, 3, 1, 2)).astype(jnp.float32)     # NHWC->NCHW, once


# pure-JAX f32 reference for sanity checking
def _reference(params, x):
    def conv(x, w, b, s):
        y = jax.lax.conv_general_dilated(
            x, w, window_strides=(s, s), padding="VALID",
            dimension_numbers=("NCHW", "OIHW", "NCHW"))
        return jax.nn.relu(y + b.reshape(1, -1, 1, 1))
    x = conv(x, *params["conv1"], 4)
    x = conv(x, *params["conv2"], 2)
    x = conv(x, *params["conv3"], 1)
    return x


if __name__ == "__main__":
    key = jax.random.PRNGKey(0)
    k_param, k_x = jax.random.split(key)

    input_channels = 4
    # 36x36 is the smallest spatial size that survives all three convolutions:
    # 36 -> 8 -> 3 -> 1.
    x = jax.random.normal(k_x, (2, input_channels, 36, 36), jnp.float32)
    params = init_params(k_param, input_channels)

    fwd = jax.jit(feature_extractor)
    out = jax.block_until_ready(fwd(params, x))
    ref = jax.block_until_ready(_reference(params, x))

    assert out.shape == (2, 64, 1, 1), out.shape
    # bf16 activations/weights with f32 accumulation: check relative L2 error.
    rel_err = jnp.linalg.norm(out - ref) / (jnp.linalg.norm(ref) + 1e-8)
    assert rel_err < 5e-2, f"mismatch vs JAX reference (rel_err={rel_err})"
    print("KERNEL_OK")
</pallas_src>

<mosaic_0001>
module attributes {stable_mosaic.version = 11 : i64} {
  func.func @_conv_row_kernel(%arg0: i32, %arg1: memref<1x36x8x32xbf16, #tpu.memory_space<vmem>>, %arg2: memref<8x32x32xbf16, #tpu.memory_space<vmem>>, %arg3: memref<1x32xf32, #tpu.memory_space<vmem>>, %arg4: memref<1x8x8x32xbf16, #tpu.memory_space<vmem>>) attributes {dimension_semantics = [#tpu.dimension_semantics<parallel>], iteration_bounds = array<i64: 2>, scalar_prefetch = 0 : i64, scratch_operands = 0 : i64, tpu.core_type = #tpu.core_type<tc>, window_params = [{transform_indices = @transform_0, window_bounds = array<i64: 1, 36, 8, 32>}, {pipeline_mode = #tpu.pipeline_mode<synchronous>, transform_indices = @transform_1, window_bounds = array<i64: 8, 32, 32>}, {pipeline_mode = #tpu.pipeline_mode<synchronous>, transform_indices = @transform_2, window_bounds = array<i64: 1, 32>}, {transform_indices = @transform_3, window_bounds = array<i64: 1, 8, 8, 32>}]} {
    %c0 = arith.constant 0 : index
    %c0_0 = arith.constant 0 : index
    %0 = vector.load %arg3[%c0, %c0_0] : memref<1x32xf32, #tpu.memory_space<vmem>>, vector<1x32xf32>
    %cst = arith.constant 0.000000e+00 : f32
    %1 = vector.broadcast %cst : f32 to vector<8x32xf32>
    %2 = vector.broadcast %0 : vector<1x32xf32> to vector<8x32xf32>
    %3 = arith.addf %1, %2 : vector<8x32xf32>
    %c0_1 = arith.constant 0 : index
    %c0_2 = arith.constant 0 : index
    %c0_3 = arith.constant 0 : index
    %c0_4 = arith.constant 0 : index
    %4 = vector.load %arg1[%c0_1, %c0_2, %c0_3, %c0_4] : memref<1x36x8x32xbf16, #tpu.memory_space<vmem>>, vector<1x1x8x32xbf16>
    %5 = vector.shape_cast %4 : vector<1x1x8x32xbf16> to vector<8x32xbf16>
    %c0_5 = arith.constant 0 : index
    %c0_6 = arith.constant 0 : index
    %c0_7 = arith.constant 0 : index
    %6 = vector.load %arg2[%c0_5, %c0_6, %c0_7] : memref<8x32x32xbf16, #tpu.memory_space<vmem>>, vector<1x32x32xbf16>
    %7 = vector.shape_cast %6 : vector<1x32x32xbf16> to vector<32x32xbf16>
    %cst_8 = arith.constant dense<0.000000e+00> : vector<8x32xf32>
    %8 = tpu.matmul %5, %7, %cst_8 {dimension_numbers = #tpu.dot_dimension_numbers<[1], [0], [0], [1], [0, 0, 1, 1], [], []>} : vector<8x32xbf16>, vector<32x32xbf16>, vector<8x32xf32> -> vector<8x32xf32>
    %9 = arith.addf %3, %8 : vector<8x32xf32>
    %c0_9 = arith.constant 0 : index
    %c1 = arith.constant 1 : index
    %c0_10 = arith.constant 0 : index
    %c0_11 = arith.constant 0 : index
    %10 = vector.load %arg1[%c0_9, %c1, %c0_10, %c0_11] : memref<1x36x8x32xbf16, #tpu.memory_space<vmem>>, vector<1x1x8x32xbf16>
    %11 = vector.shape_cast %10 : vector<1x1x8x32xbf16> to vector<8x32xbf16>
    %c1_12 = arith.constant 1 : index
    %c0_13 = arith.constant 0 : index
    %c0_14 = arith.constant 0 : index
    %12 = vector.load %arg2[%c1_12, %c0_13, %c0_14] : memref<8x32x32xbf16, #tpu.memory_space<vmem>>, vector<1x32x32xbf16>
    %13 = vector.shape_cast %12 : vector<1x32x32xbf16> to vector<32x32xbf16>
    %cst_15 = arith.constant dense<0.000000e+00> : vector<8x32xf32>
    %14 = tpu.matmul %11, %13, %cst_15 {dimension_numbers = #tpu.dot_dimension_numbers<[1], [0], [0], [1], [0, 0, 1, 1], [], []>} : vector<8x32xbf16>, vector<32x32xbf16>, vector<8x32xf32> -> vector<8x32xf32>
    %15 = arith.addf %9, %14 : vector<8x32xf32>
    %c0_16 = arith.constant 0 : index
    %c2 = arith.constant 2 : index
    %c0_17 = arith.constant 0 : index
    %c0_18 = arith.constant 0 : index
    %16 = vector.load %arg1[%c0_16, %c2, %c0_17, %c0_18] : memref<1x36x8x32xbf16, #tpu.memory_space<vmem>>, vector<1x1x8x32xbf16>
    %17 = vector.shape_cast %16 : vector<1x1x8x32xbf16> to vector<8x32xbf16>
    %c2_19 = arith.constant 2 : index
    %c0_20 = arith.constant 0 : index
    %c0_21 = arith.constant 0 : index
    %18 = vector.load %arg2[%c2_19, %c0_20, %c0_21] : memref<8x32x32xbf16, #tpu.memory_space<vmem>>, vector<1x32x32xbf16>
    %19 = vector.shape_cast %18 : vector<1x32x32xbf16> to vector<32x32xbf16>
    %cst_22 = arith.constant dense<0.000000e+00> : vector<8x32xf32>
    %20 = tpu.matmul %17, %19, %cst_22 {dimension_numbers = #tpu.dot_dimension_numbers<[1], [0], [0], [1], [0, 0, 1, 1], [], []>} : vector<8x32xbf16>, vector<32x32xbf16>, vector<8x32xf32> -> vector<8x32xf32>
    %21 = arith.addf %15, %20 : vector<8x32xf32>
    %c0_23 = arith.constant 0 : index
    %c3 = arith.constant 3 : index
    %c0_24 = arith.constant 0 : index
    %c0_25 = arith.constant 0 : index
    %22 = vector.load %arg1[%c0_23, %c3, %c0_24, %c0_25] : memref<1x36x8x32xbf16, #tpu.memory_space<vmem>>, vector<1x1x8x32xbf16>
    %23 = vector.shape_cast %22 : vector<1x1x8x32xbf16> to vector<8x32xbf16>
    %c3_26 = arith.constant 3 : index
    %c0_27 = arith.constant 0 : index
    %c0_28 = arith.constant 0 : index
    %24 = vector.load %arg2[%c3_26, %c0_27, %c0_28] : memref<8x32x32xbf16, #tpu.memory_space<vmem>>, vector<1x32x32xbf16>
    %25 = vector.shape_cast %24 : vector<1x32x32xbf16> to vector<32x32xbf16>
    %cst_29 = arith.constant dense<0.000000e+00> : vector<8x32xf32>
    %26 = tpu.matmul %23, %25, %cst_29 {dimension_numbers = #tpu.dot_dimension_numbers<[1], [0], [0], [1], [0, 0, 1, 1], [], []>} : vector<8x32xbf16>, vector<32x32xbf16>, vector<8x32xf32> -> vector<8x32xf32>
    %27 = arith.addf %21, %26 : vector<8x32xf32>
    %c0_30 = arith.constant 0 : index
    %c4 = arith.constant 4 : index
    %c0_31 = arith.constant 0 : index
    %c0_32 = arith.constant 0 : index
    %28 = vector.load %arg1[%c0_30, %c4, %c0_31, %c0_32] : memref<1x36x8x32xbf16, #tpu.memory_space<vmem>>, vector<1x1x8x32xbf16>
    %29 = vector.shape_cast %28 : vector<1x1x8x32xbf16> to vector<8x32xbf16>
    %c4_33 = arith.constant 4 : index
    %c0_34 = arith.constant 0 : index
    %c0_35 = arith.constant 0 : index
    %30 = vector.load %arg2[%c4_33, %c0_34, %c0_35] : memref<8x32x32xbf16, #tpu.memory_space<vmem>>, vector<1x32x32xbf16>
    %31 = vector.shape_cast %30 : vector<1x32x32xbf16> to vector<32x32xbf16>
    %cst_36 = arith.constant dense<0.000000e+00> : vector<8x32xf32>
    %32 = tpu.matmul %29, %31, %cst_36 {dimension_numbers = #tpu.dot_dimension_numbers<[1], [0], [0], [1], [0, 0, 1, 1], [], []>} : vector<8x32xbf16>, vector<32x32xbf16>, vector<8x32xf32> -> vector<8x32xf32>
    %33 = arith.addf %27, %32 : vector<8x32xf32>
    %c0_37 = arith.constant 0 : index
    %c5 = arith.constant 5 : index
    %c0_38 = arith.constant 0 : index
    %c0_39 = arith.constant 0 : index
    %34 = vector.load %arg1[%c0_37, %c5, %c0_38, %c0_39] : memref<1x36x8x32xbf16, #tpu.memory_space<vmem>>, vector<1x1x8x32xbf16>
    %35 = vector.shape_cast %34 : vector<1x1x8x32xbf16> to vector<8x32xbf16>
    %c5_40 = arith.constant 5 : index
    %c0_41 = arith.constant 0 : index
    %c0_42 = arith.constant 0 : index
    %36 = vector.load %arg2[%c5_40, %c0_41, %c0_42] : memref<8x32x32xbf16, #tpu.memory_space<vmem>>, vector<1x32x32xbf16>
    %37 = vector.shape_cast %36 : vector<1x32x32xbf16> to vector<32x32xbf16>
    %cst_43 = arith.constant dense<0.000000e+00> : vector<8x32xf32>
    %38 = tpu.matmul %35, %37, %cst_43 {dimension_numbers = #tpu.dot_dimension_numbers<[1], [0], [0], [1], [0, 0, 1, 1], [], []>} : vector<8x32xbf16>, vector<32x32xbf16>, vector<8x32xf32> -> vector<8x32xf32>
    %39 = arith.addf %33, %38 : vector<8x32xf32>
    %c0_44 = arith.constant 0 : index
    %c6 = arith.constant 6 : index
    %c0_45 = arith.constant 0 : index
    %c0_46 = arith.constant 0 : index
    %40 = vector.load %arg1[%c0_44, %c6, %c0_45, %c0_46] : memref<1x36x8x32xbf16, #tpu.memory_space<vmem>>, vector<1x1x8x32xbf16>
    %41 = vector.shape_cast %40 : vector<1x1x8x32xbf16> to vector<8x32xbf16>
    %c6_47 = arith.constant 6 : index
    %c0_48 = arith.constant 0 : index
    %c0_49 = arith.constant 0 : index
    %42 = vector.load %arg2[%c6_47, %c0_48, %c0_49] : memref<8x32x32xbf16, #tpu.memory_space<vmem>>, vector<1x32x32xbf16>
    %43 = vector.shape_cast %42 : vector<1x32x32xbf16> to vector<32x32xbf16>
    %cst_50 = arith.constant dense<0.000000e+00> : vector<8x32xf32>
    %44 = tpu.matmul %41, %43, %cst_50 {dimension_numbers = #tpu.dot_dimension_numbers<[1], [0], [0], [1], [0, 0, 1, 1], [], []>} : vector<8x32xbf16>, vector<32x32xbf16>, vector<8x32xf32> -> vector<8x32xf32>
    %45 = arith.addf %39, %44 : vector<8x32xf32>
    %c0_51 = arith.constant 0 : index
    %c7 = arith.constant 7 : index
    %c0_52 = arith.constant 0 : index
    %c0_53 = arith.constant 0 : index
    %46 = vector.load %arg1[%c0_51, %c7, %c0_52, %c0_53] : memref<1x36x8x32xbf16, #tpu.memory_space<vmem>>, vector<1x1x8x32xbf16>
    %47 = vector.shape_cast %46 : vector<1x1x8x32xbf16> to vector<8x32xbf16>
    %c7_54 = arith.constant 7 : index
    %c0_55 = arith.constant 0 : index
    %c0_56 = arith.constant 0 : index
    %48 = vector.load %arg2[%c7_54, %c0_55, %c0_56] : memref<8x32x32xbf16, #tpu.memory_space<vmem>>, vector<1x32x32xbf16>
    %49 = vector.shape_cast %48 : vector<1x32x32xbf16> to vector<32x32xbf16>
    %cst_57 = arith.constant dense<0.000000e+00> : vector<8x32xf32>
    %50 = tpu.matmul %47, %49, %cst_57 {dimension_numbers = #tpu.dot_dimension_numbers<[1], [0], [0], [1], [0, 0, 1, 1], [], []>} : vector<8x32xbf16>, vector<32x32xbf16>, vector<8x32xf32> -> vector<8x32xf32>
    %51 = arith.addf %45, %50 : vector<8x32xf32>
    %cst_58 = arith.constant 0.000000e+00 : f32
    %52 = vector.broadcast %cst_58 : f32 to vector<8x32xf32>
    %53 = arith.maximumf %51, %52 : vector<8x32xf32>
    %54 = arith.truncf %53 : vector<8x32xf32> to vector<8x32xbf16>
    %c0_59 = arith.constant 0 : index
    %c0_60 = arith.constant 0 : index
    %c0_61 = arith.constant 0 : index
    %c0_62 = arith.constant 0 : index
    %55 = vector.load %arg4[%c0_59, %c0_60, %c0_61, %c0_62] : memref<1x8x8x32xbf16, #tpu.memory_space<vmem>>, vector<1x1x8x32xbf16>
    %56 = vector.shape_cast %55 : vector<1x1x8x32xbf16> to vector<8x32xbf16>
    %57 = vector.shape_cast %54 : vector<8x32xbf16> to vector<1x1x8x32xbf16>
    tpu.vector_store %arg4[%c0_59, %c0_60, %c0_61, %c0_62], %57 {strides = array<i32>} : memref<1x8x8x32xbf16, #tpu.memory_space<vmem>>, vector<1x1x8x32xbf16>,
    %cst_63 = arith.constant 0.000000e+00 : f32
    %58 = vector.broadcast %cst_63 : f32 to vector<8x32xf32>
    %59 = vector.broadcast %0 : vector<1x32xf32> to vector<8x32xf32>
    %60 = arith.addf %58, %59 : vector<8x32xf32>
    %c0_64 = arith.constant 0 : index
    %c4_65 = arith.constant 4 : index
    %c0_66 = arith.constant 0 : index
    %c0_67 = arith.constant 0 : index
    %61 = vector.load %arg1[%c0_64, %c4_65, %c0_66, %c0_67] : memref<1x36x8x32xbf16, #tpu.memory_space<vmem>>, vector<1x1x8x32xbf16>
    %62 = vector.shape_cast %61 : vector<1x1x8x32xbf16> to vector<8x32xbf16>
    %c0_68 = arith.constant 0 : index
    %c0_69 = arith.constant 0 : index
    %c0_70 = arith.constant 0 : index
    %63 = vector.load %arg2[%c0_68, %c0_69, %c0_70] : memref<8x32x32xbf16, #tpu.memory_space<vmem>>, vector<1x32x32xbf16>
    %64 = vector.shape_cast %63 : vector<1x32x32xbf16> to vector<32x32xbf16>
    %cst_71 = arith.constant dense<0.000000e+00> : vector<8x32xf32>
    %65 = tpu.matmul %62, %64, %cst_71 {dimension_numbers = #tpu.dot_dimension_numbers<[1], [0], [0], [1], [0, 0, 1, 1], [], []>} : vector<8x32xbf16>, vector<32x32xbf16>, vector<8x32xf32> -> vector<8x32xf32>
    %66 = arith.addf %60, %65 : vector<8x32xf32>
    %c0_72 = arith.constant 0 : index
    %c5_73 = arith.constant 5 : index
    %c0_74 = arith.constant 0 : index
    %c0_75 = arith.constant 0 : index
    %67 = vector.load %arg1[%c0_72, %c5_73, %c0_74, %c0_75] : memref<1x36x8x32xbf16, #tpu.memory_space<vmem>>, vector<1x1x8x32xbf16>
    %68 = vector.shape_cast %67 : vector<1x1x8x32xbf16> to vector<8x32xbf16>
    %c1_76 = arith.constant 1 : index
    %c0_77 = arith.constant 0 : index
    %c0_78 = arith.constant 0 : index
    %69 = vector.load %arg2[%c1_76, %c0_77, %c0_78] : memref<8x32x32xbf16, #tpu.memory_space<vmem>>, vector<1x32x32xbf16>
    %70 = vector.shape_cast %69 : vector<1x32x32xbf16> to vector<32x32xbf16>
    %cst_79 = arith.constant dense<0.000000e+00> : vector<8x32xf32>
    %71 = tpu.matmul %68, %70, %cst_79 {dimension_numbers = #tpu.dot_dimension_numbers<[1], [0], [0], [1], [0, 0, 1, 1], [], []>} : vector<8x32xbf16>, vector<32x32xbf16>, vector<8x32xf32> -> vector<8x32xf32>
    %72 = arith.addf %66, %71 : vector<8x32xf32>
    %c0_80 = arith.constant 0 : index
    %c6_81 = arith.constant 6 : index
    %c0_82 = arith.constant 0 : index
    %c0_83 = arith.constant 0 : index
    %73 = vector.load %arg1[%c0_80, %c6_81, %c0_82, %c0_83] : memref<1x36x8x32xbf16, #tpu.memory_space<vmem>>, vector<1x1x8x32xbf16>
    %74 = vector.shape_cast %73 : vector<1x1x8x32xbf16> to vector<8x32xbf16>
    %c2_84 = arith.constant 2 : index
    %c0_85 = arith.constant 0 : index
    %c0_86 = arith.constant 0 : index
    %75 = vector.load %arg2[%c2_84, %c0_85, %c0_86] : memref<8x32x32xbf16, #tpu.memory_space<vmem>>, vector<1x32x32xbf16>
    %76 = vector.shape_cast %75 : vector<1x32x32xbf16> to vector<32x32xbf16>
    %cst_87 = arith.constant dense<0.000000e+00> : vector<8x32xf32>
    %77 = tpu.matmul %74, %76, %cst_87 {dimension_numbers = #tpu.dot_dimension_numbers<[1], [0], [0], [1], [0, 0, 1, 1], [], []>} : vector<8x32xbf16>, vector<32x32xbf16>, vector<8x32xf32> -> vector<8x32xf32>
    %78 = arith.addf %72, %77 : vector<8x32xf32>
    %c0_88 = arith.constant 0 : index
    %c7_89 = arith.constant 7 : index
    %c0_90 = arith.constant 0 : index
    %c0_91 = arith.constant 0 : index
    %79 = vector.load %arg1[%c0_88, %c7_89, %c0_90, %c0_91] : memref<1x36x8x32xbf16, #tpu.memory_space<vmem>>, vector<1x1x8x32xbf16>
    %80 = vector.shape_cast %79 : vector<1x1x8x32xbf16> to vector<8x32xbf16>
    %c3_92 = arith.constant 3 : index
    %c0_93 = arith.constant 0 : index
    %c0_94 = arith.constant 0 : index
    %81 = vector.load %arg2[%c3_92, %c0_93, %c0_94] : memref<8x32x32xbf16, #tpu.memory_space<vmem>>, vector<1x32x32xbf16>
    %82 = vector.shape_cast %81 : vector<1x32x32xbf16> to vector<32x32xbf16>
    %cst_95 = arith.constant dense<0.000000e+00> : vector<8x32xf32>
    %83 = tpu.matmul %80, %82, %cst_95 {dimension_numbers = #tpu.dot_dimension_numbers<[1], [0], [0], [1], [0, 0, 1, 1], [], []>} : vector<8x32xbf16>, vector<32x32xbf16>, vector<8x32xf32> -> vector<8x32xf32>
    %84 = arith.addf %78, %83 : vector<8x32xf32>
    %c0_96 = arith.constant 0 : index
    %c8 = arith.constant 8 : index
    %c0_97 = arith.constant 0 : index
    %c0_98 = arith.constant 0 : index
    %85 = vector.load %arg1[%c0_96, %c8, %c0_97, %c0_98] : memref<1x36x8x32xbf16, #tpu.memory_space<vmem>>, vector<1x1x8x32xbf16>
    %86 = vector.shape_cast %85 : vector<1x1x8x32xbf16> to vector<8x32xbf16>
    %c4_99 = arith.constant 4 : index
    %c0_100 = arith.constant 0 : index
    %c0_101 = arith.constant 0 : index
    %87 = vector.load %arg2[%c4_99, %c0_100, %c0_101] : memref<8x32x32xbf16, #tpu.memory_space<vmem>>, vector<1x32x32xbf16>
    %88 = vector.shape_cast %87 : vector<1x32x32xbf16> to vector<32x32xbf16>
    %cst_102 = arith.constant dense<0.000000e+00> : vector<8x32xf32>
    %89 = tpu.matmul %86, %88, %cst_102 {dimension_numbers = #tpu.dot_dimension_numbers<[1], [0], [0], [1], [0, 0, 1, 1], [], []>} : vector<8x32xbf16>, vector<32x32xbf16>, vector<8x32xf32> -> vector<8x32xf32>
    %90 = arith.addf %84, %89 : vector<8x32xf32>
    %c0_103 = arith.constant 0 : index
    %c9 = arith.constant 9 : index
    %c0_104 = arith.constant 0 : index
    %c0_105 = arith.constant 0 : index
    %91 = vector.load %arg1[%c0_103, %c9, %c0_104, %c0_105] : memref<1x36x8x32xbf16, #tpu.memory_space<vmem>>, vector<1x1x8x32xbf16>
    %92 = vector.shape_cast %91 : vector<1x1x8x32xbf16> to vector<8x32xbf16>
    %c5_106 = arith.constant 5 : index
    %c0_107 = arith.constant 0 : index
    %c0_108 = arith.constant 0 : index
    %93 = vector.load %arg2[%c5_106, %c0_107, %c0_108] : memref<8x32x32xbf16, #tpu.memory_space<vmem>>, vector<1x32x32xbf16>
    %94 = vector.shape_cast %93 : vector<1x32x32xbf16> to vector<32x32xbf16>
    %cst_109 = arith.constant dense<0.000000e+00> : vector<8x32xf32>
    %95 = tpu.matmul %92, %94, %cst_109 {dimension_numbers = #tpu.dot_dimension_numbers<[1], [0], [0], [1], [0, 0, 1, 1], [], []>} : vector<8x32xbf16>, vector<32x32xbf16>, vector<8x32xf32> -> vector<8x32xf32>
    %96 = arith.addf %90, %95 : vector<8x32xf32>
    %c0_110 = arith.constant 0 : index
    %c10 = arith.constant 10 : index
    %c0_111 = arith.constant 0 : index
    %c0_112 = arith.constant 0 : index
    %97 = vector.load %arg1[%c0_110, %c10, %c0_111, %c0_112] : memref<1x36x8x32xbf16, #tpu.memory_space<vmem>>, vector<1x1x8x32xbf16>
    %98 = vector.shape_cast %97 : vector<1x1x8x32xbf16> to vector<8x32xbf16>
    %c6_113 = arith.constant 6 : index
    %c0_114 = arith.constant 0 : index
    %c0_115 = arith.constant 0 : index
    %99 = vector.load %arg2[%c6_113, %c0_114, %c0_115] : memref<8x32x32xbf16, #tpu.memory_space<vmem>>, vector<1x32x32xbf16>
    %100 = vector.shape_cast %99 : vector<1x32x32xbf16> to vector<32x32xbf16>
    %cst_116 = arith.constant dense<0.000000e+00> : vector<8x32xf32>
    %101 = tpu.matmul %98, %100, %cst_116 {dimension_numbers = #tpu.dot_dimension_numbers<[1], [0], [0], [1], [0, 0, 1, 1], [], []>} : vector<8x32xbf16>, vector<32x32xbf16>, vector<8x32xf32> -> vector<8x32xf32>
    %102 = arith.addf %96, %101 : vector<8x32xf32>
    %c0_117 = arith.constant 0 : index
    %c11 = arith.constant 11 : index
    %c0_118 = arith.constant 0 : index
    %c0_119 = arith.constant 0 : index
    %103 = vector.load %arg1[%c0_117, %c11, %c0_118, %c0_119] : memref<1x36x8x32xbf16, #tpu.memory_space<vmem>>, vector<1x1x8x32xbf16>
    %104 = vector.shape_cast %103 : vector<1x1x8x32xbf16> to vector<8x32xbf16>
    %c7_120 = arith.constant 7 : index
    %c0_121 = arith.constant 0 : index
    %c0_122 = arith.constant 0 : index
    %105 = vector.load %arg2[%c7_120, %c0_121, %c0_122] : memref<8x32x32xbf16, #tpu.memory_space<vmem>>, vector<1x32x32xbf16>
    %106 = vector.shape_cast %105 : vector<1x32x32xbf16> to vector<32x32xbf16>
    %cst_123 = arith.constant dense<0.000000e+00> : vector<8x32xf32>
    %107 = tpu.matmul %104, %106, %cst_123 {dimension_numbers = #tpu.dot_dimension_numbers<[1], [0], [0], [1], [0, 0, 1, 1], [], []>} : vector<8x32xbf16>, vector<32x32xbf16>, vector<8x32xf32> -> vector<8x32xf32>
    %108 = arith.addf %102, %107 : vector<8x32xf32>
    %cst_124 = arith.constant 0.000000e+00 : f32
    %109 = vector.broadcast %cst_124 : f32 to vector<8x32xf32>
    %110 = arith.maximumf %108, %109 : vector<8x32xf32>
    %111 = arith.truncf %110 : vector<8x32xf32> to vector<8x32xbf16>
    %c0_125 = arith.constant 0 : index
    %c1_126 = arith.constant 1 : index
    %c0_127 = arith.constant 0 : index
    %c0_128 = arith.constant 0 : index
    %112 = vector.load %arg4[%c0_125, %c1_126, %c0_127, %c0_128] : memref<1x8x8x32xbf16, #tpu.memory_space<vmem>>, vector<1x1x8x32xbf16>
    %113 = vector.shape_cast %112 : vector<1x1x8x32xbf16> to vector<8x32xbf16>
    %114 = vector.shape_cast %111 : vector<8x32xbf16> to vector<1x1x8x32xbf16>
    tpu.vector_store %arg4[%c0_125, %c1_126, %c0_127, %c0_128], %114 {strides = array<i32>} : memref<1x8x8x32xbf16, #tpu.memory_space<vmem>>, vector<1x1x8x32xbf16>,
    %cst_129 = arith.constant 0.000000e+00 : f32
    %115 = vector.broadcast %cst_129 : f32 to vector<8x32xf32>
    %116 = vector.broadcast %0 : vector<1x32xf32> to vector<8x32xf32>
    %117 = arith.addf %115, %116 : vector<8x32xf32>
    %c0_130 = arith.constant 0 : index
    %c8_131 = arith.constant 8 : index
    %c0_132 = arith.constant 0 : index
    %c0_133 = arith.constant 0 : index
    %118 = vector.load %arg1[%c0_130, %c8_131, %c0_132, %c0_133] : memref<1x36x8x32xbf16, #tpu.memory_space<vmem>>, vector<1x1x8x32xbf16>
    %119 = vector.shape_cast %118 : vector<1x1x8x32xbf16> to vector<8x32xbf16>
    %c0_134 = arith.constant 0 : index
    %c0_135 = arith.constant 0 : index
    %c0_136 = arith.constant 0 : index
    %120 = vector.load %arg2[%c0_134, %c0_135, %c0_136] : memref<8x32x32xbf16, #tpu.memory_space<vmem>>, vector<1x32x32xbf16>
    %121 = vector.shape_cast %120 : vector<1x32x32xbf16> to vector<32x32xbf16>
    %cst_137 = arith.constant dense<0.000000e+00> : vector<8x32xf32>
    %122 = tpu.matmul %119, %121, %cst_137 {dimension_numbers = #tpu.dot_dimension_numbers<[1], [0], [0], [1], [0, 0, 1, 1], [], []>} : vector<8x32xbf16>, vector<32x32xbf16>, vector<8x32xf32> -> vector<8x32xf32>
    %123 = arith.addf %117, %122 : vector<8x32xf32>
    %c0_138 = arith.constant 0 : index
    %c9_139 = arith.constant 9 : index
    %c0_140 = arith.constant 0 : index
    %c0_141 = arith.constant 0 : index
    %124 = vector.load %arg1[%c0_138, %c9_139, %c0_140, %c0_141] : memref<1x36x8x32xbf16, #tpu.memory_space<vmem>>, vector<1x1x8x32xbf16>
    %125 = vector.shape_cast %124 : vector<1x1x8x32xbf16> to vector<8x32xbf16>
    %c1_142 = arith.constant 1 : index
    %c0_143 = arith.constant 0 : index
    %c0_144 = arith.constant 0 : index
    %126 = vector.load %arg2[%c1_142, %c0_143, %c0_144] : memref<8x32x32xbf16, #tpu.memory_space<vmem>>, vector<1x32x32xbf16>
    %127 = vector.shape_cast %126 : vector<1x32x32xbf16> to vector<32x32xbf16>
    %cst_145 = arith.constant dense<0.000000e+00> : vector<8x32xf32>
    %128 = tpu.matmul %125, %127, %cst_145 {dimension_numbers = #tpu.dot_dimension_numbers<[1], [0], [0], [1], [0, 0, 1, 1], [], []>} : vector<8x32xbf16>, vector<32x32xbf16>, vector<8x32xf32> -> vector<8x32xf32>
    %129 = arith.addf %123, %128 : vector<8x32xf32>
    %c0_146 = arith.constant 0 : index
    %c10_147 = arith.constant 10 : index
    %c0_148 = arith.constant 0 : index
    %c0_149 = arith.constant 0 : index
    %130 = vector.load %arg1[%c0_146, %c10_147, %c0_148, %c0_149] : memref<1x36x8x32xbf16, #tpu.memory_space<vmem>>, vector<1x1x8x32xbf16>
    %131 = vector.shape_cast %130 : vector<1x1x8x32xbf16> to vector<8x32xbf16>
    %c2_150 = arith.constant 2 : index
    %c0_151 = arith.constant 0 : index
    %c0_152 = arith.constant 0 : index
    %132 = vector.load %arg2[%c2_150, %c0_151, %c0_152] : memref<8x32x32xbf16, #tpu.memory_space<vmem>>, vector<1x32x32xbf16>
    %133 = vector.shape_cast %132 : vector<1x32x32xbf16> to vector<32x32xbf16>
    %cst_153 = arith.constant dense<0.000000e+00> : vector<8x32xf32>
    %134 = tpu.matmul %131, %133, %cst_153 {dimension_numbers = #tpu.dot_dimension_numbers<[1], [0], [0], [1], [0, 0, 1, 1], [], []>} : vector<8x32xbf16>, vector<32x32xbf16>, vector<8x32xf32> -> vector<8x32xf32>
    %135 = arith.addf %129, %134 : vector<8x32xf32>
    %c0_154 = arith.constant 0 : index
    %c11_155 = arith.constant 11 : index
    %c0_156 = arith.constant 0 : index
    %c0_157 = arith.constant 0 : index
    %136 = vector.load %arg1[%c0_154, %c11_155, %c0_156, %c0_157] : memref<1x36x8x32xbf16, #tpu.memory_space<vmem>>, vector<1x1x8x32xbf16>
    %137 = vector.shape_cast %136 : vector<1x1x8x32xbf16> to vector<8x32xbf16>
    %c3_158 = arith.constant 3 : index
    %c0_159 = arith.constant 0 : index
    %c0_160 = arith.constant 0 : index
    %138 = vector.load %arg2[%c3_158, %c0_159, %c0_160] : memref<8x32x32xbf16, #tpu.memory_space<vmem>>, vector<1x32x32xbf16>
    %139 = vector.shape_cast %138 : vector<1x32x32xbf16> to vector<32x32xbf16>
    %cst_161 = arith.constant dense<0.000000e+00> : vector<8x32xf32>
    %140 = tpu.matmul %137, %139, %cst_161 {dimension_numbers = #tpu.dot_dimension_numbers<[1], [0], [0], [1], [0, 0, 1, 1], [], []>} : vector<8x32xbf16>, vector<32x32xbf16>, vector<8x32xf32> -> vector<8x32xf32>
    %141 = arith.addf %135, %140 : vector<8x32xf32>
    %c0_162 = arith.constant 0 : index
    %c12 = arith.constant 12 : index
    %c0_163 = arith.constant 0 : index
    %c0_164 = arith.constant 0 : index
    %142 = vector.load %arg1[%c0_162, %c12, %c0_163, %c0_164] : memref<1x36x8x32xbf16, #tpu.memory_space<vmem>>, vector<1x1x8x32xbf16>
    %143 = vector.shape_cast %142 : vector<1x1x8x32xbf16> to vector<8x32xbf16>
    %c4_165 = arith.constant 4 : index
    %c0_166 = arith.constant 0 : index
    %c0_167 = arith.constant 0 : index
    %144 = vector.load %arg2[%c4_165, %c0_166, %c0_167] : memref<8x32x32xbf16, #tpu.memory_space<vmem>>, vector<1x32x32xbf16>
    %145 = vector.shape_cast %144 : vector<1x32x32xbf16> to vector<32x32xbf16>
    %cst_168 = arith.constant dense<0.000000e+00> : vector<8x32xf32>
    %146 = tpu.matmul %143, %145, %cst_168 {dimension_numbers = #tpu.dot_dimension_numbers<[1], [0], [0], [1], [0, 0, 1, 1], [], []>} : vector<8x32xbf16>, vector<32x32xbf16>, vector<8x32xf32> -> vector<8x32xf32>
    %147 = arith.addf %141, %146 : vector<8x32xf32>
    %c0_169 = arith.constant 0 : index
    %c13 = arith.constant 13 : index
    %c0_170 = arith.constant 0 : index
    %c0_171 = arith.constant 0 : index
    %148 = vector.load %arg1[%c0_169, %c13, %c0_170, %c0_171] : memref<1x36x8x32xbf16, #tpu.memory_space<vmem>>, vector<1x1x8x32xbf16>
    %149 = vector.shape_cast %148 : vector<1x1x8x32xbf16> to vector<8x32xbf16>
    %c5_172 = arith.constant 5 : index
    %c0_173 = arith.constant 0 : index
    %c0_174 = arith.constant 0 : index
    %150 = vector.load %arg2[%c5_172, %c0_173, %c0_174] : memref<8x32x32xbf16, #tpu.memory_space<vmem>>, vector<1x32x32xbf16>
    %151 = vector.shape_cast %150 : vector<1x32x32xbf16> to vector<32x32xbf16>
    %cst_175 = arith.constant dense<0.000000e+00> : vector<8x32xf32>
    %152 = tpu.matmul %149, %151, %cst_175 {dimension_numbers = #tpu.dot_dimension_numbers<[1], [0], [0], [1], [0, 0, 1, 1], [], []>} : vector<8x32xbf16>, vector<32x32xbf16>, vector<8x32xf32> -> vector<8x32xf32>
    %153 = arith.addf %147, %152 : vector<8x32xf32>
    %c0_176 = arith.constant 0 : index
    %c14 = arith.constant 14 : index
    %c0_177 = arith.constant 0 : index
    %c0_178 = arith.constant 0 : index
    %154 = vector.load %arg1[%c0_176, %c14, %c0_177, %c0_178] : memref<1x36x8x32xbf16, #tpu.memory_space<vmem>>, vector<1x1x8x32xbf16>
    %155 = vector.shape_cast %154 : vector<1x1x8x32xbf16> to vector<8x32xbf16>
    %c6_179 = arith.constant 6 : index
    %c0_180 = arith.constant 0 : index
    %c0_181 = arith.constant 0 : index
    %156 = vector.load %arg2[%c6_179, %c0_180, %c0_181] : memref<8x32x32xbf16, #tpu.memory_space<vmem>>, vector<1x32x32xbf16>
    %157 = vector.shape_cast %156 : vector<1x32x32xbf16> to vector<32x32xbf16>
    %cst_182 = arith.constant dense<0.000000e+00> : vector<8x32xf32>
    %158 = tpu.matmul %155, %157, %cst_182 {dimension_numbers = #tpu.dot_dimension_numbers<[1], [0], [0], [1], [0, 0, 1, 1], [], []>} : vector<8x32xbf16>, vector<32x32xbf16>, vector<8x32xf32> -> vector<8x32xf32>
    %159 = arith.addf %153, %158 : vector<8x32xf32>
    %c0_183 = arith.constant 0 : index
    %c15 = arith.constant 15 : index
    %c0_184 = arith.constant 0 : index
    %c0_185 = arith.constant 0 : index
    %160 = vector.load %arg1[%c0_183, %c15, %c0_184, %c0_185] : memref<1x36x8x32xbf16, #tpu.memory_space<vmem>>, vector<1x1x8x32xbf16>
    %161 = vector.shape_cast %160 : vector<1x1x8x32xbf16> to vector<8x32xbf16>
    %c7_186 = arith.constant 7 : index
    %c0_187 = arith.constant 0 : index
    %c0_188 = arith.constant 0 : index
    %162 = vector.load %arg2[%c7_186, %c0_187, %c0_188] : memref<8x32x32xbf16, #tpu.memory_space<vmem>>, vector<1x32x32xbf16>
    %163 = vector.shape_cast %162 : vector<1x32x32xbf16> to vector<32x32xbf16>
    %cst_189 = arith.constant dense<0.000000e+00> : vector<8x32xf32>
    %164 = tpu.matmul %161, %163, %cst_189 {dimension_numbers = #tpu.dot_dimension_numbers<[1], [0], [0], [1], [0, 0, 1, 1], [], []>} : vector<8x32xbf16>, vector<32x32xbf16>, vector<8x32xf32> -> vector<8x32xf32>
    %165 = arith.addf %159, %164 : vector<8x32xf32>
    %cst_190 = arith.constant 0.000000e+00 : f32
    %166 = vector.broadcast %cst_190 : f32 to vector<8x32xf32>
    %167 = arith.maximumf %165, %166 : vector<8x32xf32>
    %168 = arith.truncf %167 : vector<8x32xf32> to vector<8x32xbf16>
    %c0_191 = arith.constant 0 : index
    %c2_192 = arith.constant 2 : index
    %c0_193 = arith.constant 0 : index
    %c0_194 = arith.constant 0 : index
    %169 = vector.load %arg4[%c0_191, %c2_192, %c0_193, %c0_194] : memref<1x8x8x32xbf16, #tpu.memory_space<vmem>>, vector<1x1x8x32xbf16>
    %170 = vector.shape_cast %169 : vector<1x1x8x32xbf16> to vector<8x32xbf16>
    %171 = vector.shape_cast %168 : vector<8x32xbf16> to vector<1x1x8x32xbf16>
    tpu.vector_store %arg4[%c0_191, %c2_192, %c0_193, %c0_194], %171 {strides = array<i32>} : memref<1x8x8x32xbf16, #tpu.memory_space<vmem>>, vector<1x1x8x32xbf16>,
    %cst_195 = arith.constant 0.000000e+00 : f32
    %172 = vector.broadcast %cst_195 : f32 to vector<8x32xf32>
    %173 = vector.broadcast %0 : vector<1x32xf32> to vector<8x32xf32>
    %174 = arith.addf %172, %173 : vector<8x32xf32>
    %c0_196 = arith.constant 0 : index
    %c12_197 = arith.constant 12 : index
    %c0_198 = arith.constant 0 : index
    %c0_199 = arith.constant 0 : index
    %175 = vector.load %arg1[%c0_196, %c12_197, %c0_198, %c0_199] : memref<1x36x8x32xbf16, #tpu.memory_space<vmem>>, vector<1x1x8x32xbf16>
    %176 = vector.shape_cast %175 : vector<1x1x8x32xbf16> to vector<8x32xbf16>
    %c0_200 = arith.constant 0 : index
    %c0_201 = arith.constant 0 : index
    %c0_202 = arith.constant 0 : index
    %177 = vector.load %arg2[%c0_200, %c0_201, %c0_202] : memref<8x32x32xbf16, #tpu.memory_space<vmem>>, vector<1x32x32xbf16>
    %178 = vector.shape_cast %177 : vector<1x32x32xbf16> to vector<32x32xbf16>
    %cst_203 = arith.constant dense<0.000000e+00> : vector<8x32xf32>
    %179 = tpu.matmul %176, %178, %cst_203 {dimension_numbers = #tpu.dot_dimension_numbers<[1], [0], [0], [1], [0, 0, 1, 1], [], []>} : vector<8x32xbf16>, vector<32x32xbf16>, vector<8x32xf32> -> vector<8x32xf32>
    %180 = arith.addf %174, %179 : vector<8x32xf32>
    %c0_204 = arith.constant 0 : index
    %c13_205 = arith.constant 13 : index
    %c0_206 = arith.constant 0 : index
    %c0_207 = arith.constant 0 : index
    %181 = vector.load %arg1[%c0_204, %c13_205, %c0_206, %c0_207] : memref<1x36x8x32xbf16, #tpu.memory_space<vmem>>, vector<1x1x8x32xbf16>
    %182 = vector.shape_cast %181 : vector<1x1x8x32xbf16> to vector<8x32xbf16>
    %c1_208 = arith.constant 1 : index
    %c0_209 = arith.constant 0 : index
    %c0_210 = arith.constant 0 : index
    %183 = vector.load %arg2[%c1_208, %c0_209, %c0_210] : memref<8x32x32xbf16, #tpu.memory_space<vmem>>, vector<1x32x32xbf16>
    %184 = vector.shape_cast %183 : vector<1x32x32xbf16> to vector<32x32xbf16>
    %cst_211 = arith.constant dense<0.000000e+00> : vector<8x32xf32>
    %185 = tpu.matmul %182, %184, %cst_211 {dimension_numbers = #tpu.dot_dimension_numbers<[1], [0], [0], [1], [0, 0, 1, 1], [], []>} : vector<8x32xbf16>, vector<32x32xbf16>, vector<8x32xf32> -> vector<8x32xf32>
    %186 = arith.addf %180, %185 : vector<8x32xf32>
    %c0_212 = arith.constant 0 : index
    %c14_213 = arith.constant 14 : index
    %c0_214 = arith.constant 0 : index
    %c0_215 = arith.constant 0 : index
    %187 = vector.load %arg1[%c0_212, %c14_213, %c0_214, %c0_215] : memref<1x36x8x32xbf16, #tpu.memory_space<vmem>>, vector<1x1x8x32xbf16>
    %188 = vector.shape_cast %187 : vector<1x1x8x32xbf16> to vector<8x32xbf16>
    %c2_216 = arith.constant 2 : index
    %c0_217 = arith.constant 0 : index
    %c0_218 = arith.constant 0 : index
    %189 = vector.load %arg2[%c2_216, %c0_217, %c0_218] : memref<8x32x32xbf16, #tpu.memory_space<vmem>>, vector<1x32x32xbf16>
    %190 = vector.shape_cast %189 : vector<1x32x32xbf16> to vector<32x32xbf16>
    %cst_219 = arith.constant dense<0.000000e+00> : vector<8x32xf32>
    %191 = tpu.matmul %188, %190, %cst_219 {dimension_numbers = #tpu.dot_dimension_numbers<[1], [0], [0], [1], [0, 0, 1, 1], [], []>} : vector<8x32xbf16>, vector<32x32xbf16>, vector<8x32xf32> -> vector<8x32xf32>
    %192 = arith.addf %186, %191 : vector<8x32xf32>
    %c0_220 = arith.constant 0 : index
    %c15_221 = arith.constant 15 : index
    %c0_222 = arith.constant 0 : index
    %c0_223 = arith.constant 0 : index
    %193 = vector.load %arg1[%c0_220, %c15_221, %c0_222, %c0_223] : memref<1x36x8x32xbf16, #tpu.memory_space<vmem>>, vector<1x1x8x32xbf16>
    %194 = vector.shape_cast %193 : vector<1x1x8x32xbf16> to vector<8x32xbf16>
    %c3_224 = arith.constant 3 : index
    %c0_225 = arith.constant 0 : index
    %c0_226 = arith.constant 0 : index
    %195 = vector.load %arg2[%c3_224, %c0_225, %c0_226] : memref<8x32x32xbf16, #tpu.memory_space<vmem>>, vector<1x32x32xbf16>
    %196 = vector.shape_cast %195 : vector<1x32x32xbf16> to vector<32x32xbf16>
    %cst_227 = arith.constant dense<0.000000e+00> : vector<8x32xf32>
    %197 = tpu.matmul %194, %196, %cst_227 {dimension_numbers = #tpu.dot_dimension_numbers<[1], [0], [0], [1], [0, 0, 1, 1], [], []>} : vector<8x32xbf16>, vector<32x32xbf16>, vector<8x32xf32> -> vector<8x32xf32>
    %198 = arith.addf %192, %197 : vector<8x32xf32>
    %c0_228 = arith.constant 0 : index
    %c16 = arith.constant 16 : index
    %c0_229 = arith.constant 0 : index
    %c0_230 = arith.constant 0 : index
    %199 = vector.load %arg1[%c0_228, %c16, %c0_229, %c0_230] : memref<1x36x8x32xbf16, #tpu.memory_space<vmem>>, vector<1x1x8x32xbf16>
    %200 = vector.shape_cast %199 : vector<1x1x8x32xbf16> to vector<8x32xbf16>
    %c4_231 = arith.constant 4 : index
    %c0_232 = arith.constant 0 : index
    %c0_233 = arith.constant 0 : index
    %201 = vector.load %arg2[%c4_231, %c0_232, %c0_233] : memref<8x32x32xbf16, #tpu.memory_space<vmem>>, vector<1x32x32xbf16>
    %202 = vector.shape_cast %201 : vector<1x32x32xbf16> to vector<32x32xbf16>
    %cst_234 = arith.constant dense<0.000000e+00> : vector<8x32xf32>
    %203 = tpu.matmul %200, %202, %cst_234 {dimension_numbers = #tpu.dot_dimension_numbers<[1], [0], [0], [1], [0, 0, 1, 1], [], []>} : vector<8x32xbf16>, vector<32x32xbf16>, vector<8x32xf32> -> vector<8x32xf32>
    %204 = arith.addf %198, %203 : vector<8x32xf32>
    %c0_235 = arith.constant 0 : index
    %c17 = arith.constant 17 : index
    %c0_236 = arith.constant 0 : index
    %c0_237 = arith.constant 0 : index
    %205 = vector.load %arg1[%c0_235, %c17, %c0_236, %c0_237] : memref<1x36x8x32xbf16, #tpu.memory_space<vmem>>, vector<1x1x8x32xbf16>
    %206 = vector.shape_cast %205 : vector<1x1x8x32xbf16> to vector<8x32xbf16>
    %c5_238 = arith.constant 5 : index
    %c0_239 = arith.constant 0 : index
    %c0_240 = arith.constant 0 : index
    %207 = vector.load %arg2[%c5_238, %c0_239, %c0_240] : memref<8x32x32xbf16, #tpu.memory_space<vmem>>, vector<1x32x32xbf16>
    %208 = vector.shape_cast %207 : vector<1x32x32xbf16> to vector<32x32xbf16>
    %cst_241 = arith.constant dense<0.000000e+00> : vector<8x32xf32>
    %209 = tpu.matmul %206, %208, %cst_241 {dimension_numbers = #tpu.dot_dimension_numbers<[1], [0], [0], [1], [0, 0, 1, 1], [], []>} : vector<8x32xbf16>, vector<32x32xbf16>, vector<8x32xf32> -> vector<8x32xf32>
    %210 = arith.addf %204, %209 : vector<8x32xf32>
    %c0_242 = arith.constant 0 : index
    %c18 = arith.constant 18 : index
    %c0_243 = arith.constant 0 : index
    %c0_244 = arith.constant 0 : index
    %211 = vector.load %arg1[%c0_242, %c18, %c0_243, %c0_244] : memref<1x36x8x32xbf16, #tpu.memory_space<vmem>>, vector<1x1x8x32xbf16>
    %212 = vector.shape_cast %211 : vector<1x1x8x32xbf16> to vector<8x32xbf16>
    %c6_245 = arith.constant 6 : index
    %c0_246 = arith.constant 0 : index
    %c0_247 = arith.constant 0 : index
    %213 = vector.load %arg2[%c6_245, %c0_246, %c0_247] : memref<8x32x32xbf16, #tpu.memory_space<vmem>>, vector<1x32x32xbf16>
    %214 = vector.shape_cast %213 : vector<1x32x32xbf16> to vector<32x32xbf16>
    %cst_248 = arith.constant dense<0.000000e+00> : vector<8x32xf32>
    %215 = tpu.matmul %212, %214, %cst_248 {dimension_numbers = #tpu.dot_dimension_numbers<[1], [0], [0], [1], [0, 0, 1, 1], [], []>} : vector<8x32xbf16>, vector<32x32xbf16>, vector<8x32xf32> -> vector<8x32xf32>
    %216 = arith.addf %210, %215 : vector<8x32xf32>
    %c0_249 = arith.constant 0 : index
    %c19 = arith.constant 19 : index
    %c0_250 = arith.constant 0 : index
    %c0_251 = arith.constant 0 : index
    %217 = vector.load %arg1[%c0_249, %c19, %c0_250, %c0_251] : memref<1x36x8x32xbf16, #tpu.memory_space<vmem>>, vector<1x1x8x32xbf16>
    %218 = vector.shape_cast %217 : vector<1x1x8x32xbf16> to vector<8x32xbf16>
    %c7_252 = arith.constant 7 : index
    %c0_253 = arith.constant 0 : index
    %c0_254 = arith.constant 0 : index
    %219 = vector.load %arg2[%c7_252, %c0_253, %c0_254] : memref<8x32x32xbf16, #tpu.memory_space<vmem>>, vector<1x32x32xbf16>
    %220 = vector.shape_cast %219 : vector<1x32x32xbf16> to vector<32x32xbf16>
    %cst_255 = arith.constant dense<0.000000e+00> : vector<8x32xf32>
    %221 = tpu.matmul %218, %220, %cst_255 {dimension_numbers = #tpu.dot_dimension_numbers<[1], [0], [0], [1], [0, 0, 1, 1], [], []>} : vector<8x32xbf16>, vector<32x32xbf16>, vector<8x32xf32> -> vector<8x32xf32>
    %222 = arith.addf %216, %221 : vector<8x32xf32>
    %cst_256 = arith.constant 0.000000e+00 : f32
    %223 = vector.broadcast %cst_256 : f32 to vector<8x32xf32>
    %224 = arith.maximumf %222, %223 : vector<8x32xf32>
    %225 = arith.truncf %224 : vector<8x32xf32> to vector<8x32xbf16>
    %c0_257 = arith.constant 0 : index
    %c3_258 = arith.constant 3 : index
    %c0_259 = arith.constant 0 : index
    %c0_260 = arith.constant 0 : index
    %226 = vector.load %arg4[%c0_257, %c3_258, %c0_259, %c0_260] : memref<1x8x8x32xbf16, #tpu.memory_space<vmem>>, vector<1x1x8x32xbf16>
    %227 = vector.shape_cast %226 : vector<1x1x8x32xbf16> to vector<8x32xbf16>
    %228 = vector.shape_cast %225 : vector<8x32xbf16> to vector<1x1x8x32xbf16>
    tpu.vector_store %arg4[%c0_257, %c3_258, %c0_259, %c0_260], %228 {strides = array<i32>} : memref<1x8x8x32xbf16, #tpu.memory_space<vmem>>, vector<1x1x8x32xbf16>,
    %cst_261 = arith.constant 0.000000e+00 : f32
    %229 = vector.broadcast %cst_261 : f32 to vector<8x32xf32>
    %230 = vector.broadcast %0 : vector<1x32xf32> to vector<8x32xf32>
    %231 = arith.addf %229, %230 : vector<8x32xf32>
    %c0_262 = arith.constant 0 : index
    %c16_263 = arith.constant 16 : index
    %c0_264 = arith.constant 0 : index
    %c0_265 = arith.constant 0 : index
    %232 = vector.load %arg1[%c0_262, %c16_263, %c0_264, %c0_265] : memref<1x36x8x32xbf16, #tpu.memory_space<vmem>>, vector<1x1x8x32xbf16>
    %233 = vector.shape_cast %232 : vector<1x1x8x32xbf16> to vector<8x32xbf16>
    %c0_266 = arith.constant 0 : index
    %c0_267 = arith.constant 0 : index
    %c0_268 = arith.constant 0 : index
    %234 = vector.load %arg2[%c0_266, %c0_267, %c0_268] : memref<8x32x32xbf16, #tpu.memory_space<vmem>>, vector<1x32x32xbf16>
    %235 = vector.shape_cast %234 : vector<1x32x32xbf16> to vector<32x32xbf16>
    %cst_269 = arith.constant dense<0.000000e+00> : vector<8x32xf32>
    %236 = tpu.matmul %233, %235, %cst_269 {dimension_numbers = #tpu.dot_dimension_numbers<[1], [0], [0], [1], [0, 0, 1, 1], [], []>} : vector<8x32xbf16>, vector<32x32xbf16>, vector<8x32xf32> -> vector<8x32xf32>
    %237 = arith.addf %231, %236 : vector<8x32xf32>
    %c0_270 = arith.constant 0 : index
    %c17_271 = arith.constant 17 : index
    %c0_272 = arith.constant 0 : index
    %c0_273 = arith.constant 0 : index
    %238 = vector.load %arg1[%c0_270, %c17_271, %c0_272, %c0_273] : memref<1x36x8x32xbf16, #tpu.memory_space<vmem>>, vector<1x1x8x32xbf16>
    %239 = vector.shape_cast %238 : vector<1x1x8x32xbf16> to vector<8x32xbf16>
    %c1_274 = arith.constant 1 : index
    %c0_275 = arith.constant 0 : index
    %c0_276 = arith.constant 0 : index
    %240 = vector.load %arg2[%c1_274, %c0_275, %c0_276] : memref<8x32x32xbf16, #tpu.memory_space<vmem>>, vector<1x32x32xbf16>
    %241 = vector.shape_cast %240 : vector<1x32x32xbf16> to vector<32x32xbf16>
    %cst_277 = arith.constant dense<0.000000e+00> : vector<8x32xf32>
    %242 = tpu.matmul %239, %241, %cst_277 {dimension_numbers = #tpu.dot_dimension_numbers<[1], [0], [0], [1], [0, 0, 1, 1], [], []>} : vector<8x32xbf16>, vector<32x32xbf16>, vector<8x32xf32> -> vector<8x32xf32>
    %243 = arith.addf %237, %242 : vector<8x32xf32>
    %c0_278 = arith.constant 0 : index
    %c18_279 = arith.constant 18 : index
    %c0_280 = arith.constant 0 : index
    %c0_281 = arith.constant 0 : index
    %244 = vector.load %arg1[%c0_278, %c18_279, %c0_280, %c0_281] : memref<1x36x8x32xbf16, #tpu.memory_space<vmem>>, vector<1x1x8x32xbf16>
    %245 = vector.shape_cast %244 : vector<1x1x8x32xbf16> to vector<8x32xbf16>
    %c2_282 = arith.constant 2 : index
    %c0_283 = arith.constant 0 : index
    %c0_284 = arith.constant 0 : index
    %246 = vector.load %arg2[%c2_282, %c0_283, %c0_284] : memref<8x32x32xbf16, #tpu.memory_space<vmem>>, vector<1x32x32xbf16>
    %247 = vector.shape_cast %246 : vector<1x32x32xbf16> to vector<32x32xbf16>
    %cst_285 = arith.constant dense<0.000000e+00> : vector<8x32xf32>
    %248 = tpu.matmul %245, %247, %cst_285 {dimension_numbers = #tpu.dot_dimension_numbers<[1], [0], [0], [1], [0, 0, 1, 1], [], []>} : vector<8x32xbf16>, vector<32x32xbf16>, vector<8x32xf32> -> vector<8x32xf32>
    %249 = arith.addf %243, %248 : vector<8x32xf32>
    %c0_286 = arith.constant 0 : index
    %c19_287 = arith.constant 19 : index
    %c0_288 = arith.constant 0 : index
    %c0_289 = arith.constant 0 : index
    %250 = vector.load %arg1[%c0_286, %c19_287, %c0_288, %c0_289] : memref<1x36x8x32xbf16, #tpu.memory_space<vmem>>, vector<1x1x8x32xbf16>
    %251 = vector.shape_cast %250 : vector<1x1x8x32xbf16> to vector<8x32xbf16>
    %c3_290 = arith.constant 3 : index
    %c0_291 = arith.constant 0 : index
    %c0_292 = arith.constant 0 : index
    %252 = vector.load %arg2[%c3_290, %c0_291, %c0_292] : memref<8x32x32xbf16, #tpu.memory_space<vmem>>, vector<1x32x32xbf16>
    %253 = vector.shape_cast %252 : vector<1x32x32xbf16> to vector<32x32xbf16>
    %cst_293 = arith.constant dense<0.000000e+00> : vector<8x32xf32>
    %254 = tpu.matmul %251, %253, %cst_293 {dimension_numbers = #tpu.dot_dimension_numbers<[1], [0], [0], [1], [0, 0, 1, 1], [], []>} : vector<8x32xbf16>, vector<32x32xbf16>, vector<8x32xf32> -> vector<8x32xf32>
    %255 = arith.addf %249, %254 : vector<8x32xf32>
    %c0_294 = arith.constant 0 : index
    %c20 = arith.constant 20 : index
    %c0_295 = arith.constant 0 : index
    %c0_296 = arith.constant 0 : index
    %256 = vector.load %arg1[%c0_294, %c20, %c0_295, %c0_296] : memref<1x36x8x32xbf16, #tpu.memory_space<vmem>>, vector<1x1x8x32xbf16>
    %257 = vector.shape_cast %256 : vector<1x1x8x32xbf16> to vector<8x32xbf16>
    %c4_297 = arith.constant 4 : index
    %c0_298 = arith.constant 0 : index
    %c0_299 = arith.constant 0 : index
    %258 = vector.load %arg2[%c4_297, %c0_298, %c0_299] : memref<8x32x32xbf16, #tpu.memory_space<vmem>>, vector<1x32x32xbf16>
    %259 = vector.shape_cast %258 : vector<1x32x32xbf16> to vector<32x32xbf16>
    %cst_300 = arith.constant dense<0.000000e+00> : vector<8x32xf32>
    %260 = tpu.matmul %257, %259, %cst_300 {dimension_numbers = #tpu.dot_dimension_numbers<[1], [0], [0], [1], [0, 0, 1, 1], [], []>} : vector<8x32xbf16>, vector<32x32xbf16>, vector<8x32xf32> -> vector<8x32xf32>
    %261 = arith.addf %255, %260 : vector<8x32xf32>
    %c0_301 = arith.constant 0 : index
    %c21 = arith.constant 21 : index
    %c0_302 = arith.constant 0 : index
    %c0_303 = arith.constant 0 : index
    %262 = vector.load %arg1[%c0_301, %c21, %c0_302, %c0_303] : memref<1x36x8x32xbf16, #tpu.memory_space<vmem>>, vector<1x1x8x32xbf16>
    %263 = vector.shape_cast %262 : vector<1x1x8x32xbf16> to vector<8x32xbf16>
    %c5_304 = arith.constant 5 : index
    %c0_305 = arith.constant 0 : index
    %c0_306 = arith.constant 0 : index
    %264 = vector.load %arg2[%c5_304, %c0_305, %c0_306] : memref<8x32x32xbf16, #tpu.memory_space<vmem>>, vector<1x32x32xbf16>
    %265 = vector.shape_cast %264 : vector<1x32x32xbf16> to vector<32x32xbf16>
    %cst_307 = arith.constant dense<0.000000e+00> : vector<8x32xf32>
    %266 = tpu.matmul %263, %265, %cst_307 {dimension_numbers = #tpu.dot_dimension_numbers<[1], [0], [0], [1], [0, 0, 1, 1], [], []>} : vector<8x32xbf16>, vector<32x32xbf16>, vector<8x32xf32> -> vector<8x32xf32>
    %267 = arith.addf %261, %266 : vector<8x32xf32>
    %c0_308 = arith.constant 0 : index
    %c22 = arith.constant 22 : index
    %c0_309 = arith.constant 0 : index
    %c0_310 = arith.constant 0 : index
    %268 = vector.load %arg1[%c0_308, %c22, %c0_309, %c0_310] : memref<1x36x8x32xbf16, #tpu.memory_space<vmem>>, vector<1x1x8x32xbf16>
    %269 = vector.shape_cast %268 : vector<1x1x8x32xbf16> to vector<8x32xbf16>
    %c6_311 = arith.constant 6 : index
    %c0_312 = arith.constant 0 : index
    %c0_313 = arith.constant 0 : index
    %270 = vector.load %arg2[%c6_311, %c0_312, %c0_313] : memref<8x32x32xbf16, #tpu.memory_space<vmem>>, vector<1x32x32xbf16>
    %271 = vector.shape_cast %270 : vector<1x32x32xbf16> to vector<32x32xbf16>
    %cst_314 = arith.constant dense<0.000000e+00> : vector<8x32xf32>
    %272 = tpu.matmul %269, %271, %cst_314 {dimension_numbers = #tpu.dot_dimension_numbers<[1], [0], [0], [1], [0, 0, 1, 1], [], []>} : vector<8x32xbf16>, vector<32x32xbf16>, vector<8x32xf32> -> vector<8x32xf32>
    %273 = arith.addf %267, %272 : vector<8x32xf32>
    %c0_315 = arith.constant 0 : index
    %c23 = arith.constant 23 : index
    %c0_316 = arith.constant 0 : index
    %c0_317 = arith.constant 0 : index
    %274 = vector.load %arg1[%c0_315, %c23, %c0_316, %c0_317] : memref<1x36x8x32xbf16, #tpu.memory_space<vmem>>, vector<1x1x8x32xbf16>
    %275 = vector.shape_cast %274 : vector<1x1x8x32xbf16> to vector<8x32xbf16>
    %c7_318 = arith.constant 7 : index
    %c0_319 = arith.constant 0 : index
    %c0_320 = arith.constant 0 : index
    %276 = vector.load %arg2[%c7_318, %c0_319, %c0_320] : memref<8x32x32xbf16, #tpu.memory_space<vmem>>, vector<1x32x32xbf16>
    %277 = vector.shape_cast %276 : vector<1x32x32xbf16> to vector<32x32xbf16>
    %cst_321 = arith.constant dense<0.000000e+00> : vector<8x32xf32>
    %278 = tpu.matmul %275, %277, %cst_321 {dimension_numbers = #tpu.dot_dimension_numbers<[1], [0], [0], [1], [0, 0, 1, 1], [], []>} : vector<8x32xbf16>, vector<32x32xbf16>, vector<8x32xf32> -> vector<8x32xf32>
    %279 = arith.addf %273, %278 : vector<8x32xf32>
    %cst_322 = arith.constant 0.000000e+00 : f32
    %280 = vector.broadcast %cst_322 : f32 to vector<8x32xf32>
    %281 = arith.maximumf %279, %280 : vector<8x32xf32>
    %282 = arith.truncf %281 : vector<8x32xf32> to vector<8x32xbf16>
    %c0_323 = arith.constant 0 : index
    %c4_324 = arith.constant 4 : index
    %c0_325 = arith.constant 0 : index
    %c0_326 = arith.constant 0 : index
    %283 = vector.load %arg4[%c0_323, %c4_324, %c0_325, %c0_326] : memref<1x8x8x32xbf16, #tpu.memory_space<vmem>>, vector<1x1x8x32xbf16>
    %284 = vector.shape_cast %283 : vector<1x1x8x32xbf16> to vector<8x32xbf16>
    %285 = vector.shape_cast %282 : vector<8x32xbf16> to vector<1x1x8x32xbf16>
    tpu.vector_store %arg4[%c0_323, %c4_324, %c0_325, %c0_326], %285 {strides = array<i32>} : memref<1x8x8x32xbf16, #tpu.memory_space<vmem>>, vector<1x1x8x32xbf16>,
    %cst_327 = arith.constant 0.000000e+00 : f32
    %286 = vector.broadcast %cst_327 : f32 to vector<8x32xf32>
    %287 = vector.broadcast %0 : vector<1x32xf32> to vector<8x32xf32>
    %288 = arith.addf %286, %287 : vector<8x32xf32>
    %c0_328 = arith.constant 0 : index
    %c20_329 = arith.constant 20 : index
    %c0_330 = arith.constant 0 : index
    %c0_331 = arith.constant 0 : index
    %289 = vector.load %arg1[%c0_328, %c20_329, %c0_330, %c0_331] : memref<1x36x8x32xbf16, #tpu.memory_space<vmem>>, vector<1x1x8x32xbf16>
    %290 = vector.shape_cast %289 : vector<1x1x8x32xbf16> to vector<8x32xbf16>
    %c0_332 = arith.constant 0 : index
    %c0_333 = arith.constant 0 : index
    %c0_334 = arith.constant 0 : index
    %291 = vector.load %arg2[%c0_332, %c0_333, %c0_334] : memref<8x32x32xbf16, #tpu.memory_space<vmem>>, vector<1x32x32xbf16>
    %292 = vector.shape_cast %291 : vector<1x32x32xbf16> to vector<32x32xbf16>
    %cst_335 = arith.constant dense<0.000000e+00> : vector<8x32xf32>
    %293 = tpu.matmul %290, %292, %cst_335 {dimension_numbers = #tpu.dot_dimension_numbers<[1], [0], [0], [1], [0, 0, 1, 1], [], []>} : vector<8x32xbf16>, vector<32x32xbf16>, vector<8x32xf32> -> vector<8x32xf32>
    %294 = arith.addf %288, %293 : vector<8x32xf32>
    %c0_336 = arith.constant 0 : index
    %c21_337 = arith.constant 21 : index
    %c0_338 = arith.constant 0 : index
    %c0_339 = arith.constant 0 : index
    %295 = vector.load %arg1[%c0_336, %c21_337, %c0_338, %c0_339] : memref<1x36x8x32xbf16, #tpu.memory_space<vmem>>, vector<1x1x8x32xbf16>
    %296 = vector.shape_cast %295 : vector<1x1x8x32xbf16> to vector<8x32xbf16>
    %c1_340 = arith.constant 1 : index
    %c0_341 = arith.constant 0 : index
    %c0_342 = arith.constant 0 : index
    %297 = vector.load %arg2[%c1_340, %c0_341, %c0_342] : memref<8x32x32xbf16, #tpu.memory_space<vmem>>, vector<1x32x32xbf16>
    %298 = vector.shape_cast %297 : vector<1x32x32xbf16> to vector<32x32xbf16>
    %cst_343 = arith.constant dense<0.000000e+00> : vector<8x32xf32>
    %299 = tpu.matmul %296, %298, %cst_343 {dimension_numbers = #tpu.dot_dimension_numbers<[1], [0], [0], [1], [0, 0, 1, 1], [], []>} : vector<8x32xbf16>, vector<32x32xbf16>, vector<8x32xf32> -> vector<8x32xf32>
    %300 = arith.addf %294, %299 : vector<8x32xf32>
    %c0_344 = arith.constant 0 : index
    %c22_345 = arith.constant 22 : index
    %c0_346 = arith.constant 0 : index
    %c0_347 = arith.constant 0 : index
    %301 = vector.load %arg1[%c0_344, %c22_345, %c0_346, %c0_347] : memref<1x36x8x32xbf16, #tpu.memory_space<vmem>>, vector<1x1x8x32xbf16>
    %302 = vector.shape_cast %301 : vector<1x1x8x32xbf16> to vector<8x32xbf16>
    %c2_348 = arith.constant 2 : index
    %c0_349 = arith.constant 0 : index
    %c0_350 = arith.constant 0 : index
    %303 = vector.load %arg2[%c2_348, %c0_349, %c0_350] : memref<8x32x32xbf16, #tpu.memory_space<vmem>>, vector<1x32x32xbf16>
    %304 = vector.shape_cast %303 : vector<1x32x32xbf16> to vector<32x32xbf16>
    %cst_351 = arith.constant dense<0.000000e+00> : vector<8x32xf32>
    %305 = tpu.matmul %302, %304, %cst_351 {dimension_numbers = #tpu.dot_dimension_numbers<[1], [0], [0], [1], [0, 0, 1, 1], [], []>} : vector<8x32xbf16>, vector<32x32xbf16>, vector<8x32xf32> -> vector<8x32xf32>
    %306 = arith.addf %300, %305 : vector<8x32xf32>
    %c0_352 = arith.constant 0 : index
    %c23_353 = arith.constant 23 : index
    %c0_354 = arith.constant 0 : index
    %c0_355 = arith.constant 0 : index
    %307 = vector.load %arg1[%c0_352, %c23_353, %c0_354, %c0_355] : memref<1x36x8x32xbf16, #tpu.memory_space<vmem>>, vector<1x1x8x32xbf16>
    %308 = vector.shape_cast %307 : vector<1x1x8x32xbf16> to vector<8x32xbf16>
    %c3_356 = arith.constant 3 : index
    %c0_357 = arith.constant 0 : index
    %c0_358 = arith.constant 0 : index
    %309 = vector.load %arg2[%c3_356, %c0_357, %c0_358] : memref<8x32x32xbf16, #tpu.memory_space<vmem>>, vector<1x32x32xbf16>
    %310 = vector.shape_cast %309 : vector<1x32x32xbf16> to vector<32x32xbf16>
    %cst_359 = arith.constant dense<0.000000e+00> : vector<8x32xf32>
    %311 = tpu.matmul %308, %310, %cst_359 {dimension_numbers = #tpu.dot_dimension_numbers<[1], [0], [0], [1], [0, 0, 1, 1], [], []>} : vector<8x32xbf16>, vector<32x32xbf16>, vector<8x32xf32> -> vector<8x32xf32>
    %312 = arith.addf %306, %311 : vector<8x32xf32>
    %c0_360 = arith.constant 0 : index
    %c24 = arith.constant 24 : index
    %c0_361 = arith.constant 0 : index
    %c0_362 = arith.constant 0 : index
    %313 = vector.load %arg1[%c0_360, %c24, %c0_361, %c0_362] : memref<1x36x8x32xbf16, #tpu.memory_space<vmem>>, vector<1x1x8x32xbf16>
    %314 = vector.shape_cast %313 : vector<1x1x8x32xbf16> to vector<8x32xbf16>
    %c4_363 = arith.constant 4 : index
    %c0_364 = arith.constant 0 : index
    %c0_365 = arith.constant 0 : index
    %315 = vector.load %arg2[%c4_363, %c0_364, %c0_365] : memref<8x32x32xbf16, #tpu.memory_space<vmem>>, vector<1x32x32xbf16>
    %316 = vector.shape_cast %315 : vector<1x32x32xbf16> to vector<32x32xbf16>
    %cst_366 = arith.constant dense<0.000000e+00> : vector<8x32xf32>
    %317 = tpu.matmul %314, %316, %cst_366 {dimension_numbers = #tpu.dot_dimension_numbers<[1], [0], [0], [1], [0, 0, 1, 1], [], []>} : vector<8x32xbf16>, vector<32x32xbf16>, vector<8x32xf32> -> vector<8x32xf32>
    %318 = arith.addf %312, %317 : vector<8x32xf32>
    %c0_367 = arith.constant 0 : index
    %c25 = arith.constant 25 : index
    %c0_368 = arith.constant 0 : index
    %c0_369 = arith.constant 0 : index
    %319 = vector.load %arg1[%c0_367, %c25, %c0_368, %c0_369] : memref<1x36x8x32xbf16, #tpu.memory_space<vmem>>, vector<1x1x8x32xbf16>
    %320 = vector.shape_cast %319 : vector<1x1x8x32xbf16> to vector<8x32xbf16>
    %c5_370 = arith.constant 5 : index
    %c0_371 = arith.constant 0 : index
    %c0_372 = arith.constant 0 : index
    %321 = vector.load %arg2[%c5_370, %c0_371, %c0_372] : memref<8x32x32xbf16, #tpu.memory_space<vmem>>, vector<1x32x32xbf16>
    %322 = vector.shape_cast %321 : vector<1x32x32xbf16> to vector<32x32xbf16>
    %cst_373 = arith.constant dense<0.000000e+00> : vector<8x32xf32>
    %323 = tpu.matmul %320, %322, %cst_373 {dimension_numbers = #tpu.dot_dimension_numbers<[1], [0], [0], [1], [0, 0, 1, 1], [], []>} : vector<8x32xbf16>, vector<32x32xbf16>, vector<8x32xf32> -> vector<8x32xf32>
    %324 = arith.addf %318, %323 : vector<8x32xf32>
    %c0_374 = arith.constant 0 : index
    %c26 = arith.constant 26 : index
    %c0_375 = arith.constant 0 : index
    %c0_376 = arith.constant 0 : index
    %325 = vector.load %arg1[%c0_374, %c26, %c0_375, %c0_376] : memref<1x36x8x32xbf16, #tpu.memory_space<vmem>>, vector<1x1x8x32xbf16>
    %326 = vector.shape_cast %325 : vector<1x1x8x32xbf16> to vector<8x32xbf16>
    %c6_377 = arith.constant 6 : index
    %c0_378 = arith.constant 0 : index
    %c0_379 = arith.constant 0 : index
    %327 = vector.load %arg2[%c6_377, %c0_378, %c0_379] : memref<8x32x32xbf16, #tpu.memory_space<vmem>>, vector<1x32x32xbf16>
    %328 = vector.shape_cast %327 : vector<1x32x32xbf16> to vector<32x32xbf16>
    %cst_380 = arith.constant dense<0.000000e+00> : vector<8x32xf32>
    %329 = tpu.matmul %326, %328, %cst_380 {dimension_numbers = #tpu.dot_dimension_numbers<[1], [0], [0], [1], [0, 0, 1, 1], [], []>} : vector<8x32xbf16>, vector<32x32xbf16>, vector<8x32xf32> -> vector<8x32xf32>
    %330 = arith.addf %324, %329 : vector<8x32xf32>
    %c0_381 = arith.constant 0 : index
    %c27 = arith.constant 27 : index
    %c0_382 = arith.constant 0 : index
    %c0_383 = arith.constant 0 : index
    %331 = vector.load %arg1[%c0_381, %c27, %c0_382, %c0_383] : memref<1x36x8x32xbf16, #tpu.memory_space<vmem>>, vector<1x1x8x32xbf16>
    %332 = vector.shape_cast %331 : vector<1x1x8x32xbf16> to vector<8x32xbf16>
    %c7_384 = arith.constant 7 : index
    %c0_385 = arith.constant 0 : index
    %c0_386 = arith.constant 0 : index
    %333 = vector.load %arg2[%c7_384, %c0_385, %c0_386] : memref<8x32x32xbf16, #tpu.memory_space<vmem>>, vector<1x32x32xbf16>
    %334 = vector.shape_cast %333 : vector<1x32x32xbf16> to vector<32x32xbf16>
    %cst_387 = arith.constant dense<0.000000e+00> : vector<8x32xf32>
    %335 = tpu.matmul %332, %334, %cst_387 {dimension_numbers = #tpu.dot_dimension_numbers<[1], [0], [0], [1], [0, 0, 1, 1], [], []>} : vector<8x32xbf16>, vector<32x32xbf16>, vector<8x32xf32> -> vector<8x32xf32>
    %336 = arith.addf %330, %335 : vector<8x32xf32>
    %cst_388 = arith.constant 0.000000e+00 : f32
    %337 = vector.broadcast %cst_388 : f32 to vector<8x32xf32>
    %338 = arith.maximumf %336, %337 : vector<8x32xf32>
    %339 = arith.truncf %338 : vector<8x32xf32> to vector<8x32xbf16>
    %c0_389 = arith.constant 0 : index
    %c5_390 = arith.constant 5 : index
    %c0_391 = arith.constant 0 : index
    %c0_392 = arith.constant 0 : index
    %340 = vector.load %arg4[%c0_389, %c5_390, %c0_391, %c0_392] : memref<1x8x8x32xbf16, #tpu.memory_space<vmem>>, vector<1x1x8x32xbf16>
    %341 = vector.shape_cast %340 : vector<1x1x8x32xbf16> to vector<8x32xbf16>
    %342 = vector.shape_cast %339 : vector<8x32xbf16> to vector<1x1x8x32xbf16>
    tpu.vector_store %arg4[%c0_389, %c5_390, %c0_391, %c0_392], %342 {strides = array<i32>} : memref<1x8x8x32xbf16, #tpu.memory_space<vmem>>, vector<1x1x8x32xbf16>,
    %cst_393 = arith.constant 0.000000e+00 : f32
    %343 = vector.broadcast %cst_393 : f32 to vector<8x32xf32>
    %344 = vector.broadcast %0 : vector<1x32xf32> to vector<8x32xf32>
    %345 = arith.addf %343, %344 : vector<8x32xf32>
    %c0_394 = arith.constant 0 : index
    %c24_395 = arith.constant 24 : index
    %c0_396 = arith.constant 0 : index
    %c0_397 = arith.constant 0 : index
    %346 = vector.load %arg1[%c0_394, %c24_395, %c0_396, %c0_397] : memref<1x36x8x32xbf16, #tpu.memory_space<vmem>>, vector<1x1x8x32xbf16>
    %347 = vector.shape_cast %346 : vector<1x1x8x32xbf16> to vector<8x32xbf16>
    %c0_398 = arith.constant 0 : index
    %c0_399 = arith.constant 0 : index
    %c0_400 = arith.constant 0 : index
    %348 = vector.load %arg2[%c0_398, %c0_399, %c0_400] : memref<8x32x32xbf16, #tpu.memory_space<vmem>>, vector<1x32x32xbf16>
    %349 = vector.shape_cast %348 : vector<1x32x32xbf16> to vector<32x32xbf16>
    %cst_401 = arith.constant dense<0.000000e+00> : vector<8x32xf32>
    %350 = tpu.matmul %347, %349, %cst_401 {dimension_numbers = #tpu.dot_dimension_numbers<[1], [0], [0], [1], [0, 0, 1, 1], [], []>} : vector<8x32xbf16>, vector<32x32xbf16>, vector<8x32xf32> -> vector<8x32xf32>
    %351 = arith.addf %345, %350 : vector<8x32xf32>
    %c0_402 = arith.constant 0 : index
    %c25_403 = arith.constant 25 : index
    %c0_404 = arith.constant 0 : index
    %c0_405 = arith.constant 0 : index
    %352 = vector.load %arg1[%c0_402, %c25_403, %c0_404, %c0_405] : memref<1x36x8x32xbf16, #tpu.memory_space<vmem>>, vector<1x1x8x32xbf16>
    %353 = vector.shape_cast %352 : vector<1x1x8x32xbf16> to vector<8x32xbf16>
    %c1_406 = arith.constant 1 : index
    %c0_407 = arith.constant 0 : index
    %c0_408 = arith.constant 0 : index
    %354 = vector.load %arg2[%c1_406, %c0_407, %c0_408] : memref<8x32x32xbf16, #tpu.memory_space<vmem>>, vector<1x32x32xbf16>
    %355 = vector.shape_cast %354 : vector<1x32x32xbf16> to vector<32x32xbf16>
    %cst_409 = arith.constant dense<0.000000e+00> : vector<8x32xf32>
    %356 = tpu.matmul %353, %355, %cst_409 {dimension_numbers = #tpu.dot_dimension_numbers<[1], [0], [0], [1], [0, 0, 1, 1], [], []>} : vector<8x32xbf16>, vector<32x32xbf16>, vector<8x32xf32> -> vector<8x32xf32>
    %357 = arith.addf %351, %356 : vector<8x32xf32>
    %c0_410 = arith.constant 0 : index
    %c26_411 = arith.constant 26 : index
    %c0_412 = arith.constant 0 : index
    %c0_413 = arith.constant 0 : index
    %358 = vector.load %arg1[%c0_410, %c26_411, %c0_412, %c0_413] : memref<1x36x8x32xbf16, #tpu.memory_space<vmem>>, vector<1x1x8x32xbf16>
    %359 = vector.shape_cast %358 : vector<1x1x8x32xbf16> to vector<8x32xbf16>
    %c2_414 = arith.constant 2 : index
    %c0_415 = arith.constant 0 : index
    %c0_416 = arith.constant 0 : index
    %360 = vector.load %arg2[%c2_414, %c0_415, %c0_416] : memref<8x32x32xbf16, #tpu.memory_space<vmem>>, vector<1x32x32xbf16>
    %361 = vector.shape_cast %360 : vector<1x32x32xbf16> to vector<32x32xbf16>
    %cst_417 = arith.constant dense<0.000000e+00> : vector<8x32xf32>
    %362 = tpu.matmul %359, %361, %cst_417 {dimension_numbers = #tpu.dot_dimension_numbers<[1], [0], [0], [1], [0, 0, 1, 1], [], []>} : vector<8x32xbf16>, vector<32x32xbf16>, vector<8x32xf32> -> vector<8x32xf32>
    %363 = arith.addf %357, %362 : vector<8x32xf32>
    %c0_418 = arith.constant 0 : index
    %c27_419 = arith.constant 27 : index
    %c0_420 = arith.constant 0 : index
    %c0_421 = arith.constant 0 : index
    %364 = vector.load %arg1[%c0_418, %c27_419, %c0_420, %c0_421] : memref<1x36x8x32xbf16, #tpu.memory_space<vmem>>, vector<1x1x8x32xbf16>
    %365 = vector.shape_cast %364 : vector<1x1x8x32xbf16> to vector<8x32xbf16>
    %c3_422 = arith.constant 3 : index
    %c0_423 = arith.constant 0 : index
    %c0_424 = arith.constant 0 : index
    %366 = vector.load %arg2[%c3_422, %c0_423, %c0_424] : memref<8x32x32xbf16, #tpu.memory_space<vmem>>, vector<1x32x32xbf16>
    %367 = vector.shape_cast %366 : vector<1x32x32xbf16> to vector<32x32xbf16>
    %cst_425 = arith.constant dense<0.000000e+00> : vector<8x32xf32>
    %368 = tpu.matmul %365, %367, %cst_425 {dimension_numbers = #tpu.dot_dimension_numbers<[1], [0], [0], [1], [0, 0, 1, 1], [], []>} : vector<8x32xbf16>, vector<32x32xbf16>, vector<8x32xf32> -> vector<8x32xf32>
    %369 = arith.addf %363, %368 : vector<8x32xf32>
    %c0_426 = arith.constant 0 : index
    %c28 = arith.constant 28 : index
    %c0_427 = arith.constant 0 : index
    %c0_428 = arith.constant 0 : index
    %370 = vector.load %arg1[%c0_426, %c28, %c0_427, %c0_428] : memref<1x36x8x32xbf16, #tpu.memory_space<vmem>>, vector<1x1x8x32xbf16>
    %371 = vector.shape_cast %370 : vector<1x1x8x32xbf16> to vector<8x32xbf16>
    %c4_429 = arith.constant 4 : index
    %c0_430 = arith.constant 0 : index
    %c0_431 = arith.constant 0 : index
    %372 = vector.load %arg2[%c4_429, %c0_430, %c0_431] : memref<8x32x32xbf16, #tpu.memory_space<vmem>>, vector<1x32x32xbf16>
    %373 = vector.shape_cast %372 : vector<1x32x32xbf16> to vector<32x32xbf16>
    %cst_432 = arith.constant dense<0.000000e+00> : vector<8x32xf32>
    %374 = tpu.matmul %371, %373, %cst_432 {dimension_numbers = #tpu.dot_dimension_numbers<[1], [0], [0], [1], [0, 0, 1, 1], [], []>} : vector<8x32xbf16>, vector<32x32xbf16>, vector<8x32xf32> -> vector<8x32xf32>
    %375 = arith.addf %369, %374 : vector<8x32xf32>
    %c0_433 = arith.constant 0 : index
    %c29 = arith.constant 29 : index
    %c0_434 = arith.constant 0 : index
    %c0_435 = arith.constant 0 : index
    %376 = vector.load %arg1[%c0_433, %c29, %c0_434, %c0_435] : memref<1x36x8x32xbf16, #tpu.memory_space<vmem>>, vector<1x1x8x32xbf16>
    %377 = vector.shape_cast %376 : vector<1x1x8x32xbf16> to vector<8x32xbf16>
    %c5_436 = arith.constant 5 : index
    %c0_437 = arith.constant 0 : index
    %c0_438 = arith.constant 0 : index
    %378 = vector.load %arg2[%c5_436, %c0_437, %c0_438] : memref<8x32x32xbf16, #tpu.memory_space<vmem>>, vector<1x32x32xbf16>
    %379 = vector.shape_cast %378 : vector<1x32x32xbf16> to vector<32x32xbf16>
    %cst_439 = arith.constant dense<0.000000e+00> : vector<8x32xf32>
    %380 = tpu.matmul %377, %379, %cst_439 {dimension_numbers = #tpu.dot_dimension_numbers<[1], [0], [0], [1], [0, 0, 1, 1], [], []>} : vector<8x32xbf16>, vector<32x32xbf16>, vector<8x32xf32> -> vector<8x32xf32>
    %381 = arith.addf %375, %380 : vector<8x32xf32>
    %c0_440 = arith.constant 0 : index
    %c30 = arith.constant 30 : index
    %c0_441 = arith.constant 0 : index
    %c0_442 = arith.constant 0 : index
    %382 = vector.load %arg1[%c0_440, %c30, %c0_441, %c0_442] : memref<1x36x8x32xbf16, #tpu.memory_space<vmem>>, vector<1x1x8x32xbf16>
    %383 = vector.shape_cast %382 : vector<1x1x8x32xbf16> to vector<8x32xbf16>
    %c6_443 = arith.constant 6 : index
    %c0_444 = arith.constant 0 : index
    %c0_445 = arith.constant 0 : index
    %384 = vector.load %arg2[%c6_443, %c0_444, %c0_445] : memref<8x32x32xbf16, #tpu.memory_space<vmem>>, vector<1x32x32xbf16>
    %385 = vector.shape_cast %384 : vector<1x32x32xbf16> to vector<32x32xbf16>
    %cst_446 = arith.constant dense<0.000000e+00> : vector<8x32xf32>
    %386 = tpu.matmul %383, %385, %cst_446 {dimension_numbers = #tpu.dot_dimension_numbers<[1], [0], [0], [1], [0, 0, 1, 1], [], []>} : vector<8x32xbf16>, vector<32x32xbf16>, vector<8x32xf32> -> vector<8x32xf32>
    %387 = arith.addf %381, %386 : vector<8x32xf32>
    %c0_447 = arith.constant 0 : index
    %c31 = arith.constant 31 : index
    %c0_448 = arith.constant 0 : index
    %c0_449 = arith.constant 0 : index
    %388 = vector.load %arg1[%c0_447, %c31, %c0_448, %c0_449] : memref<1x36x8x32xbf16, #tpu.memory_space<vmem>>, vector<1x1x8x32xbf16>
    %389 = vector.shape_cast %388 : vector<1x1x8x32xbf16> to vector<8x32xbf16>
    %c7_450 = arith.constant 7 : index
    %c0_451 = arith.constant 0 : index
    %c0_452 = arith.constant 0 : index
    %390 = vector.load %arg2[%c7_450, %c0_451, %c0_452] : memref<8x32x32xbf16, #tpu.memory_space<vmem>>, vector<1x32x32xbf16>
    %391 = vector.shape_cast %390 : vector<1x32x32xbf16> to vector<32x32xbf16>
    %cst_453 = arith.constant dense<0.000000e+00> : vector<8x32xf32>
    %392 = tpu.matmul %389, %391, %cst_453 {dimension_numbers = #tpu.dot_dimension_numbers<[1], [0], [0], [1], [0, 0, 1, 1], [], []>} : vector<8x32xbf16>, vector<32x32xbf16>, vector<8x32xf32> -> vector<8x32xf32>
    %393 = arith.addf %387, %392 : vector<8x32xf32>
    %cst_454 = arith.constant 0.000000e+00 : f32
    %394 = vector.broadcast %cst_454 : f32 to vector<8x32xf32>
    %395 = arith.maximumf %393, %394 : vector<8x32xf32>
    %396 = arith.truncf %395 : vector<8x32xf32> to vector<8x32xbf16>
    %c0_455 = arith.constant 0 : index
    %c6_456 = arith.constant 6 : index
    %c0_457 = arith.constant 0 : index
    %c0_458 = arith.constant 0 : index
    %397 = vector.load %arg4[%c0_455, %c6_456, %c0_457, %c0_458] : memref<1x8x8x32xbf16, #tpu.memory_space<vmem>>, vector<1x1x8x32xbf16>
    %398 = vector.shape_cast %397 : vector<1x1x8x32xbf16> to vector<8x32xbf16>
    %399 = vector.shape_cast %396 : vector<8x32xbf16> to vector<1x1x8x32xbf16>
    tpu.vector_store %arg4[%c0_455, %c6_456, %c0_457, %c0_458], %399 {strides = array<i32>} : memref<1x8x8x32xbf16, #tpu.memory_space<vmem>>, vector<1x1x8x32xbf16>,
    %cst_459 = arith.constant 0.000000e+00 : f32
    %400 = vector.broadcast %cst_459 : f32 to vector<8x32xf32>
    %401 = vector.broadcast %0 : vector<1x32xf32> to vector<8x32xf32>
    %402 = arith.addf %400, %401 : vector<8x32xf32>
    %c0_460 = arith.constant 0 : index
    %c28_461 = arith.constant 28 : index
    %c0_462 = arith.constant 0 : index
    %c0_463 = arith.constant 0 : index
    %403 = vector.load %arg1[%c0_460, %c28_461, %c0_462, %c0_463] : memref<1x36x8x32xbf16, #tpu.memory_space<vmem>>, vector<1x1x8x32xbf16>
    %404 = vector.shape_cast %403 : vector<1x1x8x32xbf16> to vector<8x32xbf16>
    %c0_464 = arith.constant 0 : index
    %c0_465 = arith.constant 0 : index
    %c0_466 = arith.constant 0 : index
    %405 = vector.load %arg2[%c0_464, %c0_465, %c0_466] : memref<8x32x32xbf16, #tpu.memory_space<vmem>>, vector<1x32x32xbf16>
    %406 = vector.shape_cast %405 : vector<1x32x32xbf16> to vector<32x32xbf16>
    %cst_467 = arith.constant dense<0.000000e+00> : vector<8x32xf32>
    %407 = tpu.matmul %404, %406, %cst_467 {dimension_numbers = #tpu.dot_dimension_numbers<[1], [0], [0], [1], [0, 0, 1, 1], [], []>} : vector<8x32xbf16>, vector<32x32xbf16>, vector<8x32xf32> -> vector<8x32xf32>
    %408 = arith.addf %402, %407 : vector<8x32xf32>
    %c0_468 = arith.constant 0 : index
    %c29_469 = arith.constant 29 : index
    %c0_470 = arith.constant 0 : index
    %c0_471 = arith.constant 0 : index
    %409 = vector.load %arg1[%c0_468, %c29_469, %c0_470, %c0_471] : memref<1x36x8x32xbf16, #tpu.memory_space<vmem>>, vector<1x1x8x32xbf16>
    %410 = vector.shape_cast %409 : vector<1x1x8x32xbf16> to vector<8x32xbf16>
    %c1_472 = arith.constant 1 : index
    %c0_473 = arith.constant 0 : index
    %c0_474 = arith.constant 0 : index
    %411 = vector.load %arg2[%c1_472, %c0_473, %c0_474] : memref<8x32x32xbf16, #tpu.memory_space<vmem>>, vector<1x32x32xbf16>
    %412 = vector.shape_cast %411 : vector<1x32x32xbf16> to vector<32x32xbf16>
    %cst_475 = arith.constant dense<0.000000e+00> : vector<8x32xf32>
    %413 = tpu.matmul %410, %412, %cst_475 {dimension_numbers = #tpu.dot_dimension_numbers<[1], [0], [0], [1], [0, 0, 1, 1], [], []>} : vector<8x32xbf16>, vector<32x32xbf16>, vector<8x32xf32> -> vector<8x32xf32>
    %414 = arith.addf %408, %413 : vector<8x32xf32>
    %c0_476 = arith.constant 0 : index
    %c30_477 = arith.constant 30 : index
    %c0_478 = arith.constant 0 : index
    %c0_479 = arith.constant 0 : index
    %415 = vector.load %arg1[%c0_476, %c30_477, %c0_478, %c0_479] : memref<1x36x8x32xbf16, #tpu.memory_space<vmem>>, vector<1x1x8x32xbf16>
    %416 = vector.shape_cast %415 : vector<1x1x8x32xbf16> to vector<8x32xbf16>
    %c2_480 = arith.constant 2 : index
    %c0_481 = arith.constant 0 : index
    %c0_482 = arith.constant 0 : index
    %417 = vector.load %arg2[%c2_480, %c0_481, %c0_482] : memref<8x32x32xbf16, #tpu.memory_space<vmem>>, vector<1x32x32xbf16>
    %418 = vector.shape_cast %417 : vector<1x32x32xbf16> to vector<32x32xbf16>
    %cst_483 = arith.constant dense<0.000000e+00> : vector<8x32xf32>
    %419 = tpu.matmul %416, %418, %cst_483 {dimension_numbers = #tpu.dot_dimension_numbers<[1], [0], [0], [1], [0, 0, 1, 1], [], []>} : vector<8x32xbf16>, vector<32x32xbf16>, vector<8x32xf32> -> vector<8x32xf32>
    %420 = arith.addf %414, %419 : vector<8x32xf32>
    %c0_484 = arith.constant 0 : index
    %c31_485 = arith.constant 31 : index
    %c0_486 = arith.constant 0 : index
    %c0_487 = arith.constant 0 : index
    %421 = vector.load %arg1[%c0_484, %c31_485, %c0_486, %c0_487] : memref<1x36x8x32xbf16, #tpu.memory_space<vmem>>, vector<1x1x8x32xbf16>
    %422 = vector.shape_cast %421 : vector<1x1x8x32xbf16> to vector<8x32xbf16>
    %c3_488 = arith.constant 3 : index
    %c0_489 = arith.constant 0 : index
    %c0_490 = arith.constant 0 : index
    %423 = vector.load %arg2[%c3_488, %c0_489, %c0_490] : memref<8x32x32xbf16, #tpu.memory_space<vmem>>, vector<1x32x32xbf16>
    %424 = vector.shape_cast %423 : vector<1x32x32xbf16> to vector<32x32xbf16>
    %cst_491 = arith.constant dense<0.000000e+00> : vector<8x32xf32>
    %425 = tpu.matmul %422, %424, %cst_491 {dimension_numbers = #tpu.dot_dimension_numbers<[1], [0], [0], [1], [0, 0, 1, 1], [], []>} : vector<8x32xbf16>, vector<32x32xbf16>, vector<8x32xf32> -> vector<8x32xf32>
    %426 = arith.addf %420, %425 : vector<8x32xf32>
    %c0_492 = arith.constant 0 : index
    %c32 = arith.constant 32 : index
    %c0_493 = arith.constant 0 : index
    %c0_494 = arith.constant 0 : index
    %427 = vector.load %arg1[%c0_492, %c32, %c0_493, %c0_494] : memref<1x36x8x32xbf16, #tpu.memory_space<vmem>>, vector<1x1x8x32xbf16>
    %428 = vector.shape_cast %427 : vector<1x1x8x32xbf16> to vector<8x32xbf16>
    %c4_495 = arith.constant 4 : index
    %c0_496 = arith.constant 0 : index
    %c0_497 = arith.constant 0 : index
    %429 = vector.load %arg2[%c4_495, %c0_496, %c0_497] : memref<8x32x32xbf16, #tpu.memory_space<vmem>>, vector<1x32x32xbf16>
    %430 = vector.shape_cast %429 : vector<1x32x32xbf16> to vector<32x32xbf16>
    %cst_498 = arith.constant dense<0.000000e+00> : vector<8x32xf32>
    %431 = tpu.matmul %428, %430, %cst_498 {dimension_numbers = #tpu.dot_dimension_numbers<[1], [0], [0], [1], [0, 0, 1, 1], [], []>} : vector<8x32xbf16>, vector<32x32xbf16>, vector<8x32xf32> -> vector<8x32xf32>
    %432 = arith.addf %426, %431 : vector<8x32xf32>
    %c0_499 = arith.constant 0 : index
    %c33 = arith.constant 33 : index
    %c0_500 = arith.constant 0 : index
    %c0_501 = arith.constant 0 : index
    %433 = vector.load %arg1[%c0_499, %c33, %c0_500, %c0_501] : memref<1x36x8x32xbf16, #tpu.memory_space<vmem>>, vector<1x1x8x32xbf16>
    %434 = vector.shape_cast %433 : vector<1x1x8x32xbf16> to vector<8x32xbf16>
    %c5_502 = arith.constant 5 : index
    %c0_503 = arith.constant 0 : index
    %c0_504 = arith.constant 0 : index
    %435 = vector.load %arg2[%c5_502, %c0_503, %c0_504] : memref<8x32x32xbf16, #tpu.memory_space<vmem>>, vector<1x32x32xbf16>
    %436 = vector.shape_cast %435 : vector<1x32x32xbf16> to vector<32x32xbf16>
    %cst_505 = arith.constant dense<0.000000e+00> : vector<8x32xf32>
    %437 = tpu.matmul %434, %436, %cst_505 {dimension_numbers = #tpu.dot_dimension_numbers<[1], [0], [0], [1], [0, 0, 1, 1], [], []>} : vector<8x32xbf16>, vector<32x32xbf16>, vector<8x32xf32> -> vector<8x32xf32>
    %438 = arith.addf %432, %437 : vector<8x32xf32>
    %c0_506 = arith.constant 0 : index
    %c34 = arith.constant 34 : index
    %c0_507 = arith.constant 0 : index
    %c0_508 = arith.constant 0 : index
    %439 = vector.load %arg1[%c0_506, %c34, %c0_507, %c0_508] : memref<1x36x8x32xbf16, #tpu.memory_space<vmem>>, vector<1x1x8x32xbf16>
    %440 = vector.shape_cast %439 : vector<1x1x8x32xbf16> to vector<8x32xbf16>
    %c6_509 = arith.constant 6 : index
    %c0_510 = arith.constant 0 : index
    %c0_511 = arith.constant 0 : index
    %441 = vector.load %arg2[%c6_509, %c0_510, %c0_511] : memref<8x32x32xbf16, #tpu.memory_space<vmem>>, vector<1x32x32xbf16>
    %442 = vector.shape_cast %441 : vector<1x32x32xbf16> to vector<32x32xbf16>
    %cst_512 = arith.constant dense<0.000000e+00> : vector<8x32xf32>
    %443 = tpu.matmul %440, %442, %cst_512 {dimension_numbers = #tpu.dot_dimension_numbers<[1], [0], [0], [1], [0, 0, 1, 1], [], []>} : vector<8x32xbf16>, vector<32x32xbf16>, vector<8x32xf32> -> vector<8x32xf32>
    %444 = arith.addf %438, %443 : vector<8x32xf32>
    %c0_513 = arith.constant 0 : index
    %c35 = arith.constant 35 : index
    %c0_514 = arith.constant 0 : index
    %c0_515 = arith.constant 0 : index
    %445 = vector.load %arg1[%c0_513, %c35, %c0_514, %c0_515] : memref<1x36x8x32xbf16, #tpu.memory_space<vmem>>, vector<1x1x8x32xbf16>
    %446 = vector.shape_cast %445 : vector<1x1x8x32xbf16> to vector<8x32xbf16>
    %c7_516 = arith.constant 7 : index
    %c0_517 = arith.constant 0 : index
    %c0_518 = arith.constant 0 : index
    %447 = vector.load %arg2[%c7_516, %c0_517, %c0_518] : memref<8x32x32xbf16, #tpu.memory_space<vmem>>, vector<1x32x32xbf16>
    %448 = vector.shape_cast %447 : vector<1x32x32xbf16> to vector<32x32xbf16>
    %cst_519 = arith.constant dense<0.000000e+00> : vector<8x32xf32>
    %449 = tpu.matmul %446, %448, %cst_519 {dimension_numbers = #tpu.dot_dimension_numbers<[1], [0], [0], [1], [0, 0, 1, 1], [], []>} : vector<8x32xbf16>, vector<32x32xbf16>, vector<8x32xf32> -> vector<8x32xf32>
    %450 = arith.addf %444, %449 : vector<8x32xf32>
    %cst_520 = arith.constant 0.000000e+00 : f32
    %451 = vector.broadcast %cst_520 : f32 to vector<8x32xf32>
    %452 = arith.maximumf %450, %451 : vector<8x32xf32>
    %453 = arith.truncf %452 : vector<8x32xf32> to vector<8x32xbf16>
    %c0_521 = arith.constant 0 : index
    %c7_522 = arith.constant 7 : index
    %c0_523 = arith.constant 0 : index
    %c0_524 = arith.constant 0 : index
    %454 = vector.load %arg4[%c0_521, %c7_522, %c0_523, %c0_524] : memref<1x8x8x32xbf16, #tpu.memory_space<vmem>>, vector<1x1x8x32xbf16>
    %455 = vector.shape_cast %454 : vector<1x1x8x32xbf16> to vector<8x32xbf16>
    %456 = vector.shape_cast %453 : vector<8x32xbf16> to vector<1x1x8x32xbf16>
    tpu.vector_store %arg4[%c0_521, %c7_522, %c0_523, %c0_524], %456 {strides = array<i32>} : memref<1x8x8x32xbf16, #tpu.memory_space<vmem>>, vector<1x1x8x32xbf16>,
    return
  }
  func.func @transform_0(%arg0: i32) -> (i32, i32, i32, i32) {
    %c0_i32 = arith.constant 0 : i32
    %c0_i32_0 = arith.constant 0 : i32
    %c0_i32_1 = arith.constant 0 : i32
    %c0_i32_2 = arith.constant 0 : i32
    return %arg0, %c0_i32, %c0_i32_0, %c0_i32_1 : i32, i32, i32, i32
  }
  func.func @transform_1(%arg0: i32) -> (i32, i32, i32) {
    %c0_i32 = arith.constant 0 : i32
    %c0_i32_0 = arith.constant 0 : i32
    %c0_i32_1 = arith.constant 0 : i32
    %c0_i32_2 = arith.constant 0 : i32
    return %c0_i32, %c0_i32_0, %c0_i32_1 : i32, i32, i32
  }
  func.func @transform_2(%arg0: i32) -> (i32, i32) {
    %c0_i32 = arith.constant 0 : i32
    %c0_i32_0 = arith.constant 0 : i32
    %c0_i32_1 = arith.constant 0 : i32
    return %c0_i32, %c0_i32_0 : i32, i32
  }
  func.func @transform_3(%arg0: i32) -> (i32, i32, i32, i32) {
    %c0_i32 = arith.constant 0 : i32
    %c0_i32_0 = arith.constant 0 : i32
    %c0_i32_1 = arith.constant 0 : i32
    %c0_i32_2 = arith.constant 0 : i32
    return %arg0, %c0_i32, %c0_i32_0, %c0_i32_1 : i32, i32, i32, i32
  }
}

module attributes {stable_mosaic.version = 11 : i64} {
  func.func @_conv_row_kernel(%arg0: i32, %arg1: memref<1x8x3x128xbf16, #tpu.memory_space<vmem>>, %arg2: memref<4x128x64xbf16, #tpu.memory_space<vmem>>, %arg3: memref<1x64xf32, #tpu.memory_space<vmem>>, %arg4: memref<1x3x3x64xbf16, #tpu.memory_space<vmem>>) attributes {dimension_semantics = [#tpu.dimension_semantics<parallel>], iteration_bounds = array<i64: 2>, scalar_prefetch = 0 : i64, scratch_operands = 0 : i64, tpu.core_type = #tpu.core_type<tc>, window_params = [{transform_indices = @transform_0, window_bounds = array<i64: 1, 8, 3, 128>}, {pipeline_mode = #tpu.pipeline_mode<synchronous>, transform_indices = @transform_1, window_bounds = array<i64: 4, 128, 64>}, {pipeline_mode = #tpu.pipeline_mode<synchronous>, transform_indices = @transform_2, window_bounds = array<i64: 1, 64>}, {transform_indices = @transform_3, window_bounds = array<i64: 1, 3, 3, 64>}]} {
    %c0 = arith.constant 0 : index
    %c0_0 = arith.constant 0 : index
    %0 = vector.load %arg3[%c0, %c0_0] : memref<1x64xf32, #tpu.memory_space<vmem>>, vector<1x64xf32>
    %cst = arith.constant 0.000000e+00 : f32
    %1 = vector.broadcast %cst : f32 to vector<3x64xf32>
    %2 = vector.broadcast %0 : vector<1x64xf32> to vector<3x64xf32>
    %3 = arith.addf %1, %2 : vector<3x64xf32>
    %c0_1 = arith.constant 0 : index
    %c0_2 = arith.constant 0 : index
    %c0_3 = arith.constant 0 : index
    %c0_4 = arith.constant 0 : index
    %4 = vector.load %arg1[%c0_1, %c0_2, %c0_3, %c0_4] : memref<1x8x3x128xbf16, #tpu.memory_space<vmem>>, vector<1x1x3x128xbf16>
    %5 = vector.shape_cast %4 : vector<1x1x3x128xbf16> to vector<3x128xbf16>
    %c0_5 = arith.constant 0 : index
    %c0_6 = arith.constant 0 : index
    %c0_7 = arith.constant 0 : index
    %6 = vector.load %arg2[%c0_5, %c0_6, %c0_7] : memref<4x128x64xbf16, #tpu.memory_space<vmem>>, vector<1x128x64xbf16>
    %7 = vector.shape_cast %6 : vector<1x128x64xbf16> to vector<128x64xbf16>
    %cst_8 = arith.constant dense<0.000000e+00> : vector<3x64xf32>
    %8 = tpu.matmul %5, %7, %cst_8 {dimension_numbers = #tpu.dot_dimension_numbers<[1], [0], [0], [1], [0, 0, 1, 1], [], []>} : vector<3x128xbf16>, vector<128x64xbf16>, vector<3x64xf32> -> vector<3x64xf32>
    %9 = arith.addf %3, %8 : vector<3x64xf32>
    %c0_9 = arith.constant 0 : index
    %c1 = arith.constant 1 : index
    %c0_10 = arith.constant 0 : index
    %c0_11 = arith.constant 0 : index
    %10 = vector.load %arg1[%c0_9, %c1, %c0_10, %c0_11] : memref<1x8x3x128xbf16, #tpu.memory_space<vmem>>, vector<1x1x3x128xbf16>
    %11 = vector.shape_cast %10 : vector<1x1x3x128xbf16> to vector<3x128xbf16>
    %c1_12 = arith.constant 1 : index
    %c0_13 = arith.constant 0 : index
    %c0_14 = arith.constant 0 : index
    %12 = vector.load %arg2[%c1_12, %c0_13, %c0_14] : memref<4x128x64xbf16, #tpu.memory_space<vmem>>, vector<1x128x64xbf16>
    %13 = vector.shape_cast %12 : vector<1x128x64xbf16> to vector<128x64xbf16>
    %cst_15 = arith.constant dense<0.000000e+00> : vector<3x64xf32>
    %14 = tpu.matmul %11, %13, %cst_15 {dimension_numbers = #tpu.dot_dimension_numbers<[1], [0], [0], [1], [0, 0, 1, 1], [], []>} : vector<3x128xbf16>, vector<128x64xbf16>, vector<3x64xf32> -> vector<3x64xf32>
    %15 = arith.addf %9, %14 : vector<3x64xf32>
    %c0_16 = arith.constant 0 : index
    %c2 = arith.constant 2 : index
    %c0_17 = arith.constant 0 : index
    %c0_18 = arith.constant 0 : index
    %16 = vector.load %arg1[%c0_16, %c2, %c0_17, %c0_18] : memref<1x8x3x128xbf16, #tpu.memory_space<vmem>>, vector<1x1x3x128xbf16>
    %17 = vector.shape_cast %16 : vector<1x1x3x128xbf16> to vector<3x128xbf16>
    %c2_19 = arith.constant 2 : index
    %c0_20 = arith.constant 0 : index
    %c0_21 = arith.constant 0 : index
    %18 = vector.load %arg2[%c2_19, %c0_20, %c0_21] : memref<4x128x64xbf16, #tpu.memory_space<vmem>>, vector<1x128x64xbf16>
    %19 = vector.shape_cast %18 : vector<1x128x64xbf16> to vector<128x64xbf16>
    %cst_22 = arith.constant dense<0.000000e+00> : vector<3x64xf32>
    %20 = tpu.matmul %17, %19, %cst_22 {dimension_numbers = #tpu.dot_dimension_numbers<[1], [0], [0], [1], [0, 0, 1, 1], [], []>} : vector<3x128xbf16>, vector<128x64xbf16>, vector<3x64xf32> -> vector<3x64xf32>
    %21 = arith.addf %15, %20 : vector<3x64xf32>
    %c0_23 = arith.constant 0 : index
    %c3 = arith.constant 3 : index
    %c0_24 = arith.constant 0 : index
    %c0_25 = arith.constant 0 : index
    %22 = vector.load %arg1[%c0_23, %c3, %c0_24, %c0_25] : memref<1x8x3x128xbf16, #tpu.memory_space<vmem>>, vector<1x1x3x128xbf16>
    %23 = vector.shape_cast %22 : vector<1x1x3x128xbf16> to vector<3x128xbf16>
    %c3_26 = arith.constant 3 : index
    %c0_27 = arith.constant 0 : index
    %c0_28 = arith.constant 0 : index
    %24 = vector.load %arg2[%c3_26, %c0_27, %c0_28] : memref<4x128x64xbf16, #tpu.memory_space<vmem>>, vector<1x128x64xbf16>
    %25 = vector.shape_cast %24 : vector<1x128x64xbf16> to vector<128x64xbf16>
    %cst_29 = arith.constant dense<0.000000e+00> : vector<3x64xf32>
    %26 = tpu.matmul %23, %25, %cst_29 {dimension_numbers = #tpu.dot_dimension_numbers<[1], [0], [0], [1], [0, 0, 1, 1], [], []>} : vector<3x128xbf16>, vector<128x64xbf16>, vector<3x64xf32> -> vector<3x64xf32>
    %27 = arith.addf %21, %26 : vector<3x64xf32>
    %cst_30 = arith.constant 0.000000e+00 : f32
    %28 = vector.broadcast %cst_30 : f32 to vector<3x64xf32>
    %29 = arith.maximumf %27, %28 : vector<3x64xf32>
    %30 = arith.truncf %29 : vector<3x64xf32> to vector<3x64xbf16>
    %c0_31 = arith.constant 0 : index
    %c0_32 = arith.constant 0 : index
    %c0_33 = arith.constant 0 : index
    %c0_34 = arith.constant 0 : index
    %31 = vector.load %arg4[%c0_31, %c0_32, %c0_33, %c0_34] : memref<1x3x3x64xbf16, #tpu.memory_space<vmem>>, vector<1x1x3x64xbf16>
    %32 = vector.shape_cast %31 : vector<1x1x3x64xbf16> to vector<3x64xbf16>
    %33 = vector.shape_cast %30 : vector<3x64xbf16> to vector<1x1x3x64xbf16>
    tpu.vector_store %arg4[%c0_31, %c0_32, %c0_33, %c0_34], %33 {strides = array<i32>} : memref<1x3x3x64xbf16, #tpu.memory_space<vmem>>, vector<1x1x3x64xbf16>,
    %cst_35 = arith.constant 0.000000e+00 : f32
    %34 = vector.broadcast %cst_35 : f32 to vector<3x64xf32>
    %35 = vector.broadcast %0 : vector<1x64xf32> to vector<3x64xf32>
    %36 = arith.addf %34, %35 : vector<3x64xf32>
    %c0_36 = arith.constant 0 : index
    %c2_37 = arith.constant 2 : index
    %c0_38 = arith.constant 0 : index
    %c0_39 = arith.constant 0 : index
    %37 = vector.load %arg1[%c0_36, %c2_37, %c0_38, %c0_39] : memref<1x8x3x128xbf16, #tpu.memory_space<vmem>>, vector<1x1x3x128xbf16>
    %38 = vector.shape_cast %37 : vector<1x1x3x128xbf16> to vector<3x128xbf16>
    %c0_40 = arith.constant 0 : index
    %c0_41 = arith.constant 0 : index
    %c0_42 = arith.constant 0 : index
    %39 = vector.load %arg2[%c0_40, %c0_41, %c0_42] : memref<4x128x64xbf16, #tpu.memory_space<vmem>>, vector<1x128x64xbf16>
    %40 = vector.shape_cast %39 : vector<1x128x64xbf16> to vector<128x64xbf16>
    %cst_43 = arith.constant dense<0.000000e+00> : vector<3x64xf32>
    %41 = tpu.matmul %38, %40, %cst_43 {dimension_numbers = #tpu.dot_dimension_numbers<[1], [0], [0], [1], [0, 0, 1, 1], [], []>} : vector<3x128xbf16>, vector<128x64xbf16>, vector<3x64xf32> -> vector<3x64xf32>
    %42 = arith.addf %36, %41 : vector<3x64xf32>
    %c0_44 = arith.constant 0 : index
    %c3_45 = arith.constant 3 : index
    %c0_46 = arith.constant 0 : index
    %c0_47 = arith.constant 0 : index
    %43 = vector.load %arg1[%c0_44, %c3_45, %c0_46, %c0_47] : memref<1x8x3x128xbf16, #tpu.memory_space<vmem>>, vector<1x1x3x128xbf16>
    %44 = vector.shape_cast %43 : vector<1x1x3x128xbf16> to vector<3x128xbf16>
    %c1_48 = arith.constant 1 : index
    %c0_49 = arith.constant 0 : index
    %c0_50 = arith.constant 0 : index
    %45 = vector.load %arg2[%c1_48, %c0_49, %c0_50] : memref<4x128x64xbf16, #tpu.memory_space<vmem>>, vector<1x128x64xbf16>
    %46 = vector.shape_cast %45 : vector<1x128x64xbf16> to vector<128x64xbf16>
    %cst_51 = arith.constant dense<0.000000e+00> : vector<3x64xf32>
    %47 = tpu.matmul %44, %46, %cst_51 {dimension_numbers = #tpu.dot_dimension_numbers<[1], [0], [0], [1], [0, 0, 1, 1], [], []>} : vector<3x128xbf16>, vector<128x64xbf16>, vector<3x64xf32> -> vector<3x64xf32>
    %48 = arith.addf %42, %47 : vector<3x64xf32>
    %c0_52 = arith.constant 0 : index
    %c4 = arith.constant 4 : index
    %c0_53 = arith.constant 0 : index
    %c0_54 = arith.constant 0 : index
    %49 = vector.load %arg1[%c0_52, %c4, %c0_53, %c0_54] : memref<1x8x3x128xbf16, #tpu.memory_space<vmem>>, vector<1x1x3x128xbf16>
    %50 = vector.shape_cast %49 : vector<1x1x3x128xbf16> to vector<3x128xbf16>
    %c2_55 = arith.constant 2 : index
    %c0_56 = arith.constant 0 : index
    %c0_57 = arith.constant 0 : index
    %51 = vector.load %arg2[%c2_55, %c0_56, %c0_57] : memref<4x128x64xbf16, #tpu.memory_space<vmem>>, vector<1x128x64xbf16>
    %52 = vector.shape_cast %51 : vector<1x128x64xbf16> to vector<128x64xbf16>
    %cst_58 = arith.constant dense<0.000000e+00> : vector<3x64xf32>
    %53 = tpu.matmul %50, %52, %cst_58 {dimension_numbers = #tpu.dot_dimension_numbers<[1], [0], [0], [1], [0, 0, 1, 1], [], []>} : vector<3x128xbf16>, vector<128x64xbf16>, vector<3x64xf32> -> vector<3x64xf32>
    %54 = arith.addf %48, %53 : vector<3x64xf32>
    %c0_59 = arith.constant 0 : index
    %c5 = arith.constant 5 : index
    %c0_60 = arith.constant 0 : index
    %c0_61 = arith.constant 0 : index
    %55 = vector.load %arg1[%c0_59, %c5, %c0_60, %c0_61] : memref<1x8x3x128xbf16, #tpu.memory_space<vmem>>, vector<1x1x3x128xbf16>
    %56 = vector.shape_cast %55 : vector<1x1x3x128xbf16> to vector<3x128xbf16>
    %c3_62 = arith.constant 3 : index
    %c0_63 = arith.constant 0 : index
    %c0_64 = arith.constant 0 : index
    %57 = vector.load %arg2[%c3_62, %c0_63, %c0_64] : memref<4x128x64xbf16, #tpu.memory_space<vmem>>, vector<1x128x64xbf16>
    %58 = vector.shape_cast %57 : vector<1x128x64xbf16> to vector<128x64xbf16>
    %cst_65 = arith.constant dense<0.000000e+00> : vector<3x64xf32>
    %59 = tpu.matmul %56, %58, %cst_65 {dimension_numbers = #tpu.dot_dimension_numbers<[1], [0], [0], [1], [0, 0, 1, 1], [], []>} : vector<3x128xbf16>, vector<128x64xbf16>, vector<3x64xf32> -> vector<3x64xf32>
    %60 = arith.addf %54, %59 : vector<3x64xf32>
    %cst_66 = arith.constant 0.000000e+00 : f32
    %61 = vector.broadcast %cst_66 : f32 to vector<3x64xf32>
    %62 = arith.maximumf %60, %61 : vector<3x64xf32>
    %63 = arith.truncf %62 : vector<3x64xf32> to vector<3x64xbf16>
    %c0_67 = arith.constant 0 : index
    %c1_68 = arith.constant 1 : index
    %c0_69 = arith.constant 0 : index
    %c0_70 = arith.constant 0 : index
    %64 = vector.load %arg4[%c0_67, %c1_68, %c0_69, %c0_70] : memref<1x3x3x64xbf16, #tpu.memory_space<vmem>>, vector<1x1x3x64xbf16>
    %65 = vector.shape_cast %64 : vector<1x1x3x64xbf16> to vector<3x64xbf16>
    %66 = vector.shape_cast %63 : vector<3x64xbf16> to vector<1x1x3x64xbf16>
    tpu.vector_store %arg4[%c0_67, %c1_68, %c0_69, %c0_70], %66 {strides = array<i32>} : memref<1x3x3x64xbf16, #tpu.memory_space<vmem>>, vector<1x1x3x64xbf16>,
    %cst_71 = arith.constant 0.000000e+00 : f32
    %67 = vector.broadcast %cst_71 : f32 to vector<3x64xf32>
    %68 = vector.broadcast %0 : vector<1x64xf32> to vector<3x64xf32>
    %69 = arith.addf %67, %68 : vector<3x64xf32>
    %c0_72 = arith.constant 0 : index
    %c4_73 = arith.constant 4 : index
    %c0_74 = arith.constant 0 : index
    %c0_75 = arith.constant 0 : index
    %70 = vector.load %arg1[%c0_72, %c4_73, %c0_74, %c0_75] : memref<1x8x3x128xbf16, #tpu.memory_space<vmem>>, vector<1x1x3x128xbf16>
    %71 = vector.shape_cast %70 : vector<1x1x3x128xbf16> to vector<3x128xbf16>
    %c0_76 = arith.constant 0 : index
    %c0_77 = arith.constant 0 : index
    %c0_78 = arith.constant 0 : index
    %72 = vector.load %arg2[%c0_76, %c0_77, %c0_78] : memref<4x128x64xbf16, #tpu.memory_space<vmem>>, vector<1x128x64xbf16>
    %73 = vector.shape_cast %72 : vector<1x128x64xbf16> to vector<128x64xbf16>
    %cst_79 = arith.constant dense<0.000000e+00> : vector<3x64xf32>
    %74 = tpu.matmul %71, %73, %cst_79 {dimension_numbers = #tpu.dot_dimension_numbers<[1], [0], [0], [1], [0, 0, 1, 1], [], []>} : vector<3x128xbf16>, vector<128x64xbf16>, vector<3x64xf32> -> vector<3x64xf32>
    %75 = arith.addf %69, %74 : vector<3x64xf32>
    %c0_80 = arith.constant 0 : index
    %c5_81 = arith.constant 5 : index
    %c0_82 = arith.constant 0 : index
    %c0_83 = arith.constant 0 : index
    %76 = vector.load %arg1[%c0_80, %c5_81, %c0_82, %c0_83] : memref<1x8x3x128xbf16, #tpu.memory_space<vmem>>, vector<1x1x3x128xbf16>
    %77 = vector.shape_cast %76 : vector<1x1x3x128xbf16> to vector<3x128xbf16>
    %c1_84 = arith.constant 1 : index
    %c0_85 = arith.constant 0 : index
    %c0_86 = arith.constant 0 : index
    %78 = vector.load %arg2[%c1_84, %c0_85, %c0_86] : memref<4x128x64xbf16, #tpu.memory_space<vmem>>, vector<1x128x64xbf16>
    %79 = vector.shape_cast %78 : vector<1x128x64xbf16> to vector<128x64xbf16>
    %cst_87 = arith.constant dense<0.000000e+00> : vector<3x64xf32>
    %80 = tpu.matmul %77, %79, %cst_87 {dimension_numbers = #tpu.dot_dimension_numbers<[1], [0], [0], [1], [0, 0, 1, 1], [], []>} : vector<3x128xbf16>, vector<128x64xbf16>, vector<3x64xf32> -> vector<3x64xf32>
    %81 = arith.addf %75, %80 : vector<3x64xf32>
    %c0_88 = arith.constant 0 : index
    %c6 = arith.constant 6 : index
    %c0_89 = arith.constant 0 : index
    %c0_90 = arith.constant 0 : index
    %82 = vector.load %arg1[%c0_88, %c6, %c0_89, %c0_90] : memref<1x8x3x128xbf16, #tpu.memory_space<vmem>>, vector<1x1x3x128xbf16>
    %83 = vector.shape_cast %82 : vector<1x1x3x128xbf16> to vector<3x128xbf16>
    %c2_91 = arith.constant 2 : index
    %c0_92 = arith.constant 0 : index
    %c0_93 = arith.constant 0 : index
    %84 = vector.load %arg2[%c2_91, %c0_92, %c0_93] : memref<4x128x64xbf16, #tpu.memory_space<vmem>>, vector<1x128x64xbf16>
    %85 = vector.shape_cast %84 : vector<1x128x64xbf16> to vector<128x64xbf16>
    %cst_94 = arith.constant dense<0.000000e+00> : vector<3x64xf32>
    %86 = tpu.matmul %83, %85, %cst_94 {dimension_numbers = #tpu.dot_dimension_numbers<[1], [0], [0], [1], [0, 0, 1, 1], [], []>} : vector<3x128xbf16>, vector<128x64xbf16>, vector<3x64xf32> -> vector<3x64xf32>
    %87 = arith.addf %81, %86 : vector<3x64xf32>
    %c0_95 = arith.constant 0 : index
    %c7 = arith.constant 7 : index
    %c0_96 = arith.constant 0 : index
    %c0_97 = arith.constant 0 : index
    %88 = vector.load %arg1[%c0_95, %c7, %c0_96, %c0_97] : memref<1x8x3x128xbf16, #tpu.memory_space<vmem>>, vector<1x1x3x128xbf16>
    %89 = vector.shape_cast %88 : vector<1x1x3x128xbf16> to vector<3x128xbf16>
    %c3_98 = arith.constant 3 : index
    %c0_99 = arith.constant 0 : index
    %c0_100 = arith.constant 0 : index
    %90 = vector.load %arg2[%c3_98, %c0_99, %c0_100] : memref<4x128x64xbf16, #tpu.memory_space<vmem>>, vector<1x128x64xbf16>
    %91 = vector.shape_cast %90 : vector<1x128x64xbf16> to vector<128x64xbf16>
    %cst_101 = arith.constant dense<0.000000e+00> : vector<3x64xf32>
    %92 = tpu.matmul %89, %91, %cst_101 {dimension_numbers = #tpu.dot_dimension_numbers<[1], [0], [0], [1], [0, 0, 1, 1], [], []>} : vector<3x128xbf16>, vector<128x64xbf16>, vector<3x64xf32> -> vector<3x64xf32>
    %93 = arith.addf %87, %92 : vector<3x64xf32>
    %cst_102 = arith.constant 0.000000e+00 : f32
    %94 = vector.broadcast %cst_102 : f32 to vector<3x64xf32>
    %95 = arith.maximumf %93, %94 : vector<3x64xf32>
    %96 = arith.truncf %95 : vector<3x64xf32> to vector<3x64xbf16>
    %c0_103 = arith.constant 0 : index
    %c2_104 = arith.constant 2 : index
    %c0_105 = arith.constant 0 : index
    %c0_106 = arith.constant 0 : index
    %97 = vector.load %arg4[%c0_103, %c2_104, %c0_105, %c0_106] : memref<1x3x3x64xbf16, #tpu.memory_space<vmem>>, vector<1x1x3x64xbf16>
    %98 = vector.shape_cast %97 : vector<1x1x3x64xbf16> to vector<3x64xbf16>
    %99 = vector.shape_cast %96 : vector<3x64xbf16> to vector<1x1x3x64xbf16>
    tpu.vector_store %arg4[%c0_103, %c2_104, %c0_105, %c0_106], %99 {strides = array<i32>} : memref<1x3x3x64xbf16, #tpu.memory_space<vmem>>, vector<1x1x3x64xbf16>,
    return
  }
  func.func @transform_0(%arg0: i32) -> (i32, i32, i32, i32) {
    %c0_i32 = arith.constant 0 : i32
    %c0_i32_0 = arith.constant 0 : i32
    %c0_i32_1 = arith.constant 0 : i32
    %c0_i32_2 = arith.constant 0 : i32
    return %arg0, %c0_i32, %c0_i32_0, %c0_i32_1 : i32, i32, i32, i32
  }
  func.func @transform_1(%arg0: i32) -> (i32, i32, i32) {
    %c0_i32 = arith.constant 0 : i32
    %c0_i32_0 = arith.constant 0 : i32
    %c0_i32_1 = arith.constant 0 : i32
    %c0_i32_2 = arith.constant 0 : i32
    return %c0_i32, %c0_i32_0, %c0_i32_1 : i32, i32, i32
  }
  func.func @transform_2(%arg0: i32) -> (i32, i32) {
    %c0_i32 = arith.constant 0 : i32
    %c0_i32_0 = arith.constant 0 : i32
    %c0_i32_1 = arith.constant 0 : i32
    return %c0_i32, %c0_i32_0 : i32, i32
  }
  func.func @transform_3(%arg0: i32) -> (i32, i32, i32, i32) {
    %c0_i32 = arith.constant 0 : i32
    %c0_i32_0 = arith.constant 0 : i32
    %c0_i32_1 = arith.constant 0 : i32
    %c0_i32_2 = arith.constant 0 : i32
    return %arg0, %c0_i32, %c0_i32_0, %c0_i32_1 : i32, i32, i32, i32
  }
}

module attributes {stable_mosaic.version = 11 : i64} {
  func.func @_conv_row_kernel(%arg0: i32, %arg1: memref<1x3x1x192xbf16, #tpu.memory_space<vmem>>, %arg2: memref<3x192x64xbf16, #tpu.memory_space<vmem>>, %arg3: memref<1x64xf32, #tpu.memory_space<vmem>>, %arg4: memref<1x1x1x64xbf16, #tpu.memory_space<vmem>>) attributes {dimension_semantics = [#tpu.dimension_semantics<parallel>], iteration_bounds = array<i64: 2>, scalar_prefetch = 0 : i64, scratch_operands = 0 : i64, tpu.core_type = #tpu.core_type<tc>, window_params = [{transform_indices = @transform_0, window_bounds = array<i64: 1, 3, 1, 192>}, {pipeline_mode = #tpu.pipeline_mode<synchronous>, transform_indices = @transform_1, window_bounds = array<i64: 3, 192, 64>}, {pipeline_mode = #tpu.pipeline_mode<synchronous>, transform_indices = @transform_2, window_bounds = array<i64: 1, 64>}, {transform_indices = @transform_3, window_bounds = array<i64: 1, 1, 1, 64>}]} {
    %c0 = arith.constant 0 : index
    %c0_0 = arith.constant 0 : index
    %0 = vector.load %arg3[%c0, %c0_0] : memref<1x64xf32, #tpu.memory_space<vmem>>, vector<1x64xf32>
    %cst = arith.constant 0.000000e+00 : f32
    %1 = vector.broadcast %cst : f32 to vector<1x64xf32>
    %2 = arith.addf %1, %0 : vector<1x64xf32>
    %c0_1 = arith.constant 0 : index
    %c0_2 = arith.constant 0 : index
    %c0_3 = arith.constant 0 : index
    %c0_4 = arith.constant 0 : index
    %3 = vector.load %arg1[%c0_1, %c0_2, %c0_3, %c0_4] : memref<1x3x1x192xbf16, #tpu.memory_space<vmem>>, vector<1x1x1x192xbf16>
    %4 = vector.shape_cast %3 : vector<1x1x1x192xbf16> to vector<1x192xbf16>
    %c0_5 = arith.constant 0 : index
    %c0_6 = arith.constant 0 : index
    %c0_7 = arith.constant 0 : index
    %5 = vector.load %arg2[%c0_5, %c0_6, %c0_7] : memref<3x192x64xbf16, #tpu.memory_space<vmem>>, vector<1x192x64xbf16>
    %6 = vector.shape_cast %5 : vector<1x192x64xbf16> to vector<192x64xbf16>
    %cst_8 = arith.constant dense<0.000000e+00> : vector<1x64xf32>
    %7 = tpu.matmul %4, %6, %cst_8 {dimension_numbers = #tpu.dot_dimension_numbers<[1], [0], [0], [1], [0, 0, 1, 1], [], []>} : vector<1x192xbf16>, vector<192x64xbf16>, vector<1x64xf32> -> vector<1x64xf32>
    %8 = arith.addf %2, %7 : vector<1x64xf32>
    %c0_9 = arith.constant 0 : index
    %c1 = arith.constant 1 : index
    %c0_10 = arith.constant 0 : index
    %c0_11 = arith.constant 0 : index
    %9 = vector.load %arg1[%c0_9, %c1, %c0_10, %c0_11] : memref<1x3x1x192xbf16, #tpu.memory_space<vmem>>, vector<1x1x1x192xbf16>
    %10 = vector.shape_cast %9 : vector<1x1x1x192xbf16> to vector<1x192xbf16>
    %c1_12 = arith.constant 1 : index
    %c0_13 = arith.constant 0 : index
    %c0_14 = arith.constant 0 : index
    %11 = vector.load %arg2[%c1_12, %c0_13, %c0_14] : memref<3x192x64xbf16, #tpu.memory_space<vmem>>, vector<1x192x64xbf16>
    %12 = vector.shape_cast %11 : vector<1x192x64xbf16> to vector<192x64xbf16>
    %cst_15 = arith.constant dense<0.000000e+00> : vector<1x64xf32>
    %13 = tpu.matmul %10, %12, %cst_15 {dimension_numbers = #tpu.dot_dimension_numbers<[1], [0], [0], [1], [0, 0, 1, 1], [], []>} : vector<1x192xbf16>, vector<192x64xbf16>, vector<1x64xf32> -> vector<1x64xf32>
    %14 = arith.addf %8, %13 : vector<1x64xf32>
    %c0_16 = arith.constant 0 : index
    %c2 = arith.constant 2 : index
    %c0_17 = arith.constant 0 : index
    %c0_18 = arith.constant 0 : index
    %15 = vector.load %arg1[%c0_16, %c2, %c0_17, %c0_18] : memref<1x3x1x192xbf16, #tpu.memory_space<vmem>>, vector<1x1x1x192xbf16>
    %16 = vector.shape_cast %15 : vector<1x1x1x192xbf16> to vector<1x192xbf16>
    %c2_19 = arith.constant 2 : index
    %c0_20 = arith.constant 0 : index
    %c0_21 = arith.constant 0 : index
    %17 = vector.load %arg2[%c2_19, %c0_20, %c0_21] : memref<3x192x64xbf16, #tpu.memory_space<vmem>>, vector<1x192x64xbf16>
    %18 = vector.shape_cast %17 : vector<1x192x64xbf16> to vector<192x64xbf16>
    %cst_22 = arith.constant dense<0.000000e+00> : vector<1x64xf32>
    %19 = tpu.matmul %16, %18, %cst_22 {dimension_numbers = #tpu.dot_dimension_numbers<[1], [0], [0], [1], [0, 0, 1, 1], [], []>} : vector<1x192xbf16>, vector<192x64xbf16>, vector<1x64xf32> -> vector<1x64xf32>
    %20 = arith.addf %14, %19 : vector<1x64xf32>
    %cst_23 = arith.constant 0.000000e+00 : f32
    %21 = vector.broadcast %cst_23 : f32 to vector<1x64xf32>
    %22 = arith.maximumf %20, %21 : vector<1x64xf32>
    %23 = arith.truncf %22 : vector<1x64xf32> to vector<1x64xbf16>
    %c0_24 = arith.constant 0 : index
    %c0_25 = arith.constant 0 : index
    %c0_26 = arith.constant 0 : index
    %c0_27 = arith.constant 0 : index
    %24 = vector.load %arg4[%c0_24, %c0_25, %c0_26, %c0_27] : memref<1x1x1x64xbf16, #tpu.memory_space<vmem>>, vector<1x1x1x64xbf16>
    %25 = vector.shape_cast %24 : vector<1x1x1x64xbf16> to vector<1x64xbf16>
    %26 = vector.shape_cast %23 : vector<1x64xbf16> to vector<1x1x1x64xbf16>
    tpu.vector_store %arg4[%c0_24, %c0_25, %c0_26, %c0_27], %26 {strides = array<i32>} : memref<1x1x1x64xbf16, #tpu.memory_space<vmem>>, vector<1x1x1x64xbf16>,
    return
  }
  func.func @transform_0(%arg0: i32) -> (i32, i32, i32, i32) {
    %c0_i32 = arith.constant 0 : i32
    %c0_i32_0 = arith.constant 0 : i32
    %c0_i32_1 = arith.constant 0 : i32
    %c0_i32_2 = arith.constant 0 : i32
    return %arg0, %c0_i32, %c0_i32_0, %c0_i32_1 : i32, i32, i32, i32
  }
  func.func @transform_1(%arg0: i32) -> (i32, i32, i32) {
    %c0_i32 = arith.constant 0 : i32
    %c0_i32_0 = arith.constant 0 : i32
    %c0_i32_1 = arith.constant 0 : i32
    %c0_i32_2 = arith.constant 0 : i32
    return %c0_i32, %c0_i32_0, %c0_i32_1 : i32, i32, i32
  }
  func.func @transform_2(%arg0: i32) -> (i32, i32) {
    %c0_i32 = arith.constant 0 : i32
    %c0_i32_0 = arith.constant 0 : i32
    %c0_i32_1 = arith.constant 0 : i32
    return %c0_i32, %c0_i32_0 : i32, i32
  }
  func.func @transform_3(%arg0: i32) -> (i32, i32, i32, i32) {
    %c0_i32 = arith.constant 0 : i32
    %c0_i32_0 = arith.constant 0 : i32
    %c0_i32_1 = arith.constant 0 : i32
    %c0_i32_2 = arith.constant 0 : i32
    return %arg0, %c0_i32, %c0_i32_0, %c0_i32_1 : i32, i32, i32, i32
  }
}

</mosaic_0001>

<llo_original>
// kernel: feature_extractor.4
$region0: #{feature_extractor.4}
  #allocation0 [shape = 'u32[]', space=smem, size = 0x4, offset = 0x4, fixed_abs, tag = 'smem constant byte address 0x4 - core index']
  #allocation1 [shape = 'u32[72,128]{1,0:T(1,128)}', space=vmem, size = 0x9000, scoped, tag = 'internal scratch']
  %s0 = inlined_call_operand.vmem [shape: bf16[2,8,3,128], index: 0, kind: input, shape index: {}]
  %s1 = inlined_call_operand.vmem [shape: bf16[4,128,64], index: 1, kind: input, shape index: {}]
  %s2 = inlined_call_operand.vmem [shape: f32[1,64], index: 2, kind: input, shape index: {}]
  %s3 = inlined_call_operand.vmem [shape: bf16[2,3,3,64], index: 3, kind: output, shape index: {}]
  %s4 = sld [smem:[#allocation0]]
  $region45: #{feature_extractor.4} parent=0
    _
  %s6 = ssub.s32 1, %s4
  %s7 = scalar_select 0, %s6, %s4
  loop: start=0, step=1, limit=4
  $region2: #{feature_extractor.4} parent=0 // loop_pre_header
    _
  $region3: #{feature_extractor.4} parent=0 // loop_header
    %s9 = sphi 0, %s13
    %p10 = scmp.ge.s32.totalorder %s9, 4
    %s19 = sphi 0, %s21
    %s22 = sphi 0, %s19
    %s23 = sphi 0, %s22
    %s39 = sphi 0, %s23
    %s43 = sphi 0, %s43
    %s45 = sphi 0, %s43
    %s46 = sphi 0, %s45
    %s60 = sphi 0, %s46
    %s64 = sphi 0, %s64
    %s66 = sphi 0, %s64
    %s67 = sphi 0, %s66
    %s81 = sphi 0, %s67
    %s87 = sphi 0, %s89
    %s90 = sphi 0, %s87
    %s91 = sphi 0, %s90
    %s107 = sphi 0, %s91
  $region4: #{feature_extractor.4} parent=0 // loop_header_branch
    %12 = sbr.rel (%p10) target = $region8
  $region5: #{feature_extractor.4} parent=0 // loop_body
    %s14 = ssub.s32 %s9, 1
    %s15 = ssub.s32 %s9, 2
    %s16 = sadd.s32 %s9, 1
    %s17 = ssub.s32 %s9, %s16
    %p18 = scmp.eq.s32.totalorder %s17, 0
    %s20 = sadd.s32 %s19, 1
    %s21 = scalar_select %p18, %s19, %s20
    %p24 = pneg %p18
    %p25 = scmp.eq.s32.totalorder %s9, 1
    %p26 = por %p24, %p25
    %p27 = scmp.ne.s32.totalorder %s19, %s22
    %p28 = scmp.eq.s32.totalorder %s9, 0
    %p29 = por %p27, %p28
    %p30 = scmp.ne.s32.totalorder %s19, %s22
    %p31 = scmp.eq.s32.totalorder %s14, 1
    %p32 = por %p30, %p31
    %p33 = scmp.ne.s32.totalorder %s22, %s23
    %p34 = scmp.eq.s32.totalorder %s14, 0
    %p35 = por %p33, %p34
    %p36 = scmp.ne.s32.totalorder %s22, %s23
    %p37 = scmp.eq.s32.totalorder %s15, 1
    %p38 = por %p36, %p37
    %p40 = scmp.ne.s32.totalorder %s23, %s39
    %p41 = scmp.eq.s32.totalorder %s15, 0
    %p42 = por %p40, %p41
    %s44 = sadd.s32 %s43, 1
    %p47 = scmp.eq.s32.totalorder %s9, 1
    %p48 = scmp.ne.s32.totalorder %s43, %s45
    %p49 = scmp.eq.s32.totalorder %s9, 0
    %p50 = por %p48, %p49
    %p51 = scmp.ne.s32.totalorder %s43, %s45
    %p52 = scmp.eq.s32.totalorder %s14, 1
    %p53 = por %p51, %p52
    %p54 = scmp.ne.s32.totalorder %s45, %s46
    %p55 = scmp.eq.s32.totalorder %s14, 0
    %p56 = por %p54, %p55
    %p57 = scmp.ne.s32.totalorder %s45, %s46
    %p58 = scmp.eq.s32.totalorder %s15, 1
    %p59 = por %p57, %p58
    %p61 = scmp.ne.s32.totalorder %s46, %s60
    %p62 = scmp.eq.s32.totalorder %s15, 0
    %p63 = por %p61, %p62
    %s65 = sadd.s32 %s64, 1
    %p68 = scmp.eq.s32.totalorder %s9, 1
    %p69 = scmp.ne.s32.totalorder %s64, %s66
    %p70 = scmp.eq.s32.totalorder %s9, 0
    %p71 = por %p69, %p70
    %p72 = scmp.ne.s32.totalorder %s64, %s66
    %p73 = scmp.eq.s32.totalorder %s14, 1
    %p74 = por %p72, %p73
    %p75 = scmp.ne.s32.totalorder %s66, %s67
    %p76 = scmp.eq.s32.totalorder %s14, 0
    %p77 = por %p75, %p76
    %p78 = scmp.ne.s32.totalorder %s66, %s67
    %p79 = scmp.eq.s32.totalorder %s15, 1
    %p80 = por %p78, %p79
    %p82 = scmp.ne.s32.totalorder %s67, %s81
    %p83 = scmp.eq.s32.totalorder %s15, 0
    %p84 = por %p82, %p83
    %s85 = ssub.s32 %s9, %s16
    %p86 = scmp.eq.s32.totalorder %s85, 0
    %s88 = sadd.s32 %s87, 1
    %s89 = scalar_select %p86, %s87, %s88
    %p92 = pneg %p86
    %p93 = scmp.eq.s32.totalorder %s9, 1
    %p94 = por %p92, %p93
    %p95 = scmp.ne.s32.totalorder %s87, %s90
    %p96 = scmp.eq.s32.totalorder %s9, 0
    %p97 = por %p95, %p96
    %p98 = scmp.ne.s32.totalorder %s87, %s90
    %p99 = scmp.eq.s32.totalorder %s14, 1
    %p100 = por %p98, %p99
    %p101 = scmp.ne.s32.totalorder %s90, %s91
    %p102 = scmp.eq.s32.totalorder %s14, 0
    %p103 = por %p101, %p102
    %p104 = scmp.ne.s32.totalorder %s90, %s91
    %p105 = scmp.eq.s32.totalorder %s15, 1
    %p106 = por %p104, %p105
    %p108 = scmp.ne.s32.totalorder %s91, %s107
    %p109 = scmp.eq.s32.totalorder %s15, 0
    %p110 = por %p108, %p109
    %p111 = scmp.le.s32.totalorder 1, %s9
    %p112 = scmp.lt.s32.totalorder %s9, 3
    %p113 = pnand %p111, %p112
    %p114 = pneg %p113
    // Predicated region
    $region9: #{feature_extractor.4} parent=5 // pred_check
      _
    $region10: #{feature_extractor.4} parent=5 // pred_check_branch
      %116 = sbr.rel (%p113) target = $region12
    $region11: #{feature_extractor.4} parent=5 // pred_region
      %s117 = ssub.s32 %s9, 1
      // Predicated region
      $region13: #{feature_extractor.4} parent=11 // pred_check
        %p118 = pneg %p56
      $region14: #{feature_extractor.4} parent=11 // pred_check_branch
        %120 = sbr.rel (%p118) target = $region16
      $region15: #{feature_extractor.4} parent=11 // pred_region
        _
      $region16: #{feature_extractor.4} parent=11 // pred_fallthru
        _
      // Predicated region
      $region17: #{feature_extractor.4} parent=11 // pred_check
        %p121 = pneg %p77
      $region18: #{feature_extractor.4} parent=11 // pred_check_branch
        %123 = sbr.rel (%p121) target = $region20
      $region19: #{feature_extractor.4} parent=11 // pred_region
        _
      $region20: #{feature_extractor.4} parent=11 // pred_fallthru
        _
    $region12: #{feature_extractor.4} parent=5 // pred_fallthru
      _
    %p124 = scmp.lt.s32.totalorder %s9, 2
    // Predicated region
    $region21: #{feature_extractor.4} parent=5 // pred_check
      %p125 = pneg %p124
    $region22: #{feature_extractor.4} parent=5 // pred_check_branch
      %127 = sbr.rel (%p125) target = $region24
    $region23: #{feature_extractor.4} parent=5 // pred_region
      // Predicated region
      $region25: #{feature_extractor.4} parent=23 // pred_check
        %p128 = pneg %p29
      $region26: #{feature_extractor.4} parent=23 // pred_check_branch
        %130 = sbr.rel (%p128) target = $region28
      $region27: #{feature_extractor.4} parent=23 // pred_region
        %p131 = scmp.lt.s32.totalorder %s9, 1
        %s132 = scalar_select %p131, %s9, 1
        %s133 = smul.addr %s132, 8
        %s134 = smul.addr %s133, 2
        %s135 = scalar_lea.vmem %s0, %s134
      $region28: #{feature_extractor.4} parent=23 // pred_fallthru
        _
    $region24: #{feature_extractor.4} parent=5 // pred_fallthru
      _
    %p136 = scmp.le.s32.totalorder 1, %s9
    %p137 = scmp.lt.s32.totalorder %s9, 3
    %p138 = pnand %p136, %p137
    %p139 = pneg %p138
    // Predicated region
    $region29: #{feature_extractor.4} parent=5 // pred_check
      _
    $region30: #{feature_extractor.4} parent=5 // pred_check_branch
      %141 = sbr.rel (%p138) target = $region32
    $region31: #{feature_extractor.4} parent=5 // pred_region
      %s142 = ssub.s32 %s9, 1
      %p143 = scmp.lt.s32.totalorder %s14, 1
      %s144 = scalar_select %p143, %s14, 1
      %s145 = smul.addr %s144, 8
      %s146 = smul.addr %s145, 2
      %s147 = scalar_lea.vmem %s0, %s146
      %p148 = pneg %p35
      %p149 = pneg %p32
      %p150 = pneg %p56
      %p151 = pneg %p53
      %p152 = pneg %p77
      %p153 = pneg %p74
      %p154 = pneg %p103
      %p155 = pneg %p100
      %p156 = scmp.lt.s32.totalorder %s14, 1
      %s157 = scalar_select %p156, %s14, 1
      %s158 = smul.addr %s157, 3
      %s159 = smul.addr %s158, 2
      %s160 = scalar_lea.vmem %s3, %s159
      %p161 = scmp.lt.s32.totalorder %s14, 1
      %s162 = scalar_select %p161, %s14, 1
      %s163 = smul.addr %s162, 8
      %s164 = smul.addr %s163, 2
      %s165 = scalar_lea.vmem %s0, %s164
      %p166 = scmp.lt.s32.totalorder %s14, 1
      %s167 = scalar_select %p166, %s14, 1
      %s168 = smul.addr %s167, 3
      %s169 = smul.addr %s168, 2
      %s170 = scalar_lea.vmem %s3, %s169
      %v171 = vld [vmem:[%s2] sm:$0x1]
      %v173 = vperm.slane %v171, 0
      %v175 = vadd.f32 %v173, 0.0
      %v176 = vld [vmem:[%s165] sm:$0x3]
      %v177 = vld [vmem:[%s1] sm:$0xf]
      %v178 = vld [vmem:[%s1 + $0x4] sm:$0xf]
      %v179 = vld [vmem:[%s1 + $0x8] sm:$0xf]
      %v180 = vld [vmem:[%s1 + $0xc] sm:$0xf]
      %v181 = vld [vmem:[%s1 + $0x10] sm:$0xf]
      %v182 = vld [vmem:[%s1 + $0x14] sm:$0xf]
      %v183 = vld [vmem:[%s1 + $0x18] sm:$0xf]
      %v184 = vld [vmem:[%s1 + $0x1c] sm:$0xf]
      %v185 = vld [vmem:[%s1 + $0x20] sm:$0xf]
      %v186 = vld [vmem:[%s1 + $0x24] sm:$0xf]
      %v187 = vld [vmem:[%s1 + $0x28] sm:$0xf]
      %v188 = vld [vmem:[%s1 + $0x2c] sm:$0xf]
      %v189 = vld [vmem:[%s1 + $0x30] sm:$0xf]
      %v190 = vld [vmem:[%s1 + $0x34] sm:$0xf]
      %v191 = vld [vmem:[%s1 + $0x38] sm:$0xf]
      %v192 = vld [vmem:[%s1 + $0x3c] sm:$0xf]
      %v209 = vunpack.c.l.b16 %v177
      %v210 = vunpack.c.l.b16 %v178
      %v211 = vunpack.c.l.b16 %v179
      %v212 = vunpack.c.l.b16 %v180
      %v213 = vunpack.c.l.b16 %v181
      %v214 = vunpack.c.l.b16 %v182
      %v215 = vunpack.c.l.b16 %v183
      %v216 = vunpack.c.l.b16 %v184
      %v217 = vunpack.c.l.b16 %v185
      %v218 = vunpack.c.l.b16 %v186
      %v219 = vunpack.c.l.b16 %v187
      %v220 = vunpack.c.l.b16 %v188
      %v221 = vunpack.c.l.b16 %v189
      %v222 = vunpack.c.l.b16 %v190
      %v223 = vunpack.c.l.b16 %v191
      %v224 = vunpack.c.l.b16 %v192
      %v225 = vpack.c.b16 %v210, %v209
      %v226 = vpack.c.b16 %v212, %v211
      %v227 = vpack.c.b16 %v214, %v213
      %v228 = vpack.c.b16 %v216, %v215
      %v229 = vpack.c.b16 %v218, %v217
      %v230 = vpack.c.b16 %v220, %v219
      %v231 = vpack.c.b16 %v222, %v221
      %v232 = vpack.c.b16 %v224, %v223
      %241 = vmatpush.bf16.msra.mxu0 %v232
      %242 = vmatpush.bf16.msra.mxu0 %v231
      %243 = vmatpush.bf16.msra.mxu0 %v230
      %244 = vmatpush.bf16.msra.mxu0 %v229
      %245 = vmatpush.bf16.msra.mxu0 %v228
      %246 = vmatpush.bf16.msra.mxu0 %v227
      %247 = vmatpush.bf16.msra.mxu0 %v226
      %248 = vmatpush.bf16.msra.mxu0 %v225
      %249 = vmatmul.bf16.gmra.mxu0 %v176
      %v250 = vpop.f32.mrf.mxu0
      %v251 = vadd.f32 0.0, %v250
      %v252 = vpop.f32.mrf.mxu0
      %253 = vdwg.mxu0
      %v254 = vadd.f32 %v175, %v251
      %s255 = scalar_lea.vmem %s165, 2
      %v256 = vld [vmem:[%s255] sm:$0x3]
      %s257 = scalar_lea.vmem %s1, 64
      %v258 = vld [vmem:[%s257] sm:$0xf]
      %v259 = vld [vmem:[%s257 + $0x4] sm:$0xf]
      %v260 = vld [vmem:[%s257 + $0x8] sm:$0xf]
      %v261 = vld [vmem:[%s257 + $0xc] sm:$0xf]
      %v262 = vld [vmem:[%s257 + $0x10] sm:$0xf]
      %v263 = vld [vmem:[%s257 + $0x14] sm:$0xf]
      %v264 = vld [vmem:[%s257 + $0x18] sm:$0xf]
      %v265 = vld [vmem:[%s257 + $0x1c] sm:$0xf]
      %v266 = vld [vmem:[%s257 + $0x20] sm:$0xf]
      %v267 = vld [vmem:[%s257 + $0x24] sm:$0xf]
      %v268 = vld [vmem:[%s257 + $0x28] sm:$0xf]
      %v269 = vld [vmem:[%s257 + $0x2c] sm:$0xf]
      %v270 = vld [vmem:[%s257 + $0x30] sm:$0xf]
      %v271 = vld [vmem:[%s257 + $0x34] sm:$0xf]
      %v272 = vld [vmem:[%s257 + $0x38] sm:$0xf]
      %v273 = vld [vmem:[%s257 + $0x3c] sm:$0xf]
      %v290 = vunpack.c.l.b16 %v258
      %v291 = vunpack.c.l.b16 %v259
      %v292 = vunpack.c.l.b16 %v260
      %v293 = vunpack.c.l.b16 %v261
      %v294 = vunpack.c.l.b16 %v262
      %v295 = vunpack.c.l.b16 %v263
      %v296 = vunpack.c.l.b16 %v264
      %v297 = vunpack.c.l.b16 %v265
      %v298 = vunpack.c.l.b16 %v266
      %v299 = vunpack.c.l.b16 %v267
      %v300 = vunpack.c.l.b16 %v268
      %v301 = vunpack.c.l.b16 %v269
      %v302 = vunpack.c.l.b16 %v270
      %v303 = vunpack.c.l.b16 %v271
      %v304 = vunpack.c.l.b16 %v272
      %v305 = vunpack.c.l.b16 %v273
      %v306 = vpack.c.b16 %v291, %v290
      %v307 = vpack.c.b16 %v293, %v292
      %v308 = vpack.c.b16 %v295, %v294
      %v309 = vpack.c.b16 %v297, %v296
      %v310 = vpack.c.b16 %v299, %v298
      %v311 = vpack.c.b16 %v301, %v300
      %v312 = vpack.c.b16 %v303, %v302
      %v313 = vpack.c.b16 %v305, %v304
      %322 = vmatpush.bf16.msra.mxu0 %v313
      %323 = vmatpush.bf16.msra.mxu0 %v312
      %324 = vmatpush.bf16.msra.mxu0 %v311
      %325 = vmatpush.bf16.msra.mxu0 %v310
      %326 = vmatpush.bf16.msra.mxu0 %v309
      %327 = vmatpush.bf16.msra.mxu0 %v308
      %328 = vmatpush.bf16.msra.mxu0 %v307
      %329 = vmatpush.bf16.msra.mxu0 %v306
      %330 = vmatmul.bf16.gmra.mxu0 %v256
      %v331 = vpop.f32.mrf.mxu0
      %v332 = vadd.f32 0.0, %v331
      %v333 = vpop.f32.mrf.mxu0
      %334 = vdwg.mxu0
      %v335 = vadd.f32 %v254, %v332
      %s336 = scalar_lea.vmem %s165, 4
      %v337 = vld [vmem:[%s336] sm:$0x3]
      %s338 = scalar_lea.vmem %s1, 128
      %v339 = vld [vmem:[%s338] sm:$0xf]
      %v340 = vld [vmem:[%s338 + $0x4] sm:$0xf]
      %v341 = vld [vmem:[%s338 + $0x8] sm:$0xf]
      %v342 = vld [vmem:[%s338 + $0xc] sm:$0xf]
      %v343 = vld [vmem:[%s338 + $0x10] sm:$0xf]
      %v344 = vld [vmem:[%s338 + $0x14] sm:$0xf]
      %v345 = vld [vmem:[%s338 + $0x18] sm:$0xf]
      %v346 = vld [vmem:[%s338 + $0x1c] sm:$0xf]
      %v347 = vld [vmem:[%s338 + $0x20] sm:$0xf]
      %v348 = vld [vmem:[%s338 + $0x24] sm:$0xf]
      %v349 = vld [vmem:[%s338 + $0x28] sm:$0xf]
      %v350 = vld [vmem:[%s338 + $0x2c] sm:$0xf]
      %v351 = vld [vmem:[%s338 + $0x30] sm:$0xf]
      %v352 = vld [vmem:[%s338 + $0x34] sm:$0xf]
      %v353 = vld [vmem:[%s338 + $0x38] sm:$0xf]
      %v354 = vld [vmem:[%s338 + $0x3c] sm:$0xf]
      %v371 = vunpack.c.l.b16 %v339
      %v372 = vunpack.c.l.b16 %v340
      %v373 = vunpack.c.l.b16 %v341
      %v374 = vunpack.c.l.b16 %v342
      %v375 = vunpack.c.l.b16 %v343
      %v376 = vunpack.c.l.b16 %v344
      %v377 = vunpack.c.l.b16 %v345
      %v378 = vunpack.c.l.b16 %v346
      %v379 = vunpack.c.l.b16 %v347
      %v380 = vunpack.c.l.b16 %v348
      %v381 = vunpack.c.l.b16 %v349
      %v382 = vunpack.c.l.b16 %v350
      %v383 = vunpack.c.l.b16 %v351
      %v384 = vunpack.c.l.b16 %v352
      %v385 = vunpack.c.l.b16 %v353
      %v386 = vunpack.c.l.b16 %v354
      %v387 = vpack.c.b16 %v372, %v371
      %v388 = vpack.c.b16 %v374, %v373
      %v389 = vpack.c.b16 %v376, %v375
      %v390 = vpack.c.b16 %v378, %v377
      %v391 = vpack.c.b16 %v380, %v379
      %v392 = vpack.c.b16 %v382, %v381
      %v393 = vpack.c.b16 %v384, %v383
      %v394 = vpack.c.b16 %v386, %v385
      %403 = vmatpush.bf16.msra.mxu0 %v394
      %404 = vmatpush.bf16.msra.mxu0 %v393
      %405 = vmatpush.bf16.msra.mxu0 %v392
      %406 = vmatpush.bf16.msra.mxu0 %v391
      %407 = vmatpush.bf16.msra.mxu0 %v390
      %408 = vmatpush.bf16.msra.mxu0 %v389
      %409 = vmatpush.bf16.msra.mxu0 %v388
      %410 = vmatpush.bf16.msra.mxu0 %v387
      %411 = vmatmul.bf16.gmra.mxu0 %v337
      %v412 = vpop.f32.mrf.mxu0
      %v413 = vadd.f32 0.0, %v412
      %v414 = vpop.f32.mrf.mxu0
      %415 = vdwg.mxu0
      %v416 = vadd.f32 %v335, %v413
      %s417 = scalar_lea.vmem %s165, 6
      %v418 = vld [vmem:[%s417] sm:$0x3]
      %s419 = scalar_lea.vmem %s1, 192
      %v420 = vld [vmem:[%s419] sm:$0xf]
      %v421 = vld [vmem:[%s419 + $0x4] sm:$0xf]
      %v422 = vld [vmem:[%s419 + $0x8] sm:$0xf]
      %v423 = vld [vmem:[%s419 + $0xc] sm:$0xf]
      %v424 = vld [vmem:[%s419 + $0x10] sm:$0xf]
      %v425 = vld [vmem:[%s419 + $0x14] sm:$0xf]
      %v426 = vld [vmem:[%s419 + $0x18] sm:$0xf]
      %v427 = vld [vmem:[%s419 + $0x1c] sm:$0xf]
      %v428 = vld [vmem:[%s419 + $0x20] sm:$0xf]
      %v429 = vld [vmem:[%s419 + $0x24] sm:$0xf]
      %v430 = vld [vmem:[%s419 + $0x28] sm:$0xf]
      %v431 = vld [vmem:[%s419 + $0x2c] sm:$0xf]
      %v432 = vld [vmem:[%s419 + $0x30] sm:$0xf]
      %v433 = vld [vmem:[%s419 + $0x34] sm:$0xf]
      %v434 = vld [vmem:[%s419 + $0x38] sm:$0xf]
      %v435 = vld [vmem:[%s419 + $0x3c] sm:$0xf]
      %v452 = vunpack.c.l.b16 %v420
      %v453 = vunpack.c.l.b16 %v421
      %v454 = vunpack.c.l.b16 %v422
      %v455 = vunpack.c.l.b16 %v423
      %v456 = vunpack.c.l.b16 %v424
      %v457 = vunpack.c.l.b16 %v425
      %v458 = vunpack.c.l.b16 %v426
      %v459 = vunpack.c.l.b16 %v427
      %v460 = vunpack.c.l.b16 %v428
      %v461 = vunpack.c.l.b16 %v429
      %v462 = vunpack.c.l.b16 %v430
      %v463 = vunpack.c.l.b16 %v431
      %v464 = vunpack.c.l.b16 %v432
      %v465 = vunpack.c.l.b16 %v433
      %v466 = vunpack.c.l.b16 %v434
      %v467 = vunpack.c.l.b16 %v435
      %v468 = vpack.c.b16 %v453, %v452
      %v469 = vpack.c.b16 %v455, %v454
      %v470 = vpack.c.b16 %v457, %v456
      %v471 = vpack.c.b16 %v459, %v458
      %v472 = vpack.c.b16 %v461, %v460
      %v473 = vpack.c.b16 %v463, %v462
      %v474 = vpack.c.b16 %v465, %v464
      %v475 = vpack.c.b16 %v467, %v466
      %484 = vmatpush.bf16.msra.mxu0 %v475
      %485 = vmatpush.bf16.msra.mxu0 %v474
      %486 = vmatpush.bf16.msra.mxu0 %v473
      %487 = vmatpush.bf16.msra.mxu0 %v472
      %488 = vmatpush.bf16.msra.mxu0 %v471
      %489 = vmatpush.bf16.msra.mxu0 %v470
      %490 = vmatpush.bf16.msra.mxu0 %v469
      %491 = vmatpush.bf16.msra.mxu0 %v468
      %492 = vmatmul.bf16.gmra.mxu0 %v418
      %v493 = vpop.f32.mrf.mxu0
      %v494 = vadd.f32 0.0, %v493
      %v495 = vpop.f32.mrf.mxu0
      %496 = vdwg.mxu0
      %v497 = vadd.f32 %v416, %v494
      %v498 = vmax.f32 %v497, 0.0
      %v499 = vpack.c.bf16 %v498, %v498
      %vm500 = vcmask 517120
      %vm501 = vsmask.f32 1280
      %vm502 = vmand %vm500, %vm501
      %v503 = vld [vmem:[%s170] sm:$0x3]
      %v504 = vsel %vm502, %v499, %v503
      %505 = vst [vmem:[%s170] sm:$0x3] %v504
      %v506 = vld [vmem:[%s336] sm:$0x3]
      %v507 = vld [vmem:[%s1] sm:$0xf]
      %v508 = vld [vmem:[%s1 + $0x4] sm:$0xf]
      %v509 = vld [vmem:[%s1 + $0x8] sm:$0xf]
      %v510 = vld [vmem:[%s1 + $0xc] sm:$0xf]
      %v511 = vld [vmem:[%s1 + $0x10] sm:$0xf]
      %v512 = vld [vmem:[%s1 + $0x14] sm:$0xf]
      %v513 = vld [vmem:[%s1 + $0x18] sm:$0xf]
      %v514 = vld [vmem:[%s1 + $0x1c] sm:$0xf]
      %v515 = vld [vmem:[%s1 + $0x20] sm:$0xf]
      %v516 = vld [vmem:[%s1 + $0x24] sm:$0xf]
      %v517 = vld [vmem:[%s1 + $0x28] sm:$0xf]
      %v518 = vld [vmem:[%s1 + $0x2c] sm:$0xf]
      %v519 = vld [vmem:[%s1 + $0x30] sm:$0xf]
      %v520 = vld [vmem:[%s1 + $0x34] sm:$0xf]
      %v521 = vld [vmem:[%s1 + $0x38] sm:$0xf]
      %v522 = vld [vmem:[%s1 + $0x3c] sm:$0xf]
      %v539 = vunpack.c.l.b16 %v507
      %v540 = vunpack.c.l.b16 %v508
      %v541 = vunpack.c.l.b16 %v509
      %v542 = vunpack.c.l.b16 %v510
      %v543 = vunpack.c.l.b16 %v511
      %v544 = vunpack.c.l.b16 %v512
      %v545 = vunpack.c.l.b16 %v513
      %v546 = vunpack.c.l.b16 %v514
      %v547 = vunpack.c.l.b16 %v515
      %v548 = vunpack.c.l.b16 %v516
      %v549 = vunpack.c.l.b16 %v517
      %v550 = vunpack.c.l.b16 %v518
      %v551 = vunpack.c.l.b16 %v519
      %v552 = vunpack.c.l.b16 %v520
      %v553 = vunpack.c.l.b16 %v521
      %v554 = vunpack.c.l.b16 %v522
      %v555 = vpack.c.b16 %v540, %v539
      %v556 = vpack.c.b16 %v542, %v541
      %v557 = vpack.c.b16 %v544, %v543
      %v558 = vpack.c.b16 %v546, %v545
      %v559 = vpack.c.b16 %v548, %v547
      %v560 = vpack.c.b16 %v550, %v549
      %v561 = vpack.c.b16 %v552, %v551
      %v562 = vpack.c.b16 %v554, %v553
      %571 = vmatpush.bf16.msra.mxu0 %v562
      %572 = vmatpush.bf16.msra.mxu0 %v561
      %573 = vmatpush.bf16.msra.mxu0 %v560
      %574 = vmatpush.bf16.msra.mxu0 %v559
      %575 = vmatpush.bf16.msra.mxu0 %v558
      %576 = vmatpush.bf16.msra.mxu0 %v557
      %577 = vmatpush.bf16.msra.mxu0 %v556
      %578 = vmatpush.bf16.msra.mxu0 %v555
      %579 = vmatmul.bf16.gmra.mxu0 %v506
      %v580 = vpop.f32.mrf.mxu0
      %v581 = vadd.f32 0.0, %v580
      %v582 = vpop.f32.mrf.mxu0
      %583 = vdwg.mxu0
      %v584 = vadd.f32 %v175, %v581
      %v585 = vld [vmem:[%s417] sm:$0x3]
      %v586 = vld [vmem:[%s257] sm:$0xf]
      %v587 = vld [vmem:[%s257 + $0x4] sm:$0xf]
      %v588 = vld [vmem:[%s257 + $0x8] sm:$0xf]
      %v589 = vld [vmem:[%s257 + $0xc] sm:$0xf]
      %v590 = vld [vmem:[%s257 + $0x10] sm:$0xf]
      %v591 = vld [vmem:[%s257 + $0x14] sm:$0xf]
      %v592 = vld [vmem:[%s257 + $0x18] sm:$0xf]
      %v593 = vld [vmem:[%s257 + $0x1c] sm:$0xf]
      %v594 = vld [vmem:[%s257 + $0x20] sm:$0xf]
      %v595 = vld [vmem:[%s257 + $0x24] sm:$0xf]
      %v596 = vld [vmem:[%s257 + $0x28] sm:$0xf]
      %v597 = vld [vmem:[%s257 + $0x2c] sm:$0xf]
      %v598 = vld [vmem:[%s257 + $0x30] sm:$0xf]
      %v599 = vld [vmem:[%s257 + $0x34] sm:$0xf]
      %v600 = vld [vmem:[%s257 + $0x38] sm:$0xf]
      %v601 = vld [vmem:[%s257 + $0x3c] sm:$0xf]
      %v618 = vunpack.c.l.b16 %v586
      %v619 = vunpack.c.l.b16 %v587
      %v620 = vunpack.c.l.b16 %v588
      %v621 = vunpack.c.l.b16 %v589
      %v622 = vunpack.c.l.b16 %v590
      %v623 = vunpack.c.l.b16 %v591
      %v624 = vunpack.c.l.b16 %v592
      %v625 = vunpack.c.l.b16 %v593
      %v626 = vunpack.c.l.b16 %v594
      %v627 = vunpack.c.l.b16 %v595
      %v628 = vunpack.c.l.b16 %v596
      %v629 = vunpack.c.l.b16 %v597
      %v630 = vunpack.c.l.b16 %v598
      %v631 = vunpack.c.l.b16 %v599
      %v632 = vunpack.c.l.b16 %v600
      %v633 = vunpack.c.l.b16 %v601
      %v634 = vpack.c.b16 %v619, %v618
      %v635 = vpack.c.b16 %v621, %v620
      %v636 = vpack.c.b16 %v623, %v622
      %v637 = vpack.c.b16 %v625, %v624
      %v638 = vpack.c.b16 %v627, %v626
      %v639 = vpack.c.b16 %v629, %v628
      %v640 = vpack.c.b16 %v631, %v630
      %v641 = vpack.c.b16 %v633, %v632
      %650 = vmatpush.bf16.msra.mxu0 %v641
      %651 = vmatpush.bf16.msra.mxu0 %v640
      %652 = vmatpush.bf16.msra.mxu0 %v639
      %653 = vmatpush.bf16.msra.mxu0 %v638
      %654 = vmatpush.bf16.msra.mxu0 %v637
      %655 = vmatpush.bf16.msra.mxu0 %v636
      %656 = vmatpush.bf16.msra.mxu0 %v635
      %657 = vmatpush.bf16.msra.mxu0 %v634
      %658 = vmatmul.bf16.gmra.mxu0 %v585
      %v659 = vpop.f32.mrf.mxu0
      %v660 = vadd.f32 0.0, %v659
      %v661 = vpop.f32.mrf.mxu0
      %662 = vdwg.mxu0
      %v663 = vadd.f32 %v584, %v660
      %s664 = scalar_lea.vmem %s165, 8
      %v665 = vld [vmem:[%s664] sm:$0x3]
      %v666 = vld [vmem:[%s338] sm:$0xf]
      %v667 = vld [vmem:[%s338 + $0x4] sm:$0xf]
      %v668 = vld [vmem:[%s338 + $0x8] sm:$0xf]
      %v669 = vld [vmem:[%s338 + $0xc] sm:$0xf]
      %v670 = vld [vmem:[%s338 + $0x10] sm:$0xf]
      %v671 = vld [vmem:[%s338 + $0x14] sm:$0xf]
      %v672 = vld [vmem:[%s338 + $0x18] sm:$0xf]
      %v673 = vld [vmem:[%s338 + $0x1c] sm:$0xf]
      %v674 = vld [vmem:[%s338 + $0x20] sm:$0xf]
      %v675 = vld [vmem:[%s338 + $0x24] sm:$0xf]
      %v676 = vld [vmem:[%s338 + $0x28] sm:$0xf]
      %v677 = vld [vmem:[%s338 + $0x2c] sm:$0xf]
      %v678 = vld [vmem:[%s338 + $0x30] sm:$0xf]
      %v679 = vld [vmem:[%s338 + $0x34] sm:$0xf]
      %v680 = vld [vmem:[%s338 + $0x38] sm:$0xf]
      %v681 = vld [vmem:[%s338 + $0x3c] sm:$0xf]
      %v698 = vunpack.c.l.b16 %v666
      %v699 = vunpack.c.l.b16 %v667
      %v700 = vunpack.c.l.b16 %v668
      %v701 = vunpack.c.l.b16 %v669
      %v702 = vunpack.c.l.b16 %v670
      %v703 = vunpack.c.l.b16 %v671
      %v704 = vunpack.c.l.b16 %v672
      %v705 = vunpack.c.l.b16 %v673
      %v706 = vunpack.c.l.b16 %v674
      %v707 = vunpack.c.l.b16 %v675
      %v708 = vunpack.c.l.b16 %v676
      %v709 = vunpack.c.l.b16 %v677
      %v710 = vunpack.c.l.b16 %v678
      %v711 = vunpack.c.l.b16 %v679
      %v712 = vunpack.c.l.b16 %v680
      %v713 = vunpack.c.l.b16 %v681
      %v714 = vpack.c.b16 %v699, %v698
      %v715 = vpack.c.b16 %v701, %v700
      %v716 = vpack.c.b16 %v703, %v702
      %v717 = vpack.c.b16 %v705, %v704
      %v718 = vpack.c.b16 %v707, %v706
      %v719 = vpack.c.b16 %v709, %v708
      %v720 = vpack.c.b16 %v711, %v710
      %v721 = vpack.c.b16 %v713, %v712
      %730 = vmatpush.bf16.msra.mxu0 %v721
      %731 = vmatpush.bf16.msra.mxu0 %v720
      %732 = vmatpush.bf16.msra.mxu0 %v719
      %733 = vmatpush.bf16.msra.mxu0 %v718
      %734 = vmatpush.bf16.msra.mxu0 %v717
      %735 = vmatpush.bf16.msra.mxu0 %v716
      %736 = vmatpush.bf16.msra.mxu0 %v715
      %737 = vmatpush.bf16.msra.mxu0 %v714
      %738 = vmatmul.bf16.gmra.mxu0 %v665
      %v739 = vpop.f32.mrf.mxu0
      %v740 = vadd.f32 0.0, %v739
      %v741 = vpop.f32.mrf.mxu0
      %742 = vdwg.mxu0
      %v743 = vadd.f32 %v663, %v740
      %s744 = scalar_lea.vmem %s165, 10
      %v745 = vld [vmem:[%s744] sm:$0x3]
      %v746 = vld [vmem:[%s419] sm:$0xf]
      %v747 = vld [vmem:[%s419 + $0x4] sm:$0xf]
      %v748 = vld [vmem:[%s419 + $0x8] sm:$0xf]
      %v749 = vld [vmem:[%s419 + $0xc] sm:$0xf]
      %v750 = vld [vmem:[%s419 + $0x10] sm:$0xf]
      %v751 = vld [vmem:[%s419 + $0x14] sm:$0xf]
      %v752 = vld [vmem:[%s419 + $0x18] sm:$0xf]
      %v753 = vld [vmem:[%s419 + $0x1c] sm:$0xf]
      %v754 = vld [vmem:[%s419 + $0x20] sm:$0xf]
      %v755 = vld [vmem:[%s419 + $0x24] sm:$0xf]
      %v756 = vld [vmem:[%s419 + $0x28] sm:$0xf]
      %v757 = vld [vmem:[%s419 + $0x2c] sm:$0xf]
      %v758 = vld [vmem:[%s419 + $0x30] sm:$0xf]
      %v759 = vld [vmem:[%s419 + $0x34] sm:$0xf]
      %v760 = vld [vmem:[%s419 + $0x38] sm:$0xf]
      %v761 = vld [vmem:[%s419 + $0x3c] sm:$0xf]
      %v778 = vunpack.c.l.b16 %v746
      %v779 = vunpack.c.l.b16 %v747
      %v780 = vunpack.c.l.b16 %v748
      %v781 = vunpack.c.l.b16 %v749
      %v782 = vunpack.c.l.b16 %v750
      %v783 = vunpack.c.l.b16 %v751
      %v784 = vunpack.c.l.b16 %v752
      %v785 = vunpack.c.l.b16 %v753
      %v786 = vunpack.c.l.b16 %v754
      %v787 = vunpack.c.l.b16 %v755
      %v788 = vunpack.c.l.b16 %v756
      %v789 = vunpack.c.l.b16 %v757
      %v790 = vunpack.c.l.b16 %v758
      %v791 = vunpack.c.l.b16 %v759
      %v792 = vunpack.c.l.b16 %v760
      %v793 = vunpack.c.l.b16 %v761
      %v794 = vpack.c.b16 %v779, %v778
      %v795 = vpack.c.b16 %v781, %v780
      %v796 = vpack.c.b16 %v783, %v782
      %v797 = vpack.c.b16 %v785, %v784
      %v798 = vpack.c.b16 %v787, %v786
      %v799 = vpack.c.b16 %v789, %v788
      %v800 = vpack.c.b16 %v791, %v790
      %v801 = vpack.c.b16 %v793, %v792
      %810 = vmatpush.bf16.msra.mxu0 %v801
      %811 = vmatpush.bf16.msra.mxu0 %v800
      %812 = vmatpush.bf16.msra.mxu0 %v799
      %813 = vmatpush.bf16.msra.mxu0 %v798
      %814 = vmatpush.bf16.msra.mxu0 %v797
      %815 = vmatpush.bf16.msra.mxu0 %v796
      %816 = vmatpush.bf16.msra.mxu0 %v795
      %817 = vmatpush.bf16.msra.mxu0 %v794
      %818 = vmatmul.bf16.gmra.mxu0 %v745
      %v819 = vpop.f32.mrf.mxu0
      %v820 = vadd.f32 0.0, %v819
      %v821 = vpop.f32.mrf.mxu0
      %822 = vdwg.mxu0
      %v823 = vadd.f32 %v743, %v820
      %v824 = vmax.f32 %v823, 0.0
      %v825 = vpack.c.bf16 %v824, %v824
      %s826 = scalar_lea.vmem %s170, 2
      %v827 = vld [vmem:[%s826] sm:$0x3]
      %v828 = vsel %vm502, %v825, %v827
      %829 = vst [vmem:[%s826] sm:$0x3] %v828
      %v830 = vld [vmem:[%s664] sm:$0x3]
      %v831 = vld [vmem:[%s1] sm:$0xf]
      %v832 = vld [vmem:[%s1 + $0x4] sm:$0xf]
      %v833 = vld [vmem:[%s1 + $0x8] sm:$0xf]
      %v834 = vld [vmem:[%s1 + $0xc] sm:$0xf]
      %v835 = vld [vmem:[%s1 + $0x10] sm:$0xf]
      %v836 = vld [vmem:[%s1 + $0x14] sm:$0xf]
      %v837 = vld [vmem:[%s1 + $0x18] sm:$0xf]
      %v838 = vld [vmem:[%s1 + $0x1c] sm:$0xf]
      %v839 = vld [vmem:[%s1 + $0x20] sm:$0xf]
      %v840 = vld [vmem:[%s1 + $0x24] sm:$0xf]
      %v841 = vld [vmem:[%s1 + $0x28] sm:$0xf]
      %v842 = vld [vmem:[%s1 + $0x2c] sm:$0xf]
      %v843 = vld [vmem:[%s1 + $0x30] sm:$0xf]
      %v844 = vld [vmem:[%s1 + $0x34] sm:$0xf]
      %v845 = vld [vmem:[%s1 + $0x38] sm:$0xf]
      %v846 = vld [vmem:[%s1 + $0x3c] sm:$0xf]
      %v863 = vunpack.c.l.b16 %v831
      %v864 = vunpack.c.l.b16 %v832
      %v865 = vunpack.c.l.b16 %v833
      %v866 = vunpack.c.l.b16 %v834
      %v867 = vunpack.c.l.b16 %v835
      %v868 = vunpack.c.l.b16 %v836
      %v869 = vunpack.c.l.b16 %v837
      %v870 = vunpack.c.l.b16 %v838
      %v871 = vunpack.c.l.b16 %v839
      %v872 = vunpack.c.l.b16 %v840
      %v873 = vunpack.c.l.b16 %v841
      %v874 = vunpack.c.l.b16 %v842
      %v875 = vunpack.c.l.b16 %v843
      %v876 = vunpack.c.l.b16 %v844
      %v877 = vunpack.c.l.b16 %v845
      %v878 = vunpack.c.l.b16 %v846
      %v879 = vpack.c.b16 %v864, %v863
      %v880 = vpack.c.b16 %v866, %v865
      %v881 = vpack.c.b16 %v868, %v867
      %v882 = vpack.c.b16 %v870, %v869
      %v883 = vpack.c.b16 %v872, %v871
      %v884 = vpack.c.b16 %v874, %v873
      %v885 = vpack.c.b16 %v876, %v875
      %v886 = vpack.c.b16 %v878, %v877
      %895 = vmatpush.bf16.msra.mxu0 %v886
      %896 = vmatpush.bf16.msra.mxu0 %v885
      %897 = vmatpush.bf16.msra.mxu0 %v884
      %898 = vmatpush.bf16.msra.mxu0 %v883
      %899 = vmatpush.bf16.msra.mxu0 %v882
      %900 = vmatpush.bf16.msra.mxu0 %v881
      %901 = vmatpush.bf16.msra.mxu0 %v880
      %902 = vmatpush.bf16.msra.mxu0 %v879
      %903 = vmatmul.bf16.gmra.mxu0 %v830
      %v904 = vpop.f32.mrf.mxu0
      %v905 = vadd.f32 0.0, %v904
      %v906 = vpop.f32.mrf.mxu0
      %907 = vdwg.mxu0
      %v908 = vadd.f32 %v175, %v905
      %v909 = vld [vmem:[%s744] sm:$0x3]
      %v910 = vld [vmem:[%s257] sm:$0xf]
      %v911 = vld [vmem:[%s257 + $0x4] sm:$0xf]
      %v912 = vld [vmem:[%s257 + $0x8] sm:$0xf]
      %v913 = vld [vmem:[%s257 + $0xc] sm:$0xf]
      %v914 = vld [vmem:[%s257 + $0x10] sm:$0xf]
      %v915 = vld [vmem:[%s257 + $0x14] sm:$0xf]
      %v916 = vld [vmem:[%s257 + $0x18] sm:$0xf]
      %v917 = vld [vmem:[%s257 + $0x1c] sm:$0xf]
      %v918 = vld [vmem:[%s257 + $0x20] sm:$0xf]
      %v919 = vld [vmem:[%s257 + $0x24] sm:$0xf]
      %v920 = vld [vmem:[%s257 + $0x28] sm:$0xf]
      %v921 = vld [vmem:[%s257 + $0x2c] sm:$0xf]
      %v922 = vld [vmem:[%s257 + $0x30] sm:$0xf]
      %v923 = vld [vmem:[%s257 + $0x34] sm:$0xf]
      %v924 = vld [vmem:[%s257 + $0x38] sm:$0xf]
      %v925 = vld [vmem:[%s257 + $0x3c] sm:$0xf]
      %v942 = vunpack.c.l.b16 %v910
      %v943 = vunpack.c.l.b16 %v911
      %v944 = vunpack.c.l.b16 %v912
      %v945 = vunpack.c.l.b16 %v913
      %v946 = vunpack.c.l.b16 %v914
      %v947 = vunpack.c.l.b16 %v915
      %v948 = vunpack.c.l.b16 %v916
      %v949 = vunpack.c.l.b16 %v917
      %v950 = vunpack.c.l.b16 %v918
      %v951 = vunpack.c.l.b16 %v919
      %v952 = vunpack.c.l.b16 %v920
      %v953 = vunpack.c.l.b16 %v921
      %v954 = vunpack.c.l.b16 %v922
      %v955 = vunpack.c.l.b16 %v923
      %v956 = vunpack.c.l.b16 %v924
      %v957 = vunpack.c.l.b16 %v925
      %v958 = vpack.c.b16 %v943, %v942
      %v959 = vpack.c.b16 %v945, %v944
      %v960 = vpack.c.b16 %v947, %v946
      %v961 = vpack.c.b16 %v949, %v948
      %v962 = vpack.c.b16 %v951, %v950
      %v963 = vpack.c.b16 %v953, %v952
      %v964 = vpack.c.b16 %v955, %v954
      %v965 = vpack.c.b16 %v957, %v956
      %974 = vmatpush.bf16.msra.mxu0 %v965
      %975 = vmatpush.bf16.msra.mxu0 %v964
      %976 = vmatpush.bf16.msra.mxu0 %v963
      %977 = vmatpush.bf16.msra.mxu0 %v962
      %978 = vmatpush.bf16.msra.mxu0 %v961
      %979 = vmatpush.bf16.msra.mxu0 %v960
      %980 = vmatpush.bf16.msra.mxu0 %v959
      %981 = vmatpush.bf16.msra.mxu0 %v958
      %982 = vmatmul.bf16.gmra.mxu0 %v909
      %v983 = vpop.f32.mrf.mxu0
      %v984 = vadd.f32 0.0, %v983
      %v985 = vpop.f32.mrf.mxu0
      %986 = vdwg.mxu0
      %v987 = vadd.f32 %v908, %v984
      %s988 = scalar_lea.vmem %s165, 12
      %v989 = vld [vmem:[%s988] sm:$0x3]
      %v990 = vld [vmem:[%s338] sm:$0xf]
      %v991 = vld [vmem:[%s338 + $0x4] sm:$0xf]
      %v992 = vld [vmem:[%s338 + $0x8] sm:$0xf]
      %v993 = vld [vmem:[%s338 + $0xc] sm:$0xf]
      %v994 = vld [vmem:[%s338 + $0x10] sm:$0xf]
      %v995 = vld [vmem:[%s338 + $0x14] sm:$0xf]
      %v996 = vld [vmem:[%s338 + $0x18] sm:$0xf]
      %v997 = vld [vmem:[%s338 + $0x1c] sm:$0xf]
      %v998 = vld [vmem:[%s338 + $0x20] sm:$0xf]
      %v999 = vld [vmem:[%s338 + $0x24] sm:$0xf]
      %v1000 = vld [vmem:[%s338 + $0x28] sm:$0xf]
      %v1001 = vld [vmem:[%s338 + $0x2c] sm:$0xf]
      %v1002 = vld [vmem:[%s338 + $0x30] sm:$0xf]
      %v1003 = vld [vmem:[%s338 + $0x34] sm:$0xf]
      %v1004 = vld [vmem:[%s338 + $0x38] sm:$0xf]
      %v1005 = vld [vmem:[%s338 + $0x3c] sm:$0xf]
      %v1022 = vunpack.c.l.b16 %v990
      %v1023 = vunpack.c.l.b16 %v991
      %v1024 = vunpack.c.l.b16 %v992
      %v1025 = vunpack.c.l.b16 %v993
      %v1026 = vunpack.c.l.b16 %v994
      %v1027 = vunpack.c.l.b16 %v995
      %v1028 = vunpack.c.l.b16 %v996
      %v1029 = vunpack.c.l.b16 %v997
      %v1030 = vunpack.c.l.b16 %v998
      %v1031 = vunpack.c.l.b16 %v999
      %v1032 = vunpack.c.l.b16 %v1000
      %v1033 = vunpack.c.l.b16 %v1001
      %v1034 = vunpack.c.l.b16 %v1002
      %v1035 = vunpack.c.l.b16 %v1003
      %v1036 = vunpack.c.l.b16 %v1004
      %v1037 = vunpack.c.l.b16 %v1005
      %v1038 = vpack.c.b16 %v1023, %v1022
      %v1039 = vpack.c.b16 %v1025, %v1024
      %v1040 = vpack.c.b16 %v1027, %v1026
      %v1041 = vpack.c.b16 %v1029, %v1028
      %v1042 = vpack.c.b16 %v1031, %v1030
      %v1043 = vpack.c.b16 %v1033, %v1032
      %v1044 = vpack.c.b16 %v1035, %v1034
      %v1045 = vpack.c.b16 %v1037, %v1036
      %1054 = vmatpush.bf16.msra.mxu0 %v1045
      %1055 = vmatpush.bf16.msra.mxu0 %v1044
      %1056 = vmatpush.bf16.msra.mxu0 %v1043
      %1057 = vmatpush.bf16.msra.mxu0 %v1042
      %1058 = vmatpush.bf16.msra.mxu0 %v1041
      %1059 = vmatpush.bf16.msra.mxu0 %v1040
      %1060 = vmatpush.bf16.msra.mxu0 %v1039
      %1061 = vmatpush.bf16.msra.mxu0 %v1038
      %1062 = vmatmul.bf16.gmra.mxu0 %v989
      %v1063 = vpop.f32.mrf.mxu0
      %v1064 = vadd.f32 0.0, %v1063
      %v1065 = vpop.f32.mrf.mxu0
      %1066 = vdwg.mxu0
      %v1067 = vadd.f32 %v987, %v1064
      %s1068 = scalar_lea.vmem %s165, 14
      %v1069 = vld [vmem:[%s1068] sm:$0x3]
      %v1070 = vld [vmem:[%s419] sm:$0xf]
      %v1071 = vld [vmem:[%s419 + $0x4] sm:$0xf]
      %v1072 = vld [vmem:[%s419 + $0x8] sm:$0xf]
      %v1073 = vld [vmem:[%s419 + $0xc] sm:$0xf]
      %v1074 = vld [vmem:[%s419 + $0x10] sm:$0xf]
      %v1075 = vld [vmem:[%s419 + $0x14] sm:$0xf]
      %v1076 = vld [vmem:[%s419 + $0x18] sm:$0xf]
      %v1077 = vld [vmem:[%s419 + $0x1c] sm:$0xf]
      %v1078 = vld [vmem:[%s419 + $0x20] sm:$0xf]
      %v1079 = vld [vmem:[%s419 + $0x24] sm:$0xf]
      %v1080 = vld [vmem:[%s419 + $0x28] sm:$0xf]
      %v1081 = vld [vmem:[%s419 + $0x2c] sm:$0xf]
      %v1082 = vld [vmem:[%s419 + $0x30] sm:$0xf]
      %v1083 = vld [vmem:[%s419 + $0x34] sm:$0xf]
      %v1084 = vld [vmem:[%s419 + $0x38] sm:$0xf]
      %v1085 = vld [vmem:[%s419 + $0x3c] sm:$0xf]
      %v1102 = vunpack.c.l.b16 %v1070
      %v1103 = vunpack.c.l.b16 %v1071
      %v1104 = vunpack.c.l.b16 %v1072
      %v1105 = vunpack.c.l.b16 %v1073
      %v1106 = vunpack.c.l.b16 %v1074
      %v1107 = vunpack.c.l.b16 %v1075
      %v1108 = vunpack.c.l.b16 %v1076
      %v1109 = vunpack.c.l.b16 %v1077
      %v1110 = vunpack.c.l.b16 %v1078
      %v1111 = vunpack.c.l.b16 %v1079
      %v1112 = vunpack.c.l.b16 %v1080
      %v1113 = vunpack.c.l.b16 %v1081
      %v1114 = vunpack.c.l.b16 %v1082
      %v1115 = vunpack.c.l.b16 %v1083
      %v1116 = vunpack.c.l.b16 %v1084
      %v1117 = vunpack.c.l.b16 %v1085
      %v1118 = vpack.c.b16 %v1103, %v1102
      %v1119 = vpack.c.b16 %v1105, %v1104
      %v1120 = vpack.c.b16 %v1107, %v1106
      %v1121 = vpack.c.b16 %v1109, %v1108
      %v1122 = vpack.c.b16 %v1111, %v1110
      %v1123 = vpack.c.b16 %v1113, %v1112
      %v1124 = vpack.c.b16 %v1115, %v1114
      %v1125 = vpack.c.b16 %v1117, %v1116
      %1134 = vmatpush.bf16.msra.mxu0 %v1125
      %1135 = vmatpush.bf16.msra.mxu0 %v1124
      %1136 = vmatpush.bf16.msra.mxu0 %v1123
      %1137 = vmatpush.bf16.msra.mxu0 %v1122
      %1138 = vmatpush.bf16.msra.mxu0 %v1121
      %1139 = vmatpush.bf16.msra.mxu0 %v1120
      %1140 = vmatpush.bf16.msra.mxu0 %v1119
      %1141 = vmatpush.bf16.msra.mxu0 %v1118
      %1142 = vmatmul.bf16.gmra.mxu0 %v1069
      %v1143 = vpop.f32.mrf.mxu0
      %v1144 = vadd.f32 0.0, %v1143
      %v1145 = vpop.f32.mrf.mxu0
      %1146 = vdwg.mxu0
      %v1147 = vadd.f32 %v1067, %v1144
      %v1148 = vmax.f32 %v1147, 0.0
      %v1149 = vpack.c.bf16 %v1148, %v1148
      %s1150 = scalar_lea.vmem %s170, 4
      %v1151 = vld [vmem:[%s1150] sm:$0x3]
      %v1152 = vsel %vm502, %v1149, %v1151
      %1153 = vst [vmem:[%s1150] sm:$0x3] %v1152
      %p1154 = scmp.lt.s32.totalorder %s14, 1
      %s1155 = scalar_select %p1154, %s14, 1
      %s1156 = smul.addr %s1155, 3
      %s1157 = smul.addr %s1156, 2
      %s1158 = scalar_lea.vmem %s3, %s1157
      // Predicated region
      $region33: #{feature_extractor.4} parent=31 // pred_check
        %p1159 = pneg %p100
      $region34: #{feature_extractor.4} parent=31 // pred_check_branch
        %1161 = sbr.rel (%p1159) target = $region36
      $region35: #{feature_extractor.4} parent=31 // pred_region
        _
      $region36: #{feature_extractor.4} parent=31 // pred_fallthru
        _
    $region32: #{feature_extractor.4} parent=5 // pred_fallthru
      _
    %p1162 = scmp.le.s32.totalorder 2, %s9
    // Predicated region
    $region37: #{feature_extractor.4} parent=5 // pred_check
      %p1163 = pneg %p1162
    $region38: #{feature_extractor.4} parent=5 // pred_check_branch
      %1165 = sbr.rel (%p1163) target = $region40
    $region39: #{feature_extractor.4} parent=5 // pred_region
      %s1166 = ssub.s32 %s9, 2
      // Predicated region
      $region41: #{feature_extractor.4} parent=39 // pred_check
        %p1167 = pneg %p106
      $region42: #{feature_extractor.4} parent=39 // pred_check_branch
        %1169 = sbr.rel (%p1167) target = $region44
      $region43: #{feature_extractor.4} parent=39 // pred_region
        %p1170 = scmp.lt.s32.totalorder %s15, 1
        %s1171 = scalar_select %p1170, %s15, 1
        %s1172 = smul.addr %s1171, 3
        %s1173 = smul.addr %s1172, 2
        %s1174 = scalar_lea.vmem %s3, %s1173
      $region44: #{feature_extractor.4} parent=39 // pred_fallthru
        _
    $region40: #{feature_extractor.4} parent=5 // pred_fallthru
      _
  $region6: #{feature_extractor.4} parent=0 // loop_footer
    %s13 = sadd.s32 1, %s9
  $region7: #{feature_extractor.4} parent=0 // loop_footer_branch
    %8 = sbr.rel target = $region3
  $region8: #{feature_extractor.4} parent=0 // loop_exit
    _

// kernel: feature_extractor.5
$region0: #{feature_extractor.5}
  #allocation0 [shape = 'u32[]', space=smem, size = 0x4, offset = 0x4, fixed_abs, tag = 'smem constant byte address 0x4 - core index']
  #allocation1 [shape = 'u32[72,128]{1,0:T(1,128)}', space=vmem, size = 0x9000, scoped, tag = 'internal scratch']
  %s0 = inlined_call_operand.vmem [shape: bf16[2,3,1,192], index: 0, kind: input, shape index: {}]
  %s1 = inlined_call_operand.vmem [shape: bf16[3,192,64], index: 1, kind: input, shape index: {}]
  %s2 = inlined_call_operand.vmem [shape: f32[1,64], index: 2, kind: input, shape index: {}]
  %s3 = inlined_call_operand.vmem [shape: bf16[2,1,1,64], index: 3, kind: output, shape index: {}]
  %s4 = sld [smem:[#allocation0]]
  $region45: #{feature_extractor.5} parent=0
    _
  %s6 = ssub.s32 1, %s4
  %s7 = scalar_select 0, %s6, %s4
  loop: start=0, step=1, limit=4
  $region2: #{feature_extractor.5} parent=0 // loop_pre_header
    _
  $region3: #{feature_extractor.5} parent=0 // loop_header
    %s9 = sphi 0, %s13
    %p10 = scmp.ge.s32.totalorder %s9, 4
    %s19 = sphi 0, %s21
    %s22 = sphi 0, %s19
    %s23 = sphi 0, %s22
    %s39 = sphi 0, %s23
    %s43 = sphi 0, %s43
    %s45 = sphi 0, %s43
    %s46 = sphi 0, %s45
    %s60 = sphi 0, %s46
    %s64 = sphi 0, %s64
    %s66 = sphi 0, %s64
    %s67 = sphi 0, %s66
    %s81 = sphi 0, %s67
    %s87 = sphi 0, %s89
    %s90 = sphi 0, %s87
    %s91 = sphi 0, %s90
    %s107 = sphi 0, %s91
  $region4: #{feature_extractor.5} parent=0 // loop_header_branch
    %12 = sbr.rel (%p10) target = $region8
  $region5: #{feature_extractor.5} parent=0 // loop_body
    %s14 = ssub.s32 %s9, 1
    %s15 = ssub.s32 %s9, 2
    %s16 = sadd.s32 %s9, 1
    %s17 = ssub.s32 %s9, %s16
    %p18 = scmp.eq.s32.totalorder %s17, 0
    %s20 = sadd.s32 %s19, 1
    %s21 = scalar_select %p18, %s19, %s20
    %p24 = pneg %p18
    %p25 = scmp.eq.s32.totalorder %s9, 1
    %p26 = por %p24, %p25
    %p27 = scmp.ne.s32.totalorder %s19, %s22
    %p28 = scmp.eq.s32.totalorder %s9, 0
    %p29 = por %p27, %p28
    %p30 = scmp.ne.s32.totalorder %s19, %s22
    %p31 = scmp.eq.s32.totalorder %s14, 1
    %p32 = por %p30, %p31
    %p33 = scmp.ne.s32.totalorder %s22, %s23
    %p34 = scmp.eq.s32.totalorder %s14, 0
    %p35 = por %p33, %p34
    %p36 = scmp.ne.s32.totalorder %s22, %s23
    %p37 = scmp.eq.s32.totalorder %s15, 1
    %p38 = por %p36, %p37
    %p40 = scmp.ne.s32.totalorder %s23, %s39
    %p41 = scmp.eq.s32.totalorder %s15, 0
    %p42 = por %p40, %p41
    %s44 = sadd.s32 %s43, 1
    %p47 = scmp.eq.s32.totalorder %s9, 1
    %p48 = scmp.ne.s32.totalorder %s43, %s45
    %p49 = scmp.eq.s32.totalorder %s9, 0
    %p50 = por %p48, %p49
    %p51 = scmp.ne.s32.totalorder %s43, %s45
    %p52 = scmp.eq.s32.totalorder %s14, 1
    %p53 = por %p51, %p52
    %p54 = scmp.ne.s32.totalorder %s45, %s46
    %p55 = scmp.eq.s32.totalorder %s14, 0
    %p56 = por %p54, %p55
    %p57 = scmp.ne.s32.totalorder %s45, %s46
    %p58 = scmp.eq.s32.totalorder %s15, 1
    %p59 = por %p57, %p58
    %p61 = scmp.ne.s32.totalorder %s46, %s60
    %p62 = scmp.eq.s32.totalorder %s15, 0
    %p63 = por %p61, %p62
    %s65 = sadd.s32 %s64, 1
    %p68 = scmp.eq.s32.totalorder %s9, 1
    %p69 = scmp.ne.s32.totalorder %s64, %s66
    %p70 = scmp.eq.s32.totalorder %s9, 0
    %p71 = por %p69, %p70
    %p72 = scmp.ne.s32.totalorder %s64, %s66
    %p73 = scmp.eq.s32.totalorder %s14, 1
    %p74 = por %p72, %p73
    %p75 = scmp.ne.s32.totalorder %s66, %s67
    %p76 = scmp.eq.s32.totalorder %s14, 0
    %p77 = por %p75, %p76
    %p78 = scmp.ne.s32.totalorder %s66, %s67
    %p79 = scmp.eq.s32.totalorder %s15, 1
    %p80 = por %p78, %p79
    %p82 = scmp.ne.s32.totalorder %s67, %s81
    %p83 = scmp.eq.s32.totalorder %s15, 0
    %p84 = por %p82, %p83
    %s85 = ssub.s32 %s9, %s16
    %p86 = scmp.eq.s32.totalorder %s85, 0
    %s88 = sadd.s32 %s87, 1
    %s89 = scalar_select %p86, %s87, %s88
    %p92 = pneg %p86
    %p93 = scmp.eq.s32.totalorder %s9, 1
    %p94 = por %p92, %p93
    %p95 = scmp.ne.s32.totalorder %s87, %s90
    %p96 = scmp.eq.s32.totalorder %s9, 0
    %p97 = por %p95, %p96
    %p98 = scmp.ne.s32.totalorder %s87, %s90
    %p99 = scmp.eq.s32.totalorder %s14, 1
    %p100 = por %p98, %p99
    %p101 = scmp.ne.s32.totalorder %s90, %s91
    %p102 = scmp.eq.s32.totalorder %s14, 0
    %p103 = por %p101, %p102
    %p104 = scmp.ne.s32.totalorder %s90, %s91
    %p105 = scmp.eq.s32.totalorder %s15, 1
    %p106 = por %p104, %p105
    %p108 = scmp.ne.s32.totalorder %s91, %s107
    %p109 = scmp.eq.s32.totalorder %s15, 0
    %p110 = por %p108, %p109
    %p111 = scmp.le.s32.totalorder 1, %s9
    %p112 = scmp.lt.s32.totalorder %s9, 3
    %p113 = pnand %p111, %p112
    %p114 = pneg %p113
    // Predicated region
    $region9: #{feature_extractor.5} parent=5 // pred_check
      _
    $region10: #{feature_extractor.5} parent=5 // pred_check_branch
      %116 = sbr.rel (%p113) target = $region12
    $region11: #{feature_extractor.5} parent=5 // pred_region
      %s117 = ssub.s32 %s9, 1
      // Predicated region
      $region13: #{feature_extractor.5} parent=11 // pred_check
        %p118 = pneg %p56
      $region14: #{feature_extractor.5} parent=11 // pred_check_branch
        %120 = sbr.rel (%p118) target = $region16
      $region15: #{feature_extractor.5} parent=11 // pred_region
        _
      $region16: #{feature_extractor.5} parent=11 // pred_fallthru
        _
      // Predicated region
      $region17: #{feature_extractor.5} parent=11 // pred_check
        %p121 = pneg %p77
      $region18: #{feature_extractor.5} parent=11 // pred_check_branch
        %123 = sbr.rel (%p121) target = $region20
      $region19: #{feature_extractor.5} parent=11 // pred_region
        _
      $region20: #{feature_extractor.5} parent=11 // pred_fallthru
        _
    $region12: #{feature_extractor.5} parent=5 // pred_fallthru
      _
    %p124 = scmp.lt.s32.totalorder %s9, 2
    // Predicated region
    $region21: #{feature_extractor.5} parent=5 // pred_check
      %p125 = pneg %p124
    $region22: #{feature_extractor.5} parent=5 // pred_check_branch
      %127 = sbr.rel (%p125) target = $region24
    $region23: #{feature_extractor.5} parent=5 // pred_region
      // Predicated region
      $region25: #{feature_extractor.5} parent=23 // pred_check
        %p128 = pneg %p29
      $region26: #{feature_extractor.5} parent=23 // pred_check_branch
        %130 = sbr.rel (%p128) target = $region28
      $region27: #{feature_extractor.5} parent=23 // pred_region
        %p131 = scmp.lt.s32.totalorder %s9, 1
        %s132 = scalar_select %p131, %s9, 1
        %s133 = smul.addr %s132, 6
        %s134 = scalar_lea.vmem %s0, %s133
      $region28: #{feature_extractor.5} parent=23 // pred_fallthru
        _
    $region24: #{feature_extractor.5} parent=5 // pred_fallthru
      _
    %p135 = scmp.le.s32.totalorder 1, %s9
    %p136 = scmp.lt.s32.totalorder %s9, 3
    %p137 = pnand %p135, %p136
    %p138 = pneg %p137
    // Predicated region
    $region29: #{feature_extractor.5} parent=5 // pred_check
      _
    $region30: #{feature_extractor.5} parent=5 // pred_check_branch
      %140 = sbr.rel (%p137) target = $region32
    $region31: #{feature_extractor.5} parent=5 // pred_region
      %s141 = ssub.s32 %s9, 1
      %p142 = scmp.lt.s32.totalorder %s14, 1
      %s143 = scalar_select %p142, %s14, 1
      %s144 = smul.addr %s143, 6
      %s145 = scalar_lea.vmem %s0, %s144
      %p146 = pneg %p35
      %p147 = pneg %p32
      %p148 = pneg %p56
      %p149 = pneg %p53
      %p150 = pneg %p77
      %p151 = pneg %p74
      %p152 = pneg %p103
      %p153 = pneg %p100
      %p154 = scmp.lt.s32.totalorder %s14, 1
      %s155 = scalar_select %p154, %s14, 1
      %s156 = scalar_lea.vmem %s3, %s155
      %p157 = scmp.lt.s32.totalorder %s14, 1
      %s158 = scalar_select %p157, %s14, 1
      %s159 = smul.addr %s158, 6
      %s160 = scalar_lea.vmem %s0, %s159
      %p161 = scmp.lt.s32.totalorder %s14, 1
      %s162 = scalar_select %p161, %s14, 1
      %s163 = scalar_lea.vmem %s3, %s162
      %v165 = vld [vmem:[%s2] sm:$0x1]
      %v166 = vadd.f32 %v165, 0.0
      %v167 = vld [vmem:[%s160] sm:$0x3]
      %v168 = vld [vmem:[%s1] sm:$0xf]
      %v169 = vld [vmem:[%s1 + $0x4] sm:$0xf]
      %v170 = vld [vmem:[%s1 + $0x8] sm:$0xf]
      %v171 = vld [vmem:[%s1 + $0xc] sm:$0xf]
      %v172 = vld [vmem:[%s1 + $0x10] sm:$0xf]
      %v173 = vld [vmem:[%s1 + $0x14] sm:$0xf]
      %v174 = vld [vmem:[%s1 + $0x18] sm:$0xf]
      %v175 = vld [vmem:[%s1 + $0x1c] sm:$0xf]
      %v176 = vld [vmem:[%s1 + $0x20] sm:$0xf]
      %v177 = vld [vmem:[%s1 + $0x24] sm:$0xf]
      %v178 = vld [vmem:[%s1 + $0x28] sm:$0xf]
      %v179 = vld [vmem:[%s1 + $0x2c] sm:$0xf]
      %v180 = vld [vmem:[%s1 + $0x30] sm:$0xf]
      %v181 = vld [vmem:[%s1 + $0x34] sm:$0xf]
      %v182 = vld [vmem:[%s1 + $0x38] sm:$0xf]
      %v183 = vld [vmem:[%s1 + $0x3c] sm:$0xf]
      %v184 = vld [vmem:[%s1 + $0x40] sm:$0xf]
      %v185 = vld [vmem:[%s1 + $0x44] sm:$0xf]
      %v186 = vld [vmem:[%s1 + $0x48] sm:$0xf]
      %v187 = vld [vmem:[%s1 + $0x4c] sm:$0xf]
      %v188 = vld [vmem:[%s1 + $0x50] sm:$0xf]
      %v189 = vld [vmem:[%s1 + $0x54] sm:$0xf]
      %v190 = vld [vmem:[%s1 + $0x58] sm:$0xf]
      %v191 = vld [vmem:[%s1 + $0x5c] sm:$0xf]
      %193 = vst [vmem:[#allocation1] ss:$9 sm:$0xff] %v167
      %v194 = vld [vmem:[#allocation1] sm:$0xff]
      %v195 = vld [vmem:[#allocation1 + $0x9] sm:$0xff]
      %v221 = vunpack.c.l.b16 %v168
      %v222 = vunpack.c.l.b16 %v169
      %v223 = vunpack.c.l.b16 %v170
      %v224 = vunpack.c.l.b16 %v171
      %v225 = vunpack.c.l.b16 %v172
      %v226 = vunpack.c.l.b16 %v173
      %v227 = vunpack.c.l.b16 %v174
      %v228 = vunpack.c.l.b16 %v175
      %v229 = vunpack.c.l.b16 %v176
      %v230 = vunpack.c.l.b16 %v177
      %v231 = vunpack.c.l.b16 %v178
      %v232 = vunpack.c.l.b16 %v179
      %v233 = vunpack.c.l.b16 %v180
      %v234 = vunpack.c.l.b16 %v181
      %v235 = vunpack.c.l.b16 %v182
      %v236 = vunpack.c.l.b16 %v183
      %v237 = vunpack.c.l.b16 %v184
      %v238 = vunpack.c.l.b16 %v185
      %v239 = vunpack.c.l.b16 %v186
      %v240 = vunpack.c.l.b16 %v187
      %v241 = vunpack.c.l.b16 %v188
      %v242 = vunpack.c.l.b16 %v189
      %v243 = vunpack.c.l.b16 %v190
      %v244 = vunpack.c.l.b16 %v191
      %v245 = vpack.c.b16 %v222, %v221
      %v246 = vpack.c.b16 %v224, %v223
      %v247 = vpack.c.b16 %v226, %v225
      %v248 = vpack.c.b16 %v228, %v227
      %v249 = vpack.c.b16 %v230, %v229
      %v250 = vpack.c.b16 %v232, %v231
      %v251 = vpack.c.b16 %v234, %v233
      %v252 = vpack.c.b16 %v236, %v235
      %v253 = vpack.c.b16 %v238, %v237
      %v254 = vpack.c.b16 %v240, %v239
      %v255 = vpack.c.b16 %v242, %v241
      %v256 = vpack.c.b16 %v244, %v243
      %vm269 = vcmask 523264
      %v270 = vsel %vm269, %v195, 0
      %272 = vmatpush.bf16.msra.mxu0 %v252
      %273 = vmatpush.bf16.msra.mxu0 %v251
      %274 = vmatpush.bf16.msra.mxu0 %v250
      %275 = vmatpush.bf16.msra.mxu0 %v249
      %276 = vmatpush.bf16.msra.mxu0 %v248
      %277 = vmatpush.bf16.msra.mxu0 %v247
      %278 = vmatpush.bf16.msra.mxu0 %v246
      %279 = vmatpush.bf16.msra.mxu0 %v245
      %280 = vmatmul.bf16.gmra.mxu0 %v194
      %v281 = vpop.f32.mrf.mxu0
      %v282 = vadd.f32 0.0, %v281
      %v283 = vpop.f32.mrf.mxu0
      %284 = vdwg.mxu0
      %285 = vmatpush.bf16.msra.mxu0 0
      %286 = vmatpush.bf16.msra.mxu0 0
      %287 = vmatpush.bf16.msra.mxu0 0
      %288 = vmatpush.bf16.msra.mxu0 0
      %289 = vmatpush.bf16.msra.mxu0 %v256
      %290 = vmatpush.bf16.msra.mxu0 %v255
      %291 = vmatpush.bf16.msra.mxu0 %v254
      %292 = vmatpush.bf16.msra.mxu0 %v253
      %293 = vmatmul.bf16.gmra.mxu0 %v270
      %v294 = vpop.f32.mrf.mxu0
      %v295 = vadd.f32 %v282, %v294
      %v296 = vpop.f32.mrf.mxu0
      %297 = vdwg.mxu0
      %v298 = vadd.f32 %v166, %v295
      %s299 = scalar_lea.vmem %s160, 2
      %v300 = vld [vmem:[%s299] sm:$0x3]
      %s301 = scalar_lea.vmem %s1, 96
      %v302 = vld [vmem:[%s301] sm:$0xf]
      %v303 = vld [vmem:[%s301 + $0x4] sm:$0xf]
      %v304 = vld [vmem:[%s301 + $0x8] sm:$0xf]
      %v305 = vld [vmem:[%s301 + $0xc] sm:$0xf]
      %v306 = vld [vmem:[%s301 + $0x10] sm:$0xf]
      %v307 = vld [vmem:[%s301 + $0x14] sm:$0xf]
      %v308 = vld [vmem:[%s301 + $0x18] sm:$0xf]
      %v309 = vld [vmem:[%s301 + $0x1c] sm:$0xf]
      %v310 = vld [vmem:[%s301 + $0x20] sm:$0xf]
      %v311 = vld [vmem:[%s301 + $0x24] sm:$0xf]
      %v312 = vld [vmem:[%s301 + $0x28] sm:$0xf]
      %v313 = vld [vmem:[%s301 + $0x2c] sm:$0xf]
      %v314 = vld [vmem:[%s301 + $0x30] sm:$0xf]
      %v315 = vld [vmem:[%s301 + $0x34] sm:$0xf]
      %v316 = vld [vmem:[%s301 + $0x38] sm:$0xf]
      %v317 = vld [vmem:[%s301 + $0x3c] sm:$0xf]
      %v318 = vld [vmem:[%s301 + $0x40] sm:$0xf]
      %v319 = vld [vmem:[%s301 + $0x44] sm:$0xf]
      %v320 = vld [vmem:[%s301 + $0x48] sm:$0xf]
      %v321 = vld [vmem:[%s301 + $0x4c] sm:$0xf]
      %v322 = vld [vmem:[%s301 + $0x50] sm:$0xf]
      %v323 = vld [vmem:[%s301 + $0x54] sm:$0xf]
      %v324 = vld [vmem:[%s301 + $0x58] sm:$0xf]
      %v325 = vld [vmem:[%s301 + $0x5c] sm:$0xf]
      %327 = vst [vmem:[#allocation1] ss:$9 sm:$0xff] %v300
      %v328 = vld [vmem:[#allocation1] sm:$0xff]
      %v329 = vld [vmem:[#allocation1 + $0x9] sm:$0xff]
      %v355 = vunpack.c.l.b16 %v302
      %v356 = vunpack.c.l.b16 %v303
      %v357 = vunpack.c.l.b16 %v304
      %v358 = vunpack.c.l.b16 %v305
      %v359 = vunpack.c.l.b16 %v306
      %v360 = vunpack.c.l.b16 %v307
      %v361 = vunpack.c.l.b16 %v308
      %v362 = vunpack.c.l.b16 %v309
      %v363 = vunpack.c.l.b16 %v310
      %v364 = vunpack.c.l.b16 %v311
      %v365 = vunpack.c.l.b16 %v312
      %v366 = vunpack.c.l.b16 %v313
      %v367 = vunpack.c.l.b16 %v314
      %v368 = vunpack.c.l.b16 %v315
      %v369 = vunpack.c.l.b16 %v316
      %v370 = vunpack.c.l.b16 %v317
      %v371 = vunpack.c.l.b16 %v318
      %v372 = vunpack.c.l.b16 %v319
      %v373 = vunpack.c.l.b16 %v320
      %v374 = vunpack.c.l.b16 %v321
      %v375 = vunpack.c.l.b16 %v322
      %v376 = vunpack.c.l.b16 %v323
      %v377 = vunpack.c.l.b16 %v324
      %v378 = vunpack.c.l.b16 %v325
      %v379 = vpack.c.b16 %v356, %v355
      %v380 = vpack.c.b16 %v358, %v357
      %v381 = vpack.c.b16 %v360, %v359
      %v382 = vpack.c.b16 %v362, %v361
      %v383 = vpack.c.b16 %v364, %v363
      %v384 = vpack.c.b16 %v366, %v365
      %v385 = vpack.c.b16 %v368, %v367
      %v386 = vpack.c.b16 %v370, %v369
      %v387 = vpack.c.b16 %v372, %v371
      %v388 = vpack.c.b16 %v374, %v373
      %v389 = vpack.c.b16 %v376, %v375
      %v390 = vpack.c.b16 %v378, %v377
      %v403 = vsel %vm269, %v329, 0
      %405 = vmatpush.bf16.msra.mxu0 %v386
      %406 = vmatpush.bf16.msra.mxu0 %v385
      %407 = vmatpush.bf16.msra.mxu0 %v384
      %408 = vmatpush.bf16.msra.mxu0 %v383
      %409 = vmatpush.bf16.msra.mxu0 %v382
      %410 = vmatpush.bf16.msra.mxu0 %v381
      %411 = vmatpush.bf16.msra.mxu0 %v380
      %412 = vmatpush.bf16.msra.mxu0 %v379
      %413 = vmatmul.bf16.gmra.mxu0 %v328
      %v414 = vpop.f32.mrf.mxu0
      %v415 = vadd.f32 0.0, %v414
      %v416 = vpop.f32.mrf.mxu0
      %417 = vdwg.mxu0
      %418 = vmatpush.bf16.msra.mxu0 0
      %419 = vmatpush.bf16.msra.mxu0 0
      %420 = vmatpush.bf16.msra.mxu0 0
      %421 = vmatpush.bf16.msra.mxu0 0
      %422 = vmatpush.bf16.msra.mxu0 %v390
      %423 = vmatpush.bf16.msra.mxu0 %v389
      %424 = vmatpush.bf16.msra.mxu0 %v388
      %425 = vmatpush.bf16.msra.mxu0 %v387
      %426 = vmatmul.bf16.gmra.mxu0 %v403
      %v427 = vpop.f32.mrf.mxu0
      %v428 = vadd.f32 %v415, %v427
      %v429 = vpop.f32.mrf.mxu0
      %430 = vdwg.mxu0
      %v431 = vadd.f32 %v298, %v428
      %s432 = scalar_lea.vmem %s160, 4
      %v433 = vld [vmem:[%s432] sm:$0x3]
      %s434 = scalar_lea.vmem %s1, 192
      %v435 = vld [vmem:[%s434] sm:$0xf]
      %v436 = vld [vmem:[%s434 + $0x4] sm:$0xf]
      %v437 = vld [vmem:[%s434 + $0x8] sm:$0xf]
      %v438 = vld [vmem:[%s434 + $0xc] sm:$0xf]
      %v439 = vld [vmem:[%s434 + $0x10] sm:$0xf]
      %v440 = vld [vmem:[%s434 + $0x14] sm:$0xf]
      %v441 = vld [vmem:[%s434 + $0x18] sm:$0xf]
      %v442 = vld [vmem:[%s434 + $0x1c] sm:$0xf]
      %v443 = vld [vmem:[%s434 + $0x20] sm:$0xf]
      %v444 = vld [vmem:[%s434 + $0x24] sm:$0xf]
      %v445 = vld [vmem:[%s434 + $0x28] sm:$0xf]
      %v446 = vld [vmem:[%s434 + $0x2c] sm:$0xf]
      %v447 = vld [vmem:[%s434 + $0x30] sm:$0xf]
      %v448 = vld [vmem:[%s434 + $0x34] sm:$0xf]
      %v449 = vld [vmem:[%s434 + $0x38] sm:$0xf]
      %v450 = vld [vmem:[%s434 + $0x3c] sm:$0xf]
      %v451 = vld [vmem:[%s434 + $0x40] sm:$0xf]
      %v452 = vld [vmem:[%s434 + $0x44] sm:$0xf]
      %v453 = vld [vmem:[%s434 + $0x48] sm:$0xf]
      %v454 = vld [vmem:[%s434 + $0x4c] sm:$0xf]
      %v455 = vld [vmem:[%s434 + $0x50] sm:$0xf]
      %v456 = vld [vmem:[%s434 + $0x54] sm:$0xf]
      %v457 = vld [vmem:[%s434 + $0x58] sm:$0xf]
      %v458 = vld [vmem:[%s434 + $0x5c] sm:$0xf]
      %460 = vst [vmem:[#allocation1] ss:$9 sm:$0xff] %v433
      %v461 = vld [vmem:[#allocation1] sm:$0xff]
      %v462 = vld [vmem:[#allocation1 + $0x9] sm:$0xff]
      %v488 = vunpack.c.l.b16 %v435
      %v489 = vunpack.c.l.b16 %v436
      %v490 = vunpack.c.l.b16 %v437
      %v491 = vunpack.c.l.b16 %v438
      %v492 = vunpack.c.l.b16 %v439
      %v493 = vunpack.c.l.b16 %v440
      %v494 = vunpack.c.l.b16 %v441
      %v495 = vunpack.c.l.b16 %v442
      %v496 = vunpack.c.l.b16 %v443
      %v497 = vunpack.c.l.b16 %v444
      %v498 = vunpack.c.l.b16 %v445
      %v499 = vunpack.c.l.b16 %v446
      %v500 = vunpack.c.l.b16 %v447
      %v501 = vunpack.c.l.b16 %v448
      %v502 = vunpack.c.l.b16 %v449
      %v503 = vunpack.c.l.b16 %v450
      %v504 = vunpack.c.l.b16 %v451
      %v505 = vunpack.c.l.b16 %v452
      %v506 = vunpack.c.l.b16 %v453
      %v507 = vunpack.c.l.b16 %v454
      %v508 = vunpack.c.l.b16 %v455
      %v509 = vunpack.c.l.b16 %v456
      %v510 = vunpack.c.l.b16 %v457
      %v511 = vunpack.c.l.b16 %v458
      %v512 = vpack.c.b16 %v489, %v488
      %v513 = vpack.c.b16 %v491, %v490
      %v514 = vpack.c.b16 %v493, %v492
      %v515 = vpack.c.b16 %v495, %v494
      %v516 = vpack.c.b16 %v497, %v496
      %v517 = vpack.c.b16 %v499, %v498
      %v518 = vpack.c.b16 %v501, %v500
      %v519 = vpack.c.b16 %v503, %v502
      %v520 = vpack.c.b16 %v505, %v504
      %v521 = vpack.c.b16 %v507, %v506
      %v522 = vpack.c.b16 %v509, %v508
      %v523 = vpack.c.b16 %v511, %v510
      %v536 = vsel %vm269, %v462, 0
      %538 = vmatpush.bf16.msra.mxu0 %v519
      %539 = vmatpush.bf16.msra.mxu0 %v518
      %540 = vmatpush.bf16.msra.mxu0 %v517
      %541 = vmatpush.bf16.msra.mxu0 %v516
      %542 = vmatpush.bf16.msra.mxu0 %v515
      %543 = vmatpush.bf16.msra.mxu0 %v514
      %544 = vmatpush.bf16.msra.mxu0 %v513
      %545 = vmatpush.bf16.msra.mxu0 %v512
      %546 = vmatmul.bf16.gmra.mxu0 %v461
      %v547 = vpop.f32.mrf.mxu0
      %v548 = vadd.f32 0.0, %v547
      %v549 = vpop.f32.mrf.mxu0
      %550 = vdwg.mxu0
      %551 = vmatpush.bf16.msra.mxu0 0
      %552 = vmatpush.bf16.msra.mxu0 0
      %553 = vmatpush.bf16.msra.mxu0 0
      %554 = vmatpush.bf16.msra.mxu0 0
      %555 = vmatpush.bf16.msra.mxu0 %v523
      %556 = vmatpush.bf16.msra.mxu0 %v522
      %557 = vmatpush.bf16.msra.mxu0 %v521
      %558 = vmatpush.bf16.msra.mxu0 %v520
      %559 = vmatmul.bf16.gmra.mxu0 %v536
      %v560 = vpop.f32.mrf.mxu0
      %v561 = vadd.f32 %v548, %v560
      %v562 = vpop.f32.mrf.mxu0
      %563 = vdwg.mxu0
      %v564 = vadd.f32 %v431, %v561
      %v565 = vmax.f32 %v564, 0.0
      %v566 = vpack.c.bf16 %v565, %v565
      %vm567 = vcmask 516096
      %vm568 = vsmask.f32 256
      %vm569 = vmand %vm567, %vm568
      %v570 = vld [vmem:[%s163] sm:$0x1]
      %v571 = vsel %vm569, %v566, %v570
      %572 = vst [vmem:[%s163] sm:$0x1] %v571
      %p573 = scmp.lt.s32.totalorder %s14, 1
      %s574 = scalar_select %p573, %s14, 1
      %s575 = scalar_lea.vmem %s3, %s574
      // Predicated region
      $region33: #{feature_extractor.5} parent=31 // pred_check
        %p576 = pneg %p100
      $region34: #{feature_extractor.5} parent=31 // pred_check_branch
        %578 = sbr.rel (%p576) target = $region36
      $region35: #{feature_extractor.5} parent=31 // pred_region
        _
      $region36: #{feature_extractor.5} parent=31 // pred_fallthru
        _
    $region32: #{feature_extractor.5} parent=5 // pred_fallthru
      _
    %p579 = scmp.le.s32.totalorder 2, %s9
    // Predicated region
    $region37: #{feature_extractor.5} parent=5 // pred_check
      %p580 = pneg %p579
    $region38: #{feature_extractor.5} parent=5 // pred_check_branch
      %582 = sbr.rel (%p580) target = $region40
    $region39: #{feature_extractor.5} parent=5 // pred_region
      %s583 = ssub.s32 %s9, 2
      // Predicated region
      $region41: #{feature_extractor.5} parent=39 // pred_check
        %p584 = pneg %p106
      $region42: #{feature_extractor.5} parent=39 // pred_check_branch
        %586 = sbr.rel (%p584) target = $region44
      $region43: #{feature_extractor.5} parent=39 // pred_region
        %p587 = scmp.lt.s32.totalorder %s15, 1
        %s588 = scalar_select %p587, %s15, 1
        %s589 = scalar_lea.vmem %s3, %s588
      $region44: #{feature_extractor.5} parent=39 // pred_fallthru
        _
    $region40: #{feature_extractor.5} parent=5 // pred_fallthru
      _
  $region6: #{feature_extractor.5} parent=0 // loop_footer
    %s13 = sadd.s32 1, %s9
  $region7: #{feature_extractor.5} parent=0 // loop_footer_branch
    %8 = sbr.rel target = $region3
  $region8: #{feature_extractor.5} parent=0 // loop_exit
    _

// kernel: feature_extractor.3
$region0: #{feature_extractor.3}
  #allocation0 [shape = 'u32[]', space=smem, size = 0x4, offset = 0x4, fixed_abs, tag = 'smem constant byte address 0x4 - core index']
  #allocation1 [shape = 'u32[72,128]{1,0:T(1,128)}', space=vmem, size = 0x9000, scoped, tag = 'internal scratch']
  %s0 = inlined_call_operand.vmem [shape: bf16[2,36,8,32], index: 0, kind: input, shape index: {}]
  %s1 = inlined_call_operand.vmem [shape: bf16[8,32,32], index: 1, kind: input, shape index: {}]
  %s2 = inlined_call_operand.vmem [shape: f32[1,32], index: 2, kind: input, shape index: {}]
  %s3 = inlined_call_operand.vmem [shape: bf16[2,8,8,32], index: 3, kind: output, shape index: {}]
  %s4 = sld [smem:[#allocation0]]
  $region45: #{feature_extractor.3} parent=0
    _
  %s6 = ssub.s32 1, %s4
  %s7 = scalar_select 0, %s6, %s4
  loop: start=0, step=1, limit=4
  $region2: #{feature_extractor.3} parent=0 // loop_pre_header
    _
  $region3: #{feature_extractor.3} parent=0 // loop_header
    %s9 = sphi 0, %s13
    %p10 = scmp.ge.s32.totalorder %s9, 4
    %s19 = sphi 0, %s21
    %s22 = sphi 0, %s19
    %s23 = sphi 0, %s22
    %s39 = sphi 0, %s23
    %s43 = sphi 0, %s43
    %s45 = sphi 0, %s43
    %s46 = sphi 0, %s45
    %s60 = sphi 0, %s46
    %s64 = sphi 0, %s64
    %s66 = sphi 0, %s64
    %s67 = sphi 0, %s66
    %s81 = sphi 0, %s67
    %s87 = sphi 0, %s89
    %s90 = sphi 0, %s87
    %s91 = sphi 0, %s90
    %s107 = sphi 0, %s91
  $region4: #{feature_extractor.3} parent=0 // loop_header_branch
    %12 = sbr.rel (%p10) target = $region8
  $region5: #{feature_extractor.3} parent=0 // loop_body
    %s14 = ssub.s32 %s9, 1
    %s15 = ssub.s32 %s9, 2
    %s16 = sadd.s32 %s9, 1
    %s17 = ssub.s32 %s9, %s16
    %p18 = scmp.eq.s32.totalorder %s17, 0
    %s20 = sadd.s32 %s19, 1
    %s21 = scalar_select %p18, %s19, %s20
    %p24 = pneg %p18
    %p25 = scmp.eq.s32.totalorder %s9, 1
    %p26 = por %p24, %p25
    %p27 = scmp.ne.s32.totalorder %s19, %s22
    %p28 = scmp.eq.s32.totalorder %s9, 0
    %p29 = por %p27, %p28
    %p30 = scmp.ne.s32.totalorder %s19, %s22
    %p31 = scmp.eq.s32.totalorder %s14, 1
    %p32 = por %p30, %p31
    %p33 = scmp.ne.s32.totalorder %s22, %s23
    %p34 = scmp.eq.s32.totalorder %s14, 0
    %p35 = por %p33, %p34
    %p36 = scmp.ne.s32.totalorder %s22, %s23
    %p37 = scmp.eq.s32.totalorder %s15, 1
    %p38 = por %p36, %p37
    %p40 = scmp.ne.s32.totalorder %s23, %s39
    %p41 = scmp.eq.s32.totalorder %s15, 0
    %p42 = por %p40, %p41
    %s44 = sadd.s32 %s43, 1
    %p47 = scmp.eq.s32.totalorder %s9, 1
    %p48 = scmp.ne.s32.totalorder %s43, %s45
    %p49 = scmp.eq.s32.totalorder %s9, 0
    %p50 = por %p48, %p49
    %p51 = scmp.ne.s32.totalorder %s43, %s45
    %p52 = scmp.eq.s32.totalorder %s14, 1
    %p53 = por %p51, %p52
    %p54 = scmp.ne.s32.totalorder %s45, %s46
    %p55 = scmp.eq.s32.totalorder %s14, 0
    %p56 = por %p54, %p55
    %p57 = scmp.ne.s32.totalorder %s45, %s46
    %p58 = scmp.eq.s32.totalorder %s15, 1
    %p59 = por %p57, %p58
    %p61 = scmp.ne.s32.totalorder %s46, %s60
    %p62 = scmp.eq.s32.totalorder %s15, 0
    %p63 = por %p61, %p62
    %s65 = sadd.s32 %s64, 1
    %p68 = scmp.eq.s32.totalorder %s9, 1
    %p69 = scmp.ne.s32.totalorder %s64, %s66
    %p70 = scmp.eq.s32.totalorder %s9, 0
    %p71 = por %p69, %p70
    %p72 = scmp.ne.s32.totalorder %s64, %s66
    %p73 = scmp.eq.s32.totalorder %s14, 1
    %p74 = por %p72, %p73
    %p75 = scmp.ne.s32.totalorder %s66, %s67
    %p76 = scmp.eq.s32.totalorder %s14, 0
    %p77 = por %p75, %p76
    %p78 = scmp.ne.s32.totalorder %s66, %s67
    %p79 = scmp.eq.s32.totalorder %s15, 1
    %p80 = por %p78, %p79
    %p82 = scmp.ne.s32.totalorder %s67, %s81
    %p83 = scmp.eq.s32.totalorder %s15, 0
    %p84 = por %p82, %p83
    %s85 = ssub.s32 %s9, %s16
    %p86 = scmp.eq.s32.totalorder %s85, 0
    %s88 = sadd.s32 %s87, 1
    %s89 = scalar_select %p86, %s87, %s88
    %p92 = pneg %p86
    %p93 = scmp.eq.s32.totalorder %s9, 1
    %p94 = por %p92, %p93
    %p95 = scmp.ne.s32.totalorder %s87, %s90
    %p96 = scmp.eq.s32.totalorder %s9, 0
    %p97 = por %p95, %p96
    %p98 = scmp.ne.s32.totalorder %s87, %s90
    %p99 = scmp.eq.s32.totalorder %s14, 1
    %p100 = por %p98, %p99
    %p101 = scmp.ne.s32.totalorder %s90, %s91
    %p102 = scmp.eq.s32.totalorder %s14, 0
    %p103 = por %p101, %p102
    %p104 = scmp.ne.s32.totalorder %s90, %s91
    %p105 = scmp.eq.s32.totalorder %s15, 1
    %p106 = por %p104, %p105
    %p108 = scmp.ne.s32.totalorder %s91, %s107
    %p109 = scmp.eq.s32.totalorder %s15, 0
    %p110 = por %p108, %p109
    %p111 = scmp.le.s32.totalorder 1, %s9
    %p112 = scmp.lt.s32.totalorder %s9, 3
    %p113 = pnand %p111, %p112
    %p114 = pneg %p113
    // Predicated region
    $region9: #{feature_extractor.3} parent=5 // pred_check
      _
    $region10: #{feature_extractor.3} parent=5 // pred_check_branch
      %116 = sbr.rel (%p113) target = $region12
    $region11: #{feature_extractor.3} parent=5 // pred_region
      %s117 = ssub.s32 %s9, 1
      // Predicated region
      $region13: #{feature_extractor.3} parent=11 // pred_check
        %p118 = pneg %p56
      $region14: #{feature_extractor.3} parent=11 // pred_check_branch
        %120 = sbr.rel (%p118) target = $region16
      $region15: #{feature_extractor.3} parent=11 // pred_region
        _
      $region16: #{feature_extractor.3} parent=11 // pred_fallthru
        _
      // Predicated region
      $region17: #{feature_extractor.3} parent=11 // pred_check
        %p121 = pneg %p77
      $region18: #{feature_extractor.3} parent=11 // pred_check_branch
        %123 = sbr.rel (%p121) target = $region20
      $region19: #{feature_extractor.3} parent=11 // pred_region
        _
      $region20: #{feature_extractor.3} parent=11 // pred_fallthru
        _
    $region12: #{feature_extractor.3} parent=5 // pred_fallthru
      _
    %p124 = scmp.lt.s32.totalorder %s9, 2
    // Predicated region
    $region21: #{feature_extractor.3} parent=5 // pred_check
      %p125 = pneg %p124
    $region22: #{feature_extractor.3} parent=5 // pred_check_branch
      %127 = sbr.rel (%p125) target = $region24
    $region23: #{feature_extractor.3} parent=5 // pred_region
      // Predicated region
      $region25: #{feature_extractor.3} parent=23 // pred_check
        %p128 = pneg %p29
      $region26: #{feature_extractor.3} parent=23 // pred_check_branch
        %130 = sbr.rel (%p128) target = $region28
      $region27: #{feature_extractor.3} parent=23 // pred_region
        %p131 = scmp.lt.s32.totalorder %s9, 1
        %s132 = scalar_select %p131, %s9, 1
        %s133 = smul.addr %s132, 36
        %s134 = smul.addr %s133, 4
        %s135 = scalar_lea.vmem %s0, %s134
      $region28: #{feature_extractor.3} parent=23 // pred_fallthru
        _
    $region24: #{feature_extractor.3} parent=5 // pred_fallthru
      _
    %p136 = scmp.le.s32.totalorder 1, %s9
    %p137 = scmp.lt.s32.totalorder %s9, 3
    %p138 = pnand %p136, %p137
    %p139 = pneg %p138
    // Predicated region
    $region29: #{feature_extractor.3} parent=5 // pred_check
      _
    $region30: #{feature_extractor.3} parent=5 // pred_check_branch
      %141 = sbr.rel (%p138) target = $region32
    $region31: #{feature_extractor.3} parent=5 // pred_region
      %s142 = ssub.s32 %s9, 1
      %p143 = scmp.lt.s32.totalorder %s14, 1
      %s144 = scalar_select %p143, %s14, 1
      %s145 = smul.addr %s144, 36
      %s146 = smul.addr %s145, 4
      %s147 = scalar_lea.vmem %s0, %s146
      %p148 = pneg %p35
      %p149 = pneg %p32
      %p150 = pneg %p56
      %p151 = pneg %p53
      %p152 = pneg %p77
      %p153 = pneg %p74
      %p154 = pneg %p103
      %p155 = pneg %p100
      %p156 = scmp.lt.s32.totalorder %s14, 1
      %s157 = scalar_select %p156, %s14, 1
      %s158 = smul.addr %s157, 8
      %s159 = smul.addr %s158, 4
      %s160 = scalar_lea.vmem %s3, %s159
      %p161 = scmp.lt.s32.totalorder %s14, 1
      %s162 = scalar_select %p161, %s14, 1
      %s163 = smul.addr %s162, 36
      %s164 = smul.addr %s163, 4
      %s165 = scalar_lea.vmem %s0, %s164
      %p166 = scmp.lt.s32.totalorder %s14, 1
      %s167 = scalar_select %p166, %s14, 1
      %s168 = smul.addr %s167, 8
      %s169 = smul.addr %s168, 4
      %s170 = scalar_lea.vmem %s3, %s169
      %v172 = vld [vmem:[%s2] sm:$0x1]
      %v174 = vperm.slane %v172, 0
      %v176 = vadd.f32 %v174, 0.0
      %v177 = vld [vmem:[%s165] sm:$0xf]
      %v178 = vld [vmem:[%s1] sm:$0xf]
      %v179 = vld [vmem:[%s1 + $0x4] sm:$0xf]
      %v180 = vld [vmem:[%s1 + $0x8] sm:$0xf]
      %v181 = vld [vmem:[%s1 + $0xc] sm:$0xf]
      %v186 = vunpack.c.l.b16 %v178
      %v187 = vunpack.c.l.b16 %v179
      %v188 = vunpack.c.l.b16 %v180
      %v189 = vunpack.c.l.b16 %v181
      %v190 = vpack.c.b16 %v187, %v186
      %v191 = vpack.c.b16 %v189, %v188
      %vm194 = vcmask 261120
      %v196 = vsel %vm194, %v177, 0
      %198 = vmatpush.bf16.msra.mxu0 0
      %199 = vmatpush.bf16.msra.mxu0 0
      %200 = vmatpush.bf16.msra.mxu0 0
      %201 = vmatpush.bf16.msra.mxu0 0
      %202 = vmatpush.bf16.msra.mxu0 0
      %203 = vmatpush.bf16.msra.mxu0 0
      %204 = vmatpush.bf16.msra.mxu0 %v191
      %205 = vmatpush.bf16.msra.mxu0 %v190
      %206 = vmatmul.bf16.gmra.mxu0 %v196
      %v207 = vpop.f32.mrf.mxu0
      %v208 = vadd.f32 0.0, %v207
      %v209 = vpop.f32.mrf.mxu0
      %210 = vdwg.mxu0
      %v211 = vadd.f32 %v176, %v208
      %s212 = scalar_lea.vmem %s165, 4
      %v213 = vld [vmem:[%s212] sm:$0xf]
      %s214 = scalar_lea.vmem %s1, 16
      %v215 = vld [vmem:[%s214] sm:$0xf]
      %v216 = vld [vmem:[%s214 + $0x4] sm:$0xf]
      %v217 = vld [vmem:[%s214 + $0x8] sm:$0xf]
      %v218 = vld [vmem:[%s214 + $0xc] sm:$0xf]
      %v223 = vunpack.c.l.b16 %v215
      %v224 = vunpack.c.l.b16 %v216
      %v225 = vunpack.c.l.b16 %v217
      %v226 = vunpack.c.l.b16 %v218
      %v227 = vpack.c.b16 %v224, %v223
      %v228 = vpack.c.b16 %v226, %v225
      %v232 = vsel %vm194, %v213, 0
      %234 = vmatpush.bf16.msra.mxu0 0
      %235 = vmatpush.bf16.msra.mxu0 0
      %236 = vmatpush.bf16.msra.mxu0 0
      %237 = vmatpush.bf16.msra.mxu0 0
      %238 = vmatpush.bf16.msra.mxu0 0
      %239 = vmatpush.bf16.msra.mxu0 0
      %240 = vmatpush.bf16.msra.mxu0 %v228
      %241 = vmatpush.bf16.msra.mxu0 %v227
      %242 = vmatmul.bf16.gmra.mxu0 %v232
      %v243 = vpop.f32.mrf.mxu0
      %v244 = vadd.f32 0.0, %v243
      %v245 = vpop.f32.mrf.mxu0
      %246 = vdwg.mxu0
      %v247 = vadd.f32 %v211, %v244
      %s248 = scalar_lea.vmem %s165, 8
      %v249 = vld [vmem:[%s248] sm:$0xf]
      %s250 = scalar_lea.vmem %s1, 32
      %v251 = vld [vmem:[%s250] sm:$0xf]
      %v252 = vld [vmem:[%s250 + $0x4] sm:$0xf]
      %v253 = vld [vmem:[%s250 + $0x8] sm:$0xf]
      %v254 = vld [vmem:[%s250 + $0xc] sm:$0xf]
      %v259 = vunpack.c.l.b16 %v251
      %v260 = vunpack.c.l.b16 %v252
      %v261 = vunpack.c.l.b16 %v253
      %v262 = vunpack.c.l.b16 %v254
      %v263 = vpack.c.b16 %v260, %v259
      %v264 = vpack.c.b16 %v262, %v261
      %v268 = vsel %vm194, %v249, 0
      %270 = vmatpush.bf16.msra.mxu0 0
      %271 = vmatpush.bf16.msra.mxu0 0
      %272 = vmatpush.bf16.msra.mxu0 0
      %273 = vmatpush.bf16.msra.mxu0 0
      %274 = vmatpush.bf16.msra.mxu0 0
      %275 = vmatpush.bf16.msra.mxu0 0
      %276 = vmatpush.bf16.msra.mxu0 %v264
      %277 = vmatpush.bf16.msra.mxu0 %v263
      %278 = vmatmul.bf16.gmra.mxu0 %v268
      %v279 = vpop.f32.mrf.mxu0
      %v280 = vadd.f32 0.0, %v279
      %v281 = vpop.f32.mrf.mxu0
      %282 = vdwg.mxu0
      %v283 = vadd.f32 %v247, %v280
      %s284 = scalar_lea.vmem %s165, 12
      %v285 = vld [vmem:[%s284] sm:$0xf]
      %s286 = scalar_lea.vmem %s1, 48
      %v287 = vld [vmem:[%s286] sm:$0xf]
      %v288 = vld [vmem:[%s286 + $0x4] sm:$0xf]
      %v289 = vld [vmem:[%s286 + $0x8] sm:$0xf]
      %v290 = vld [vmem:[%s286 + $0xc] sm:$0xf]
      %v295 = vunpack.c.l.b16 %v287
      %v296 = vunpack.c.l.b16 %v288
      %v297 = vunpack.c.l.b16 %v289
      %v298 = vunpack.c.l.b16 %v290
      %v299 = vpack.c.b16 %v296, %v295
      %v300 = vpack.c.b16 %v298, %v297
      %v304 = vsel %vm194, %v285, 0
      %306 = vmatpush.bf16.msra.mxu0 0
      %307 = vmatpush.bf16.msra.mxu0 0
      %308 = vmatpush.bf16.msra.mxu0 0
      %309 = vmatpush.bf16.msra.mxu0 0
      %310 = vmatpush.bf16.msra.mxu0 0
      %311 = vmatpush.bf16.msra.mxu0 0
      %312 = vmatpush.bf16.msra.mxu0 %v300
      %313 = vmatpush.bf16.msra.mxu0 %v299
      %314 = vmatmul.bf16.gmra.mxu0 %v304
      %v315 = vpop.f32.mrf.mxu0
      %v316 = vadd.f32 0.0, %v315
      %v317 = vpop.f32.mrf.mxu0
      %318 = vdwg.mxu0
      %v319 = vadd.f32 %v283, %v316
      %s320 = scalar_lea.vmem %s165, 16
      %v321 = vld [vmem:[%s320] sm:$0xf]
      %s322 = scalar_lea.vmem %s1, 64
      %v323 = vld [vmem:[%s322] sm:$0xf]
      %v324 = vld [vmem:[%s322 + $0x4] sm:$0xf]
      %v325 = vld [vmem:[%s322 + $0x8] sm:$0xf]
      %v326 = vld [vmem:[%s322 + $0xc] sm:$0xf]
      %v331 = vunpack.c.l.b16 %v323
      %v332 = vunpack.c.l.b16 %v324
      %v333 = vunpack.c.l.b16 %v325
      %v334 = vunpack.c.l.b16 %v326
      %v335 = vpack.c.b16 %v332, %v331
      %v336 = vpack.c.b16 %v334, %v333
      %v340 = vsel %vm194, %v321, 0
      %342 = vmatpush.bf16.msra.mxu0 0
      %343 = vmatpush.bf16.msra.mxu0 0
      %344 = vmatpush.bf16.msra.mxu0 0
      %345 = vmatpush.bf16.msra.mxu0 0
      %346 = vmatpush.bf16.msra.mxu0 0
      %347 = vmatpush.bf16.msra.mxu0 0
      %348 = vmatpush.bf16.msra.mxu0 %v336
      %349 = vmatpush.bf16.msra.mxu0 %v335
      %350 = vmatmul.bf16.gmra.mxu0 %v340
      %v351 = vpop.f32.mrf.mxu0
      %v352 = vadd.f32 0.0, %v351
      %v353 = vpop.f32.mrf.mxu0
      %354 = vdwg.mxu0
      %v355 = vadd.f32 %v319, %v352
      %s356 = scalar_lea.vmem %s165, 20
      %v357 = vld [vmem:[%s356] sm:$0xf]
      %s358 = scalar_lea.vmem %s1, 80
      %v359 = vld [vmem:[%s358] sm:$0xf]
      %v360 = vld [vmem:[%s358 + $0x4] sm:$0xf]
      %v361 = vld [vmem:[%s358 + $0x8] sm:$0xf]
      %v362 = vld [vmem:[%s358 + $0xc] sm:$0xf]
      %v367 = vunpack.c.l.b16 %v359
      %v368 = vunpack.c.l.b16 %v360
      %v369 = vunpack.c.l.b16 %v361
      %v370 = vunpack.c.l.b16 %v362
      %v371 = vpack.c.b16 %v368, %v367
      %v372 = vpack.c.b16 %v370, %v369
      %v376 = vsel %vm194, %v357, 0
      %378 = vmatpush.bf16.msra.mxu0 0
      %379 = vmatpush.bf16.msra.mxu0 0
      %380 = vmatpush.bf16.msra.mxu0 0
      %381 = vmatpush.bf16.msra.mxu0 0
      %382 = vmatpush.bf16.msra.mxu0 0
      %383 = vmatpush.bf16.msra.mxu0 0
      %384 = vmatpush.bf16.msra.mxu0 %v372
      %385 = vmatpush.bf16.msra.mxu0 %v371
      %386 = vmatmul.bf16.gmra.mxu0 %v376
      %v387 = vpop.f32.mrf.mxu0
      %v388 = vadd.f32 0.0, %v387
      %v389 = vpop.f32.mrf.mxu0
      %390 = vdwg.mxu0
      %v391 = vadd.f32 %v355, %v388
      %s392 = scalar_lea.vmem %s165, 24
      %v393 = vld [vmem:[%s392] sm:$0xf]
      %s394 = scalar_lea.vmem %s1, 96
      %v395 = vld [vmem:[%s394] sm:$0xf]
      %v396 = vld [vmem:[%s394 + $0x4] sm:$0xf]
      %v397 = vld [vmem:[%s394 + $0x8] sm:$0xf]
      %v398 = vld [vmem:[%s394 + $0xc] sm:$0xf]
      %v403 = vunpack.c.l.b16 %v395
      %v404 = vunpack.c.l.b16 %v396
      %v405 = vunpack.c.l.b16 %v397
      %v406 = vunpack.c.l.b16 %v398
      %v407 = vpack.c.b16 %v404, %v403
      %v408 = vpack.c.b16 %v406, %v405
      %v412 = vsel %vm194, %v393, 0
      %414 = vmatpush.bf16.msra.mxu0 0
      %415 = vmatpush.bf16.msra.mxu0 0
      %416 = vmatpush.bf16.msra.mxu0 0
      %417 = vmatpush.bf16.msra.mxu0 0
      %418 = vmatpush.bf16.msra.mxu0 0
      %419 = vmatpush.bf16.msra.mxu0 0
      %420 = vmatpush.bf16.msra.mxu0 %v408
      %421 = vmatpush.bf16.msra.mxu0 %v407
      %422 = vmatmul.bf16.gmra.mxu0 %v412
      %v423 = vpop.f32.mrf.mxu0
      %v424 = vadd.f32 0.0, %v423
      %v425 = vpop.f32.mrf.mxu0
      %426 = vdwg.mxu0
      %v427 = vadd.f32 %v391, %v424
      %s428 = scalar_lea.vmem %s165, 28
      %v429 = vld [vmem:[%s428] sm:$0xf]
      %s430 = scalar_lea.vmem %s1, 112
      %v431 = vld [vmem:[%s430] sm:$0xf]
      %v432 = vld [vmem:[%s430 + $0x4] sm:$0xf]
      %v433 = vld [vmem:[%s430 + $0x8] sm:$0xf]
      %v434 = vld [vmem:[%s430 + $0xc] sm:$0xf]
      %v439 = vunpack.c.l.b16 %v431
      %v440 = vunpack.c.l.b16 %v432
      %v441 = vunpack.c.l.b16 %v433
      %v442 = vunpack.c.l.b16 %v434
      %v443 = vpack.c.b16 %v440, %v439
      %v444 = vpack.c.b16 %v442, %v441
      %v448 = vsel %vm194, %v429, 0
      %450 = vmatpush.bf16.msra.mxu0 0
      %451 = vmatpush.bf16.msra.mxu0 0
      %452 = vmatpush.bf16.msra.mxu0 0
      %453 = vmatpush.bf16.msra.mxu0 0
      %454 = vmatpush.bf16.msra.mxu0 0
      %455 = vmatpush.bf16.msra.mxu0 0
      %456 = vmatpush.bf16.msra.mxu0 %v444
      %457 = vmatpush.bf16.msra.mxu0 %v443
      %458 = vmatmul.bf16.gmra.mxu0 %v448
      %v459 = vpop.f32.mrf.mxu0
      %v460 = vadd.f32 0.0, %v459
      %v461 = vpop.f32.mrf.mxu0
      %462 = vdwg.mxu0
      %v463 = vadd.f32 %v427, %v460
      %v464 = vmax.f32 %v463, 0.0
      %v465 = vpack.c.bf16 %v464, %v464
      %vm466 = vcmask 257024
      %467 = vst.msk [vmem:[%s170] sm:$0xf] %vm466, %v465
      %v468 = vld [vmem:[%s320] sm:$0xf]
      %v469 = vld [vmem:[%s1] sm:$0xf]
      %v470 = vld [vmem:[%s1 + $0x4] sm:$0xf]
      %v471 = vld [vmem:[%s1 + $0x8] sm:$0xf]
      %v472 = vld [vmem:[%s1 + $0xc] sm:$0xf]
      %v477 = vunpack.c.l.b16 %v469
      %v478 = vunpack.c.l.b16 %v470
      %v479 = vunpack.c.l.b16 %v471
      %v480 = vunpack.c.l.b16 %v472
      %v481 = vpack.c.b16 %v478, %v477
      %v482 = vpack.c.b16 %v480, %v479
      %v486 = vsel %vm194, %v468, 0
      %488 = vmatpush.bf16.msra.mxu0 0
      %489 = vmatpush.bf16.msra.mxu0 0
      %490 = vmatpush.bf16.msra.mxu0 0
      %491 = vmatpush.bf16.msra.mxu0 0
      %492 = vmatpush.bf16.msra.mxu0 0
      %493 = vmatpush.bf16.msra.mxu0 0
      %494 = vmatpush.bf16.msra.mxu0 %v482
      %495 = vmatpush.bf16.msra.mxu0 %v481
      %496 = vmatmul.bf16.gmra.mxu0 %v486
      %v497 = vpop.f32.mrf.mxu0
      %v498 = vadd.f32 0.0, %v497
      %v499 = vpop.f32.mrf.mxu0
      %500 = vdwg.mxu0
      %v501 = vadd.f32 %v176, %v498
      %v502 = vld [vmem:[%s356] sm:$0xf]
      %v503 = vld [vmem:[%s214] sm:$0xf]
      %v504 = vld [vmem:[%s214 + $0x4] sm:$0xf]
      %v505 = vld [vmem:[%s214 + $0x8] sm:$0xf]
      %v506 = vld [vmem:[%s214 + $0xc] sm:$0xf]
      %v511 = vunpack.c.l.b16 %v503
      %v512 = vunpack.c.l.b16 %v504
      %v513 = vunpack.c.l.b16 %v505
      %v514 = vunpack.c.l.b16 %v506
      %v515 = vpack.c.b16 %v512, %v511
      %v516 = vpack.c.b16 %v514, %v513
      %v520 = vsel %vm194, %v502, 0
      %522 = vmatpush.bf16.msra.mxu0 0
      %523 = vmatpush.bf16.msra.mxu0 0
      %524 = vmatpush.bf16.msra.mxu0 0
      %525 = vmatpush.bf16.msra.mxu0 0
      %526 = vmatpush.bf16.msra.mxu0 0
      %527 = vmatpush.bf16.msra.mxu0 0
      %528 = vmatpush.bf16.msra.mxu0 %v516
      %529 = vmatpush.bf16.msra.mxu0 %v515
      %530 = vmatmul.bf16.gmra.mxu0 %v520
      %v531 = vpop.f32.mrf.mxu0
      %v532 = vadd.f32 0.0, %v531
      %v533 = vpop.f32.mrf.mxu0
      %534 = vdwg.mxu0
      %v535 = vadd.f32 %v501, %v532
      %v536 = vld [vmem:[%s392] sm:$0xf]
      %v537 = vld [vmem:[%s250] sm:$0xf]
      %v538 = vld [vmem:[%s250 + $0x4] sm:$0xf]
      %v539 = vld [vmem:[%s250 + $0x8] sm:$0xf]
      %v540 = vld [vmem:[%s250 + $0xc] sm:$0xf]
      %v545 = vunpack.c.l.b16 %v537
      %v546 = vunpack.c.l.b16 %v538
      %v547 = vunpack.c.l.b16 %v539
      %v548 = vunpack.c.l.b16 %v540
      %v549 = vpack.c.b16 %v546, %v545
      %v550 = vpack.c.b16 %v548, %v547
      %v554 = vsel %vm194, %v536, 0
      %556 = vmatpush.bf16.msra.mxu0 0
      %557 = vmatpush.bf16.msra.mxu0 0
      %558 = vmatpush.bf16.msra.mxu0 0
      %559 = vmatpush.bf16.msra.mxu0 0
      %560 = vmatpush.bf16.msra.mxu0 0
      %561 = vmatpush.bf16.msra.mxu0 0
      %562 = vmatpush.bf16.msra.mxu0 %v550
      %563 = vmatpush.bf16.msra.mxu0 %v549
      %564 = vmatmul.bf16.gmra.mxu0 %v554
      %v565 = vpop.f32.mrf.mxu0
      %v566 = vadd.f32 0.0, %v565
      %v567 = vpop.f32.mrf.mxu0
      %568 = vdwg.mxu0
      %v569 = vadd.f32 %v535, %v566
      %v570 = vld [vmem:[%s428] sm:$0xf]
      %v571 = vld [vmem:[%s286] sm:$0xf]
      %v572 = vld [vmem:[%s286 + $0x4] sm:$0xf]
      %v573 = vld [vmem:[%s286 + $0x8] sm:$0xf]
      %v574 = vld [vmem:[%s286 + $0xc] sm:$0xf]
      %v579 = vunpack.c.l.b16 %v571
      %v580 = vunpack.c.l.b16 %v572
      %v581 = vunpack.c.l.b16 %v573
      %v582 = vunpack.c.l.b16 %v574
      %v583 = vpack.c.b16 %v580, %v579
      %v584 = vpack.c.b16 %v582, %v581
      %v588 = vsel %vm194, %v570, 0
      %590 = vmatpush.bf16.msra.mxu0 0
      %591 = vmatpush.bf16.msra.mxu0 0
      %592 = vmatpush.bf16.msra.mxu0 0
      %593 = vmatpush.bf16.msra.mxu0 0
      %594 = vmatpush.bf16.msra.mxu0 0
      %595 = vmatpush.bf16.msra.mxu0 0
      %596 = vmatpush.bf16.msra.mxu0 %v584
      %597 = vmatpush.bf16.msra.mxu0 %v583
      %598 = vmatmul.bf16.gmra.mxu0 %v588
      %v599 = vpop.f32.mrf.mxu0
      %v600 = vadd.f32 0.0, %v599
      %v601 = vpop.f32.mrf.mxu0
      %602 = vdwg.mxu0
      %v603 = vadd.f32 %v569, %v600
      %s604 = scalar_lea.vmem %s165, 32
      %v605 = vld [vmem:[%s604] sm:$0xf]
      %v606 = vld [vmem:[%s322] sm:$0xf]
      %v607 = vld [vmem:[%s322 + $0x4] sm:$0xf]
      %v608 = vld [vmem:[%s322 + $0x8] sm:$0xf]
      %v609 = vld [vmem:[%s322 + $0xc] sm:$0xf]
      %v614 = vunpack.c.l.b16 %v606
      %v615 = vunpack.c.l.b16 %v607
      %v616 = vunpack.c.l.b16 %v608
      %v617 = vunpack.c.l.b16 %v609
      %v618 = vpack.c.b16 %v615, %v614
      %v619 = vpack.c.b16 %v617, %v616
      %v623 = vsel %vm194, %v605, 0
      %625 = vmatpush.bf16.msra.mxu0 0
      %626 = vmatpush.bf16.msra.mxu0 0
      %627 = vmatpush.bf16.msra.mxu0 0
      %628 = vmatpush.bf16.msra.mxu0 0
      %629 = vmatpush.bf16.msra.mxu0 0
      %630 = vmatpush.bf16.msra.mxu0 0
      %631 = vmatpush.bf16.msra.mxu0 %v619
      %632 = vmatpush.bf16.msra.mxu0 %v618
      %633 = vmatmul.bf16.gmra.mxu0 %v623
      %v634 = vpop.f32.mrf.mxu0
      %v635 = vadd.f32 0.0, %v634
      %v636 = vpop.f32.mrf.mxu0
      %637 = vdwg.mxu0
      %v638 = vadd.f32 %v603, %v635
      %s639 = scalar_lea.vmem %s165, 36
      %v640 = vld [vmem:[%s639] sm:$0xf]
      %v641 = vld [vmem:[%s358] sm:$0xf]
      %v642 = vld [vmem:[%s358 + $0x4] sm:$0xf]
      %v643 = vld [vmem:[%s358 + $0x8] sm:$0xf]
      %v644 = vld [vmem:[%s358 + $0xc] sm:$0xf]
      %v649 = vunpack.c.l.b16 %v641
      %v650 = vunpack.c.l.b16 %v642
      %v651 = vunpack.c.l.b16 %v643
      %v652 = vunpack.c.l.b16 %v644
      %v653 = vpack.c.b16 %v650, %v649
      %v654 = vpack.c.b16 %v652, %v651
      %v658 = vsel %vm194, %v640, 0
      %660 = vmatpush.bf16.msra.mxu0 0
      %661 = vmatpush.bf16.msra.mxu0 0
      %662 = vmatpush.bf16.msra.mxu0 0
      %663 = vmatpush.bf16.msra.mxu0 0
      %664 = vmatpush.bf16.msra.mxu0 0
      %665 = vmatpush.bf16.msra.mxu0 0
      %666 = vmatpush.bf16.msra.mxu0 %v654
      %667 = vmatpush.bf16.msra.mxu0 %v653
      %668 = vmatmul.bf16.gmra.mxu0 %v658
      %v669 = vpop.f32.mrf.mxu0
      %v670 = vadd.f32 0.0, %v669
      %v671 = vpop.f32.mrf.mxu0
      %672 = vdwg.mxu0
      %v673 = vadd.f32 %v638, %v670
      %s674 = scalar_lea.vmem %s165, 40
      %v675 = vld [vmem:[%s674] sm:$0xf]
      %v676 = vld [vmem:[%s394] sm:$0xf]
      %v677 = vld [vmem:[%s394 + $0x4] sm:$0xf]
      %v678 = vld [vmem:[%s394 + $0x8] sm:$0xf]
      %v679 = vld [vmem:[%s394 + $0xc] sm:$0xf]
      %v684 = vunpack.c.l.b16 %v676
      %v685 = vunpack.c.l.b16 %v677
      %v686 = vunpack.c.l.b16 %v678
      %v687 = vunpack.c.l.b16 %v679
      %v688 = vpack.c.b16 %v685, %v684
      %v689 = vpack.c.b16 %v687, %v686
      %v693 = vsel %vm194, %v675, 0
      %695 = vmatpush.bf16.msra.mxu0 0
      %696 = vmatpush.bf16.msra.mxu0 0
      %697 = vmatpush.bf16.msra.mxu0 0
      %698 = vmatpush.bf16.msra.mxu0 0
      %699 = vmatpush.bf16.msra.mxu0 0
      %700 = vmatpush.bf16.msra.mxu0 0
      %701 = vmatpush.bf16.msra.mxu0 %v689
      %702 = vmatpush.bf16.msra.mxu0 %v688
      %703 = vmatmul.bf16.gmra.mxu0 %v693
      %v704 = vpop.f32.mrf.mxu0
      %v705 = vadd.f32 0.0, %v704
      %v706 = vpop.f32.mrf.mxu0
      %707 = vdwg.mxu0
      %v708 = vadd.f32 %v673, %v705
      %s709 = scalar_lea.vmem %s165, 44
      %v710 = vld [vmem:[%s709] sm:$0xf]
      %v711 = vld [vmem:[%s430] sm:$0xf]
      %v712 = vld [vmem:[%s430 + $0x4] sm:$0xf]
      %v713 = vld [vmem:[%s430 + $0x8] sm:$0xf]
      %v714 = vld [vmem:[%s430 + $0xc] sm:$0xf]
      %v719 = vunpack.c.l.b16 %v711
      %v720 = vunpack.c.l.b16 %v712
      %v721 = vunpack.c.l.b16 %v713
      %v722 = vunpack.c.l.b16 %v714
      %v723 = vpack.c.b16 %v720, %v719
      %v724 = vpack.c.b16 %v722, %v721
      %v728 = vsel %vm194, %v710, 0
      %730 = vmatpush.bf16.msra.mxu0 0
      %731 = vmatpush.bf16.msra.mxu0 0
      %732 = vmatpush.bf16.msra.mxu0 0
      %733 = vmatpush.bf16.msra.mxu0 0
      %734 = vmatpush.bf16.msra.mxu0 0
      %735 = vmatpush.bf16.msra.mxu0 0
      %736 = vmatpush.bf16.msra.mxu0 %v724
      %737 = vmatpush.bf16.msra.mxu0 %v723
      %738 = vmatmul.bf16.gmra.mxu0 %v728
      %v739 = vpop.f32.mrf.mxu0
      %v740 = vadd.f32 0.0, %v739
      %v741 = vpop.f32.mrf.mxu0
      %742 = vdwg.mxu0
      %v743 = vadd.f32 %v708, %v740
      %v744 = vmax.f32 %v743, 0.0
      %v745 = vpack.c.bf16 %v744, %v744
      %s746 = scalar_lea.vmem %s170, 4
      %747 = vst.msk [vmem:[%s746] sm:$0xf] %vm466, %v745
      %v748 = vld [vmem:[%s604] sm:$0xf]
      %v749 = vld [vmem:[%s1] sm:$0xf]
      %v750 = vld [vmem:[%s1 + $0x4] sm:$0xf]
      %v751 = vld [vmem:[%s1 + $0x8] sm:$0xf]
      %v752 = vld [vmem:[%s1 + $0xc] sm:$0xf]
      %v757 = vunpack.c.l.b16 %v749
      %v758 = vunpack.c.l.b16 %v750
      %v759 = vunpack.c.l.b16 %v751
      %v760 = vunpack.c.l.b16 %v752
      %v761 = vpack.c.b16 %v758, %v757
      %v762 = vpack.c.b16 %v760, %v759
      %v766 = vsel %vm194, %v748, 0
      %768 = vmatpush.bf16.msra.mxu0 0
      %769 = vmatpush.bf16.msra.mxu0 0
      %770 = vmatpush.bf16.msra.mxu0 0
      %771 = vmatpush.bf16.msra.mxu0 0
      %772 = vmatpush.bf16.msra.mxu0 0
      %773 = vmatpush.bf16.msra.mxu0 0
      %774 = vmatpush.bf16.msra.mxu0 %v762
      %775 = vmatpush.bf16.msra.mxu0 %v761
      %776 = vmatmul.bf16.gmra.mxu0 %v766
      %v777 = vpop.f32.mrf.mxu0
      %v778 = vadd.f32 0.0, %v777
      %v779 = vpop.f32.mrf.mxu0
      %780 = vdwg.mxu0
      %v781 = vadd.f32 %v176, %v778
      %v782 = vld [vmem:[%s639] sm:$0xf]
      %v783 = vld [vmem:[%s214] sm:$0xf]
      %v784 = vld [vmem:[%s214 + $0x4] sm:$0xf]
      %v785 = vld [vmem:[%s214 + $0x8] sm:$0xf]
      %v786 = vld [vmem:[%s214 + $0xc] sm:$0xf]
      %v791 = vunpack.c.l.b16 %v783
      %v792 = vunpack.c.l.b16 %v784
      %v793 = vunpack.c.l.b16 %v785
      %v794 = vunpack.c.l.b16 %v786
      %v795 = vpack.c.b16 %v792, %v791
      %v796 = vpack.c.b16 %v794, %v793
      %v800 = vsel %vm194, %v782, 0
      %802 = vmatpush.bf16.msra.mxu0 0
      %803 = vmatpush.bf16.msra.mxu0 0
      %804 = vmatpush.bf16.msra.mxu0 0
      %805 = vmatpush.bf16.msra.mxu0 0
      %806 = vmatpush.bf16.msra.mxu0 0
      %807 = vmatpush.bf16.msra.mxu0 0
      %808 = vmatpush.bf16.msra.mxu0 %v796
      %809 = vmatpush.bf16.msra.mxu0 %v795
      %810 = vmatmul.bf16.gmra.mxu0 %v800
      %v811 = vpop.f32.mrf.mxu0
      %v812 = vadd.f32 0.0, %v811
      %v813 = vpop.f32.mrf.mxu0
      %814 = vdwg.mxu0
      %v815 = vadd.f32 %v781, %v812
      %v816 = vld [vmem:[%s674] sm:$0xf]
      %v817 = vld [vmem:[%s250] sm:$0xf]
      %v818 = vld [vmem:[%s250 + $0x4] sm:$0xf]
      %v819 = vld [vmem:[%s250 + $0x8] sm:$0xf]
      %v820 = vld [vmem:[%s250 + $0xc] sm:$0xf]
      %v825 = vunpack.c.l.b16 %v817
      %v826 = vunpack.c.l.b16 %v818
      %v827 = vunpack.c.l.b16 %v819
      %v828 = vunpack.c.l.b16 %v820
      %v829 = vpack.c.b16 %v826, %v825
      %v830 = vpack.c.b16 %v828, %v827
      %v834 = vsel %vm194, %v816, 0
      %836 = vmatpush.bf16.msra.mxu0 0
      %837 = vmatpush.bf16.msra.mxu0 0
      %838 = vmatpush.bf16.msra.mxu0 0
      %839 = vmatpush.bf16.msra.mxu0 0
      %840 = vmatpush.bf16.msra.mxu0 0
      %841 = vmatpush.bf16.msra.mxu0 0
      %842 = vmatpush.bf16.msra.mxu0 %v830
      %843 = vmatpush.bf16.msra.mxu0 %v829
      %844 = vmatmul.bf16.gmra.mxu0 %v834
      %v845 = vpop.f32.mrf.mxu0
      %v846 = vadd.f32 0.0, %v845
      %v847 = vpop.f32.mrf.mxu0
      %848 = vdwg.mxu0
      %v849 = vadd.f32 %v815, %v846
      %v850 = vld [vmem:[%s709] sm:$0xf]
      %v851 = vld [vmem:[%s286] sm:$0xf]
      %v852 = vld [vmem:[%s286 + $0x4] sm:$0xf]
      %v853 = vld [vmem:[%s286 + $0x8] sm:$0xf]
      %v854 = vld [vmem:[%s286 + $0xc] sm:$0xf]
      %v859 = vunpack.c.l.b16 %v851
      %v860 = vunpack.c.l.b16 %v852
      %v861 = vunpack.c.l.b16 %v853
      %v862 = vunpack.c.l.b16 %v854
      %v863 = vpack.c.b16 %v860, %v859
      %v864 = vpack.c.b16 %v862, %v861
      %v868 = vsel %vm194, %v850, 0
      %870 = vmatpush.bf16.msra.mxu0 0
      %871 = vmatpush.bf16.msra.mxu0 0
      %872 = vmatpush.bf16.msra.mxu0 0
      %873 = vmatpush.bf16.msra.mxu0 0
      %874 = vmatpush.bf16.msra.mxu0 0
      %875 = vmatpush.bf16.msra.mxu0 0
      %876 = vmatpush.bf16.msra.mxu0 %v864
      %877 = vmatpush.bf16.msra.mxu0 %v863
      %878 = vmatmul.bf16.gmra.mxu0 %v868
      %v879 = vpop.f32.mrf.mxu0
      %v880 = vadd.f32 0.0, %v879
      %v881 = vpop.f32.mrf.mxu0
      %882 = vdwg.mxu0
      %v883 = vadd.f32 %v849, %v880
      %s884 = scalar_lea.vmem %s165, 48
      %v885 = vld [vmem:[%s884] sm:$0xf]
      %v886 = vld [vmem:[%s322] sm:$0xf]
      %v887 = vld [vmem:[%s322 + $0x4] sm:$0xf]
      %v888 = vld [vmem:[%s322 + $0x8] sm:$0xf]
      %v889 = vld [vmem:[%s322 + $0xc] sm:$0xf]
      %v894 = vunpack.c.l.b16 %v886
      %v895 = vunpack.c.l.b16 %v887
      %v896 = vunpack.c.l.b16 %v888
      %v897 = vunpack.c.l.b16 %v889
      %v898 = vpack.c.b16 %v895, %v894
      %v899 = vpack.c.b16 %v897, %v896
      %v903 = vsel %vm194, %v885, 0
      %905 = vmatpush.bf16.msra.mxu0 0
      %906 = vmatpush.bf16.msra.mxu0 0
      %907 = vmatpush.bf16.msra.mxu0 0
      %908 = vmatpush.bf16.msra.mxu0 0
      %909 = vmatpush.bf16.msra.mxu0 0
      %910 = vmatpush.bf16.msra.mxu0 0
      %911 = vmatpush.bf16.msra.mxu0 %v899
      %912 = vmatpush.bf16.msra.mxu0 %v898
      %913 = vmatmul.bf16.gmra.mxu0 %v903
      %v914 = vpop.f32.mrf.mxu0
      %v915 = vadd.f32 0.0, %v914
      %v916 = vpop.f32.mrf.mxu0
      %917 = vdwg.mxu0
      %v918 = vadd.f32 %v883, %v915
      %s919 = scalar_lea.vmem %s165, 52
      %v920 = vld [vmem:[%s919] sm:$0xf]
      %v921 = vld [vmem:[%s358] sm:$0xf]
      %v922 = vld [vmem:[%s358 + $0x4] sm:$0xf]
      %v923 = vld [vmem:[%s358 + $0x8] sm:$0xf]
      %v924 = vld [vmem:[%s358 + $0xc] sm:$0xf]
      %v929 = vunpack.c.l.b16 %v921
      %v930 = vunpack.c.l.b16 %v922
      %v931 = vunpack.c.l.b16 %v923
      %v932 = vunpack.c.l.b16 %v924
      %v933 = vpack.c.b16 %v930, %v929
      %v934 = vpack.c.b16 %v932, %v931
      %v938 = vsel %vm194, %v920, 0
      %940 = vmatpush.bf16.msra.mxu0 0
      %941 = vmatpush.bf16.msra.mxu0 0
      %942 = vmatpush.bf16.msra.mxu0 0
      %943 = vmatpush.bf16.msra.mxu0 0
      %944 = vmatpush.bf16.msra.mxu0 0
      %945 = vmatpush.bf16.msra.mxu0 0
      %946 = vmatpush.bf16.msra.mxu0 %v934
      %947 = vmatpush.bf16.msra.mxu0 %v933
      %948 = vmatmul.bf16.gmra.mxu0 %v938
      %v949 = vpop.f32.mrf.mxu0
      %v950 = vadd.f32 0.0, %v949
      %v951 = vpop.f32.mrf.mxu0
      %952 = vdwg.mxu0
      %v953 = vadd.f32 %v918, %v950
      %s954 = scalar_lea.vmem %s165, 56
      %v955 = vld [vmem:[%s954] sm:$0xf]
      %v956 = vld [vmem:[%s394] sm:$0xf]
      %v957 = vld [vmem:[%s394 + $0x4] sm:$0xf]
      %v958 = vld [vmem:[%s394 + $0x8] sm:$0xf]
      %v959 = vld [vmem:[%s394 + $0xc] sm:$0xf]
      %v964 = vunpack.c.l.b16 %v956
      %v965 = vunpack.c.l.b16 %v957
      %v966 = vunpack.c.l.b16 %v958
      %v967 = vunpack.c.l.b16 %v959
      %v968 = vpack.c.b16 %v965, %v964
      %v969 = vpack.c.b16 %v967, %v966
      %v973 = vsel %vm194, %v955, 0
      %975 = vmatpush.bf16.msra.mxu0 0
      %976 = vmatpush.bf16.msra.mxu0 0
      %977 = vmatpush.bf16.msra.mxu0 0
      %978 = vmatpush.bf16.msra.mxu0 0
      %979 = vmatpush.bf16.msra.mxu0 0
      %980 = vmatpush.bf16.msra.mxu0 0
      %981 = vmatpush.bf16.msra.mxu0 %v969
      %982 = vmatpush.bf16.msra.mxu0 %v968
      %983 = vmatmul.bf16.gmra.mxu0 %v973
      %v984 = vpop.f32.mrf.mxu0
      %v985 = vadd.f32 0.0, %v984
      %v986 = vpop.f32.mrf.mxu0
      %987 = vdwg.mxu0
      %v988 = vadd.f32 %v953, %v985
      %s989 = scalar_lea.vmem %s165, 60
      %v990 = vld [vmem:[%s989] sm:$0xf]
      %v991 = vld [vmem:[%s430] sm:$0xf]
      %v992 = vld [vmem:[%s430 + $0x4] sm:$0xf]
      %v993 = vld [vmem:[%s430 + $0x8] sm:$0xf]
      %v994 = vld [vmem:[%s430 + $0xc] sm:$0xf]
      %v999 = vunpack.c.l.b16 %v991
      %v1000 = vunpack.c.l.b16 %v992
      %v1001 = vunpack.c.l.b16 %v993
      %v1002 = vunpack.c.l.b16 %v994
      %v1003 = vpack.c.b16 %v1000, %v999
      %v1004 = vpack.c.b16 %v1002, %v1001
      %v1008 = vsel %vm194, %v990, 0
      %1010 = vmatpush.bf16.msra.mxu0 0
      %1011 = vmatpush.bf16.msra.mxu0 0
      %1012 = vmatpush.bf16.msra.mxu0 0
      %1013 = vmatpush.bf16.msra.mxu0 0
      %1014 = vmatpush.bf16.msra.mxu0 0
      %1015 = vmatpush.bf16.msra.mxu0 0
      %1016 = vmatpush.bf16.msra.mxu0 %v1004
      %1017 = vmatpush.bf16.msra.mxu0 %v1003
      %1018 = vmatmul.bf16.gmra.mxu0 %v1008
      %v1019 = vpop.f32.mrf.mxu0
      %v1020 = vadd.f32 0.0, %v1019
      %v1021 = vpop.f32.mrf.mxu0
      %1022 = vdwg.mxu0
      %v1023 = vadd.f32 %v988, %v1020
      %v1024 = vmax.f32 %v1023, 0.0
      %v1025 = vpack.c.bf16 %v1024, %v1024
      %s1026 = scalar_lea.vmem %s170, 8
      %1027 = vst.msk [vmem:[%s1026] sm:$0xf] %vm466, %v1025
      %v1028 = vld [vmem:[%s884] sm:$0xf]
      %v1029 = vld [vmem:[%s1] sm:$0xf]
      %v1030 = vld [vmem:[%s1 + $0x4] sm:$0xf]
      %v1031 = vld [vmem:[%s1 + $0x8] sm:$0xf]
      %v1032 = vld [vmem:[%s1 + $0xc] sm:$0xf]
      %v1037 = vunpack.c.l.b16 %v1029
      %v1038 = vunpack.c.l.b16 %v1030
      %v1039 = vunpack.c.l.b16 %v1031
      %v1040 = vunpack.c.l.b16 %v1032
      %v1041 = vpack.c.b16 %v1038, %v1037
      %v1042 = vpack.c.b16 %v1040, %v1039
      %v1046 = vsel %vm194, %v1028, 0
      %1048 = vmatpush.bf16.msra.mxu0 0
      %1049 = vmatpush.bf16.msra.mxu0 0
      %1050 = vmatpush.bf16.msra.mxu0 0
      %1051 = vmatpush.bf16.msra.mxu0 0
      %1052 = vmatpush.bf16.msra.mxu0 0
      %1053 = vmatpush.bf16.msra.mxu0 0
      %1054 = vmatpush.bf16.msra.mxu0 %v1042
      %1055 = vmatpush.bf16.msra.mxu0 %v1041
      %1056 = vmatmul.bf16.gmra.mxu0 %v1046
      %v1057 = vpop.f32.mrf.mxu0
      %v1058 = vadd.f32 0.0, %v1057
      %v1059 = vpop.f32.mrf.mxu0
      %1060 = vdwg.mxu0
      %v1061 = vadd.f32 %v176, %v1058
      %v1062 = vld [vmem:[%s919] sm:$0xf]
      %v1063 = vld [vmem:[%s214] sm:$0xf]
      %v1064 = vld [vmem:[%s214 + $0x4] sm:$0xf]
      %v1065 = vld [vmem:[%s214 + $0x8] sm:$0xf]
      %v1066 = vld [vmem:[%s214 + $0xc] sm:$0xf]
      %v1071 = vunpack.c.l.b16 %v1063
      %v1072 = vunpack.c.l.b16 %v1064
      %v1073 = vunpack.c.l.b16 %v1065
      %v1074 = vunpack.c.l.b16 %v1066
      %v1075 = vpack.c.b16 %v1072, %v1071
      %v1076 = vpack.c.b16 %v1074, %v1073
      %v1080 = vsel %vm194, %v1062, 0
      %1082 = vmatpush.bf16.msra.mxu0 0
      %1083 = vmatpush.bf16.msra.mxu0 0
      %1084 = vmatpush.bf16.msra.mxu0 0
      %1085 = vmatpush.bf16.msra.mxu0 0
      %1086 = vmatpush.bf16.msra.mxu0 0
      %1087 = vmatpush.bf16.msra.mxu0 0
      %1088 = vmatpush.bf16.msra.mxu0 %v1076
      %1089 = vmatpush.bf16.msra.mxu0 %v1075
      %1090 = vmatmul.bf16.gmra.mxu0 %v1080
      %v1091 = vpop.f32.mrf.mxu0
      %v1092 = vadd.f32 0.0, %v1091
      %v1093 = vpop.f32.mrf.mxu0
      %1094 = vdwg.mxu0
      %v1095 = vadd.f32 %v1061, %v1092
      %v1096 = vld [vmem:[%s954] sm:$0xf]
      %v1097 = vld [vmem:[%s250] sm:$0xf]
      %v1098 = vld [vmem:[%s250 + $0x4] sm:$0xf]
      %v1099 = vld [vmem:[%s250 + $0x8] sm:$0xf]
      %v1100 = vld [vmem:[%s250 + $0xc] sm:$0xf]
      %v1105 = vunpack.c.l.b16 %v1097
      %v1106 = vunpack.c.l.b16 %v1098
      %v1107 = vunpack.c.l.b16 %v1099
      %v1108 = vunpack.c.l.b16 %v1100
      %v1109 = vpack.c.b16 %v1106, %v1105
      %v1110 = vpack.c.b16 %v1108, %v1107
      %v1114 = vsel %vm194, %v1096, 0
      %1116 = vmatpush.bf16.msra.mxu0 0
      %1117 = vmatpush.bf16.msra.mxu0 0
      %1118 = vmatpush.bf16.msra.mxu0 0
      %1119 = vmatpush.bf16.msra.mxu0 0
      %1120 = vmatpush.bf16.msra.mxu0 0
      %1121 = vmatpush.bf16.msra.mxu0 0
      %1122 = vmatpush.bf16.msra.mxu0 %v1110
      %1123 = vmatpush.bf16.msra.mxu0 %v1109
      %1124 = vmatmul.bf16.gmra.mxu0 %v1114
      %v1125 = vpop.f32.mrf.mxu0
      %v1126 = vadd.f32 0.0, %v1125
      %v1127 = vpop.f32.mrf.mxu0
      %1128 = vdwg.mxu0
      %v1129 = vadd.f32 %v1095, %v1126
      %v1130 = vld [vmem:[%s989] sm:$0xf]
      %v1131 = vld [vmem:[%s286] sm:$0xf]
      %v1132 = vld [vmem:[%s286 + $0x4] sm:$0xf]
      %v1133 = vld [vmem:[%s286 + $0x8] sm:$0xf]
      %v1134 = vld [vmem:[%s286 + $0xc] sm:$0xf]
      %v1139 = vunpack.c.l.b16 %v1131
      %v1140 = vunpack.c.l.b16 %v1132
      %v1141 = vunpack.c.l.b16 %v1133
      %v1142 = vunpack.c.l.b16 %v1134
      %v1143 = vpack.c.b16 %v1140, %v1139
      %v1144 = vpack.c.b16 %v1142, %v1141
      %v1148 = vsel %vm194, %v1130, 0
      %1150 = vmatpush.bf16.msra.mxu0 0
      %1151 = vmatpush.bf16.msra.mxu0 0
      %1152 = vmatpush.bf16.msra.mxu0 0
      %1153 = vmatpush.bf16.msra.mxu0 0
      %1154 = vmatpush.bf16.msra.mxu0 0
      %1155 = vmatpush.bf16.msra.mxu0 0
      %1156 = vmatpush.bf16.msra.mxu0 %v1144
      %1157 = vmatpush.bf16.msra.mxu0 %v1143
      %1158 = vmatmul.bf16.gmra.mxu0 %v1148
      %v1159 = vpop.f32.mrf.mxu0
      %v1160 = vadd.f32 0.0, %v1159
      %v1161 = vpop.f32.mrf.mxu0
      %1162 = vdwg.mxu0
      %v1163 = vadd.f32 %v1129, %v1160
      %s1164 = scalar_lea.vmem %s165, 64
      %v1165 = vld [vmem:[%s1164] sm:$0xf]
      %v1166 = vld [vmem:[%s322] sm:$0xf]
      %v1167 = vld [vmem:[%s322 + $0x4] sm:$0xf]
      %v1168 = vld [vmem:[%s322 + $0x8] sm:$0xf]
      %v1169 = vld [vmem:[%s322 + $0xc] sm:$0xf]
      %v1174 = vunpack.c.l.b16 %v1166
      %v1175 = vunpack.c.l.b16 %v1167
      %v1176 = vunpack.c.l.b16 %v1168
      %v1177 = vunpack.c.l.b16 %v1169
      %v1178 = vpack.c.b16 %v1175, %v1174
      %v1179 = vpack.c.b16 %v1177, %v1176
      %v1183 = vsel %vm194, %v1165, 0
      %1185 = vmatpush.bf16.msra.mxu0 0
      %1186 = vmatpush.bf16.msra.mxu0 0
      %1187 = vmatpush.bf16.msra.mxu0 0
      %1188 = vmatpush.bf16.msra.mxu0 0
      %1189 = vmatpush.bf16.msra.mxu0 0
      %1190 = vmatpush.bf16.msra.mxu0 0
      %1191 = vmatpush.bf16.msra.mxu0 %v1179
      %1192 = vmatpush.bf16.msra.mxu0 %v1178
      %1193 = vmatmul.bf16.gmra.mxu0 %v1183
      %v1194 = vpop.f32.mrf.mxu0
      %v1195 = vadd.f32 0.0, %v1194
      %v1196 = vpop.f32.mrf.mxu0
      %1197 = vdwg.mxu0
      %v1198 = vadd.f32 %v1163, %v1195
      %s1199 = scalar_lea.vmem %s165, 68
      %v1200 = vld [vmem:[%s1199] sm:$0xf]
      %v1201 = vld [vmem:[%s358] sm:$0xf]
      %v1202 = vld [vmem:[%s358 + $0x4] sm:$0xf]
      %v1203 = vld [vmem:[%s358 + $0x8] sm:$0xf]
      %v1204 = vld [vmem:[%s358 + $0xc] sm:$0xf]
      %v1209 = vunpack.c.l.b16 %v1201
      %v1210 = vunpack.c.l.b16 %v1202
      %v1211 = vunpack.c.l.b16 %v1203
      %v1212 = vunpack.c.l.b16 %v1204
      %v1213 = vpack.c.b16 %v1210, %v1209
      %v1214 = vpack.c.b16 %v1212, %v1211
      %v1218 = vsel %vm194, %v1200, 0
      %1220 = vmatpush.bf16.msra.mxu0 0
      %1221 = vmatpush.bf16.msra.mxu0 0
      %1222 = vmatpush.bf16.msra.mxu0 0
      %1223 = vmatpush.bf16.msra.mxu0 0
      %1224 = vmatpush.bf16.msra.mxu0 0
      %1225 = vmatpush.bf16.msra.mxu0 0
      %1226 = vmatpush.bf16.msra.mxu0 %v1214
      %1227 = vmatpush.bf16.msra.mxu0 %v1213
      %1228 = vmatmul.bf16.gmra.mxu0 %v1218
      %v1229 = vpop.f32.mrf.mxu0
      %v1230 = vadd.f32 0.0, %v1229
      %v1231 = vpop.f32.mrf.mxu0
      %1232 = vdwg.mxu0
      %v1233 = vadd.f32 %v1198, %v1230
      %s1234 = scalar_lea.vmem %s165, 72
      %v1235 = vld [vmem:[%s1234] sm:$0xf]
      %v1236 = vld [vmem:[%s394] sm:$0xf]
      %v1237 = vld [vmem:[%s394 + $0x4] sm:$0xf]
      %v1238 = vld [vmem:[%s394 + $0x8] sm:$0xf]
      %v1239 = vld [vmem:[%s394 + $0xc] sm:$0xf]
      %v1244 = vunpack.c.l.b16 %v1236
      %v1245 = vunpack.c.l.b16 %v1237
      %v1246 = vunpack.c.l.b16 %v1238
      %v1247 = vunpack.c.l.b16 %v1239
      %v1248 = vpack.c.b16 %v1245, %v1244
      %v1249 = vpack.c.b16 %v1247, %v1246
      %v1253 = vsel %vm194, %v1235, 0
      %1255 = vmatpush.bf16.msra.mxu0 0
      %1256 = vmatpush.bf16.msra.mxu0 0
      %1257 = vmatpush.bf16.msra.mxu0 0
      %1258 = vmatpush.bf16.msra.mxu0 0
      %1259 = vmatpush.bf16.msra.mxu0 0
      %1260 = vmatpush.bf16.msra.mxu0 0
      %1261 = vmatpush.bf16.msra.mxu0 %v1249
      %1262 = vmatpush.bf16.msra.mxu0 %v1248
      %1263 = vmatmul.bf16.gmra.mxu0 %v1253
      %v1264 = vpop.f32.mrf.mxu0
      %v1265 = vadd.f32 0.0, %v1264
      %v1266 = vpop.f32.mrf.mxu0
      %1267 = vdwg.mxu0
      %v1268 = vadd.f32 %v1233, %v1265
      %s1269 = scalar_lea.vmem %s165, 76
      %v1270 = vld [vmem:[%s1269] sm:$0xf]
      %v1271 = vld [vmem:[%s430] sm:$0xf]
      %v1272 = vld [vmem:[%s430 + $0x4] sm:$0xf]
      %v1273 = vld [vmem:[%s430 + $0x8] sm:$0xf]
      %v1274 = vld [vmem:[%s430 + $0xc] sm:$0xf]
      %v1279 = vunpack.c.l.b16 %v1271
      %v1280 = vunpack.c.l.b16 %v1272
      %v1281 = vunpack.c.l.b16 %v1273
      %v1282 = vunpack.c.l.b16 %v1274
      %v1283 = vpack.c.b16 %v1280, %v1279
      %v1284 = vpack.c.b16 %v1282, %v1281
      %v1288 = vsel %vm194, %v1270, 0
      %1290 = vmatpush.bf16.msra.mxu0 0
      %1291 = vmatpush.bf16.msra.mxu0 0
      %1292 = vmatpush.bf16.msra.mxu0 0
      %1293 = vmatpush.bf16.msra.mxu0 0
      %1294 = vmatpush.bf16.msra.mxu0 0
      %1295 = vmatpush.bf16.msra.mxu0 0
      %1296 = vmatpush.bf16.msra.mxu0 %v1284
      %1297 = vmatpush.bf16.msra.mxu0 %v1283
      %1298 = vmatmul.bf16.gmra.mxu0 %v1288
      %v1299 = vpop.f32.mrf.mxu0
      %v1300 = vadd.f32 0.0, %v1299
      %v1301 = vpop.f32.mrf.mxu0
      %1302 = vdwg.mxu0
      %v1303 = vadd.f32 %v1268, %v1300
      %v1304 = vmax.f32 %v1303, 0.0
      %v1305 = vpack.c.bf16 %v1304, %v1304
      %s1306 = scalar_lea.vmem %s170, 12
      %1307 = vst.msk [vmem:[%s1306] sm:$0xf] %vm466, %v1305
      %v1308 = vld [vmem:[%s1164] sm:$0xf]
      %v1309 = vld [vmem:[%s1] sm:$0xf]
      %v1310 = vld [vmem:[%s1 + $0x4] sm:$0xf]
      %v1311 = vld [vmem:[%s1 + $0x8] sm:$0xf]
      %v1312 = vld [vmem:[%s1 + $0xc] sm:$0xf]
      %v1317 = vunpack.c.l.b16 %v1309
      %v1318 = vunpack.c.l.b16 %v1310
      %v1319 = vunpack.c.l.b16 %v1311
      %v1320 = vunpack.c.l.b16 %v1312
      %v1321 = vpack.c.b16 %v1318, %v1317
      %v1322 = vpack.c.b16 %v1320, %v1319
      %v1326 = vsel %vm194, %v1308, 0
      %1328 = vmatpush.bf16.msra.mxu0 0
      %1329 = vmatpush.bf16.msra.mxu0 0
      %1330 = vmatpush.bf16.msra.mxu0 0
      %1331 = vmatpush.bf16.msra.mxu0 0
      %1332 = vmatpush.bf16.msra.mxu0 0
      %1333 = vmatpush.bf16.msra.mxu0 0
      %1334 = vmatpush.bf16.msra.mxu0 %v1322
      %1335 = vmatpush.bf16.msra.mxu0 %v1321
      %1336 = vmatmul.bf16.gmra.mxu0 %v1326
      %v1337 = vpop.f32.mrf.mxu0
      %v1338 = vadd.f32 0.0, %v1337
      %v1339 = vpop.f32.mrf.mxu0
      %1340 = vdwg.mxu0
      %v1341 = vadd.f32 %v176, %v1338
      %v1342 = vld [vmem:[%s1199] sm:$0xf]
      %v1343 = vld [vmem:[%s214] sm:$0xf]
      %v1344 = vld [vmem:[%s214 + $0x4] sm:$0xf]
      %v1345 = vld [vmem:[%s214 + $0x8] sm:$0xf]
      %v1346 = vld [vmem:[%s214 + $0xc] sm:$0xf]
      %v1351 = vunpack.c.l.b16 %v1343
      %v1352 = vunpack.c.l.b16 %v1344
      %v1353 = vunpack.c.l.b16 %v1345
      %v1354 = vunpack.c.l.b16 %v1346
      %v1355 = vpack.c.b16 %v1352, %v1351
      %v1356 = vpack.c.b16 %v1354, %v1353
      %v1360 = vsel %vm194, %v1342, 0
      %1362 = vmatpush.bf16.msra.mxu0 0
      %1363 = vmatpush.bf16.msra.mxu0 0
      %1364 = vmatpush.bf16.msra.mxu0 0
      %1365 = vmatpush.bf16.msra.mxu0 0
      %1366 = vmatpush.bf16.msra.mxu0 0
      %1367 = vmatpush.bf16.msra.mxu0 0
      %1368 = vmatpush.bf16.msra.mxu0 %v1356
      %1369 = vmatpush.bf16.msra.mxu0 %v1355
      %1370 = vmatmul.bf16.gmra.mxu0 %v1360
      %v1371 = vpop.f32.mrf.mxu0
      %v1372 = vadd.f32 0.0, %v1371
      %v1373 = vpop.f32.mrf.mxu0
      %1374 = vdwg.mxu0
      %v1375 = vadd.f32 %v1341, %v1372
      %v1376 = vld [vmem:[%s1234] sm:$0xf]
      %v1377 = vld [vmem:[%s250] sm:$0xf]
      %v1378 = vld [vmem:[%s250 + $0x4] sm:$0xf]
      %v1379 = vld [vmem:[%s250 + $0x8] sm:$0xf]
      %v1380 = vld [vmem:[%s250 + $0xc] sm:$0xf]
      %v1385 = vunpack.c.l.b16 %v1377
      %v1386 = vunpack.c.l.b16 %v1378
      %v1387 = vunpack.c.l.b16 %v1379
      %v1388 = vunpack.c.l.b16 %v1380
      %v1389 = vpack.c.b16 %v1386, %v1385
      %v1390 = vpack.c.b16 %v1388, %v1387
      %v1394 = vsel %vm194, %v1376, 0
      %1396 = vmatpush.bf16.msra.mxu0 0
      %1397 = vmatpush.bf16.msra.mxu0 0
      %1398 = vmatpush.bf16.msra.mxu0 0
      %1399 = vmatpush.bf16.msra.mxu0 0
      %1400 = vmatpush.bf16.msra.mxu0 0
      %1401 = vmatpush.bf16.msra.mxu0 0
      %1402 = vmatpush.bf16.msra.mxu0 %v1390
      %1403 = vmatpush.bf16.msra.mxu0 %v1389
      %1404 = vmatmul.bf16.gmra.mxu0 %v1394
      %v1405 = vpop.f32.mrf.mxu0
      %v1406 = vadd.f32 0.0, %v1405
      %v1407 = vpop.f32.mrf.mxu0
      %1408 = vdwg.mxu0
      %v1409 = vadd.f32 %v1375, %v1406
      %v1410 = vld [vmem:[%s1269] sm:$0xf]
      %v1411 = vld [vmem:[%s286] sm:$0xf]
      %v1412 = vld [vmem:[%s286 + $0x4] sm:$0xf]
      %v1413 = vld [vmem:[%s286 + $0x8] sm:$0xf]
      %v1414 = vld [vmem:[%s286 + $0xc] sm:$0xf]
      %v1419 = vunpack.c.l.b16 %v1411
      %v1420 = vunpack.c.l.b16 %v1412
      %v1421 = vunpack.c.l.b16 %v1413
      %v1422 = vunpack.c.l.b16 %v1414
      %v1423 = vpack.c.b16 %v1420, %v1419
      %v1424 = vpack.c.b16 %v1422, %v1421
      %v1428 = vsel %vm194, %v1410, 0
      %1430 = vmatpush.bf16.msra.mxu0 0
      %1431 = vmatpush.bf16.msra.mxu0 0
      %1432 = vmatpush.bf16.msra.mxu0 0
      %1433 = vmatpush.bf16.msra.mxu0 0
      %1434 = vmatpush.bf16.msra.mxu0 0
      %1435 = vmatpush.bf16.msra.mxu0 0
      %1436 = vmatpush.bf16.msra.mxu0 %v1424
      %1437 = vmatpush.bf16.msra.mxu0 %v1423
      %1438 = vmatmul.bf16.gmra.mxu0 %v1428
      %v1439 = vpop.f32.mrf.mxu0
      %v1440 = vadd.f32 0.0, %v1439
      %v1441 = vpop.f32.mrf.mxu0
      %1442 = vdwg.mxu0
      %v1443 = vadd.f32 %v1409, %v1440
      %s1444 = scalar_lea.vmem %s165, 80
      %v1445 = vld [vmem:[%s1444] sm:$0xf]
      %v1446 = vld [vmem:[%s322] sm:$0xf]
      %v1447 = vld [vmem:[%s322 + $0x4] sm:$0xf]
      %v1448 = vld [vmem:[%s322 + $0x8] sm:$0xf]
      %v1449 = vld [vmem:[%s322 + $0xc] sm:$0xf]
      %v1454 = vunpack.c.l.b16 %v1446
      %v1455 = vunpack.c.l.b16 %v1447
      %v1456 = vunpack.c.l.b16 %v1448
      %v1457 = vunpack.c.l.b16 %v1449
      %v1458 = vpack.c.b16 %v1455, %v1454
      %v1459 = vpack.c.b16 %v1457, %v1456
      %v1463 = vsel %vm194, %v1445, 0
      %1465 = vmatpush.bf16.msra.mxu0 0
      %1466 = vmatpush.bf16.msra.mxu0 0
      %1467 = vmatpush.bf16.msra.mxu0 0
      %1468 = vmatpush.bf16.msra.mxu0 0
      %1469 = vmatpush.bf16.msra.mxu0 0
      %1470 = vmatpush.bf16.msra.mxu0 0
      %1471 = vmatpush.bf16.msra.mxu0 %v1459
      %1472 = vmatpush.bf16.msra.mxu0 %v1458
      %1473 = vmatmul.bf16.gmra.mxu0 %v1463
      %v1474 = vpop.f32.mrf.mxu0
      %v1475 = vadd.f32 0.0, %v1474
      %v1476 = vpop.f32.mrf.mxu0
      %1477 = vdwg.mxu0
      %v1478 = vadd.f32 %v1443, %v1475
      %s1479 = scalar_lea.vmem %s165, 84
      %v1480 = vld [vmem:[%s1479] sm:$0xf]
      %v1481 = vld [vmem:[%s358] sm:$0xf]
      %v1482 = vld [vmem:[%s358 + $0x4] sm:$0xf]
      %v1483 = vld [vmem:[%s358 + $0x8] sm:$0xf]
      %v1484 = vld [vmem:[%s358 + $0xc] sm:$0xf]
      %v1489 = vunpack.c.l.b16 %v1481
      %v1490 = vunpack.c.l.b16 %v1482
      %v1491 = vunpack.c.l.b16 %v1483
      %v1492 = vunpack.c.l.b16 %v1484
      %v1493 = vpack.c.b16 %v1490, %v1489
      %v1494 = vpack.c.b16 %v1492, %v1491
      %v1498 = vsel %vm194, %v1480, 0
      %1500 = vmatpush.bf16.msra.mxu0 0
      %1501 = vmatpush.bf16.msra.mxu0 0
      %1502 = vmatpush.bf16.msra.mxu0 0
      %1503 = vmatpush.bf16.msra.mxu0 0
      %1504 = vmatpush.bf16.msra.mxu0 0
      %1505 = vmatpush.bf16.msra.mxu0 0
      %1506 = vmatpush.bf16.msra.mxu0 %v1494
      %1507 = vmatpush.bf16.msra.mxu0 %v1493
      %1508 = vmatmul.bf16.gmra.mxu0 %v1498
      %v1509 = vpop.f32.mrf.mxu0
      %v1510 = vadd.f32 0.0, %v1509
      %v1511 = vpop.f32.mrf.mxu0
      %1512 = vdwg.mxu0
      %v1513 = vadd.f32 %v1478, %v1510
      %s1514 = scalar_lea.vmem %s165, 88
      %v1515 = vld [vmem:[%s1514] sm:$0xf]
      %v1516 = vld [vmem:[%s394] sm:$0xf]
      %v1517 = vld [vmem:[%s394 + $0x4] sm:$0xf]
      %v1518 = vld [vmem:[%s394 + $0x8] sm:$0xf]
      %v1519 = vld [vmem:[%s394 + $0xc] sm:$0xf]
      %v1524 = vunpack.c.l.b16 %v1516
      %v1525 = vunpack.c.l.b16 %v1517
      %v1526 = vunpack.c.l.b16 %v1518
      %v1527 = vunpack.c.l.b16 %v1519
      %v1528 = vpack.c.b16 %v1525, %v1524
      %v1529 = vpack.c.b16 %v1527, %v1526
      %v1533 = vsel %vm194, %v1515, 0
      %1535 = vmatpush.bf16.msra.mxu0 0
      %1536 = vmatpush.bf16.msra.mxu0 0
      %1537 = vmatpush.bf16.msra.mxu0 0
      %1538 = vmatpush.bf16.msra.mxu0 0
      %1539 = vmatpush.bf16.msra.mxu0 0
      %1540 = vmatpush.bf16.msra.mxu0 0
      %1541 = vmatpush.bf16.msra.mxu0 %v1529
      %1542 = vmatpush.bf16.msra.mxu0 %v1528
      %1543 = vmatmul.bf16.gmra.mxu0 %v1533
      %v1544 = vpop.f32.mrf.mxu0
      %v1545 = vadd.f32 0.0, %v1544
      %v1546 = vpop.f32.mrf.mxu0
      %1547 = vdwg.mxu0
      %v1548 = vadd.f32 %v1513, %v1545
      %s1549 = scalar_lea.vmem %s165, 92
      %v1550 = vld [vmem:[%s1549] sm:$0xf]
      %v1551 = vld [vmem:[%s430] sm:$0xf]
      %v1552 = vld [vmem:[%s430 + $0x4] sm:$0xf]
      %v1553 = vld [vmem:[%s430 + $0x8] sm:$0xf]
      %v1554 = vld [vmem:[%s430 + $0xc] sm:$0xf]
      %v1559 = vunpack.c.l.b16 %v1551
      %v1560 = vunpack.c.l.b16 %v1552
      %v1561 = vunpack.c.l.b16 %v1553
      %v1562 = vunpack.c.l.b16 %v1554
      %v1563 = vpack.c.b16 %v1560, %v1559
      %v1564 = vpack.c.b16 %v1562, %v1561
      %v1568 = vsel %vm194, %v1550, 0
      %1570 = vmatpush.bf16.msra.mxu0 0
      %1571 = vmatpush.bf16.msra.mxu0 0
      %1572 = vmatpush.bf16.msra.mxu0 0
      %1573 = vmatpush.bf16.msra.mxu0 0
      %1574 = vmatpush.bf16.msra.mxu0 0
      %1575 = vmatpush.bf16.msra.mxu0 0
      %1576 = vmatpush.bf16.msra.mxu0 %v1564
      %1577 = vmatpush.bf16.msra.mxu0 %v1563
      %1578 = vmatmul.bf16.gmra.mxu0 %v1568
      %v1579 = vpop.f32.mrf.mxu0
      %v1580 = vadd.f32 0.0, %v1579
      %v1581 = vpop.f32.mrf.mxu0
      %1582 = vdwg.mxu0
      %v1583 = vadd.f32 %v1548, %v1580
      %v1584 = vmax.f32 %v1583, 0.0
      %v1585 = vpack.c.bf16 %v1584, %v1584
      %s1586 = scalar_lea.vmem %s170, 16
      %1587 = vst.msk [vmem:[%s1586] sm:$0xf] %vm466, %v1585
      %v1588 = vld [vmem:[%s1444] sm:$0xf]
      %v1589 = vld [vmem:[%s1] sm:$0xf]
      %v1590 = vld [vmem:[%s1 + $0x4] sm:$0xf]
      %v1591 = vld [vmem:[%s1 + $0x8] sm:$0xf]
      %v1592 = vld [vmem:[%s1 + $0xc] sm:$0xf]
      %v1597 = vunpack.c.l.b16 %v1589
      %v1598 = vunpack.c.l.b16 %v1590
      %v1599 = vunpack.c.l.b16 %v1591
      %v1600 = vunpack.c.l.b16 %v1592
      %v1601 = vpack.c.b16 %v1598, %v1597
      %v1602 = vpack.c.b16 %v1600, %v1599
      %v1606 = vsel %vm194, %v1588, 0
      %1608 = vmatpush.bf16.msra.mxu0 0
      %1609 = vmatpush.bf16.msra.mxu0 0
      %1610 = vmatpush.bf16.msra.mxu0 0
      %1611 = vmatpush.bf16.msra.mxu0 0
      %1612 = vmatpush.bf16.msra.mxu0 0
      %1613 = vmatpush.bf16.msra.mxu0 0
      %1614 = vmatpush.bf16.msra.mxu0 %v1602
      %1615 = vmatpush.bf16.msra.mxu0 %v1601
      %1616 = vmatmul.bf16.gmra.mxu0 %v1606
      %v1617 = vpop.f32.mrf.mxu0
      %v1618 = vadd.f32 0.0, %v1617
      %v1619 = vpop.f32.mrf.mxu0
      %1620 = vdwg.mxu0
      %v1621 = vadd.f32 %v176, %v1618
      %v1622 = vld [vmem:[%s1479] sm:$0xf]
      %v1623 = vld [vmem:[%s214] sm:$0xf]
      %v1624 = vld [vmem:[%s214 + $0x4] sm:$0xf]
      %v1625 = vld [vmem:[%s214 + $0x8] sm:$0xf]
      %v1626 = vld [vmem:[%s214 + $0xc] sm:$0xf]
      %v1631 = vunpack.c.l.b16 %v1623
      %v1632 = vunpack.c.l.b16 %v1624
      %v1633 = vunpack.c.l.b16 %v1625
      %v1634 = vunpack.c.l.b16 %v1626
      %v1635 = vpack.c.b16 %v1632, %v1631
      %v1636 = vpack.c.b16 %v1634, %v1633
      %v1640 = vsel %vm194, %v1622, 0
      %1642 = vmatpush.bf16.msra.mxu0 0
      %1643 = vmatpush.bf16.msra.mxu0 0
      %1644 = vmatpush.bf16.msra.mxu0 0
      %1645 = vmatpush.bf16.msra.mxu0 0
      %1646 = vmatpush.bf16.msra.mxu0 0
      %1647 = vmatpush.bf16.msra.mxu0 0
      %1648 = vmatpush.bf16.msra.mxu0 %v1636
      %1649 = vmatpush.bf16.msra.mxu0 %v1635
      %1650 = vmatmul.bf16.gmra.mxu0 %v1640
      %v1651 = vpop.f32.mrf.mxu0
      %v1652 = vadd.f32 0.0, %v1651
      %v1653 = vpop.f32.mrf.mxu0
      %1654 = vdwg.mxu0
      %v1655 = vadd.f32 %v1621, %v1652
      %v1656 = vld [vmem:[%s1514] sm:$0xf]
      %v1657 = vld [vmem:[%s250] sm:$0xf]
      %v1658 = vld [vmem:[%s250 + $0x4] sm:$0xf]
      %v1659 = vld [vmem:[%s250 + $0x8] sm:$0xf]
      %v1660 = vld [vmem:[%s250 + $0xc] sm:$0xf]
      %v1665 = vunpack.c.l.b16 %v1657
      %v1666 = vunpack.c.l.b16 %v1658
      %v1667 = vunpack.c.l.b16 %v1659
      %v1668 = vunpack.c.l.b16 %v1660
      %v1669 = vpack.c.b16 %v1666, %v1665
      %v1670 = vpack.c.b16 %v1668, %v1667
      %v1674 = vsel %vm194, %v1656, 0
      %1676 = vmatpush.bf16.msra.mxu0 0
      %1677 = vmatpush.bf16.msra.mxu0 0
      %1678 = vmatpush.bf16.msra.mxu0 0
      %1679 = vmatpush.bf16.msra.mxu0 0
      %1680 = vmatpush.bf16.msra.mxu0 0
      %1681 = vmatpush.bf16.msra.mxu0 0
      %1682 = vmatpush.bf16.msra.mxu0 %v1670
      %1683 = vmatpush.bf16.msra.mxu0 %v1669
      %1684 = vmatmul.bf16.gmra.mxu0 %v1674
      %v1685 = vpop.f32.mrf.mxu0
      %v1686 = vadd.f32 0.0, %v1685
      %v1687 = vpop.f32.mrf.mxu0
      %1688 = vdwg.mxu0
      %v1689 = vadd.f32 %v1655, %v1686
      %v1690 = vld [vmem:[%s1549] sm:$0xf]
      %v1691 = vld [vmem:[%s286] sm:$0xf]
      %v1692 = vld [vmem:[%s286 + $0x4] sm:$0xf]
      %v1693 = vld [vmem:[%s286 + $0x8] sm:$0xf]
      %v1694 = vld [vmem:[%s286 + $0xc] sm:$0xf]
      %v1699 = vunpack.c.l.b16 %v1691
      %v1700 = vunpack.c.l.b16 %v1692
      %v1701 = vunpack.c.l.b16 %v1693
      %v1702 = vunpack.c.l.b16 %v1694
      %v1703 = vpack.c.b16 %v1700, %v1699
      %v1704 = vpack.c.b16 %v1702, %v1701
      %v1708 = vsel %vm194, %v1690, 0
      %1710 = vmatpush.bf16.msra.mxu0 0
      %1711 = vmatpush.bf16.msra.mxu0 0
      %1712 = vmatpush.bf16.msra.mxu0 0
      %1713 = vmatpush.bf16.msra.mxu0 0
      %1714 = vmatpush.bf16.msra.mxu0 0
      %1715 = vmatpush.bf16.msra.mxu0 0
      %1716 = vmatpush.bf16.msra.mxu0 %v1704
      %1717 = vmatpush.bf16.msra.mxu0 %v1703
      %1718 = vmatmul.bf16.gmra.mxu0 %v1708
      %v1719 = vpop.f32.mrf.mxu0
      %v1720 = vadd.f32 0.0, %v1719
      %v1721 = vpop.f32.mrf.mxu0
      %1722 = vdwg.mxu0
      %v1723 = vadd.f32 %v1689, %v1720
      %s1724 = scalar_lea.vmem %s165, 96
      %v1725 = vld [vmem:[%s1724] sm:$0xf]
      %v1726 = vld [vmem:[%s322] sm:$0xf]
      %v1727 = vld [vmem:[%s322 + $0x4] sm:$0xf]
      %v1728 = vld [vmem:[%s322 + $0x8] sm:$0xf]
      %v1729 = vld [vmem:[%s322 + $0xc] sm:$0xf]
      %v1734 = vunpack.c.l.b16 %v1726
      %v1735 = vunpack.c.l.b16 %v1727
      %v1736 = vunpack.c.l.b16 %v1728
      %v1737 = vunpack.c.l.b16 %v1729
      %v1738 = vpack.c.b16 %v1735, %v1734
      %v1739 = vpack.c.b16 %v1737, %v1736
      %v1743 = vsel %vm194, %v1725, 0
      %1745 = vmatpush.bf16.msra.mxu0 0
      %1746 = vmatpush.bf16.msra.mxu0 0
      %1747 = vmatpush.bf16.msra.mxu0 0
      %1748 = vmatpush.bf16.msra.mxu0 0
      %1749 = vmatpush.bf16.msra.mxu0 0
      %1750 = vmatpush.bf16.msra.mxu0 0
      %1751 = vmatpush.bf16.msra.mxu0 %v1739
      %1752 = vmatpush.bf16.msra.mxu0 %v1738
      %1753 = vmatmul.bf16.gmra.mxu0 %v1743
      %v1754 = vpop.f32.mrf.mxu0
      %v1755 = vadd.f32 0.0, %v1754
      %v1756 = vpop.f32.mrf.mxu0
      %1757 = vdwg.mxu0
      %v1758 = vadd.f32 %v1723, %v1755
      %s1759 = scalar_lea.vmem %s165, 100
      %v1760 = vld [vmem:[%s1759] sm:$0xf]
      %v1761 = vld [vmem:[%s358] sm:$0xf]
      %v1762 = vld [vmem:[%s358 + $0x4] sm:$0xf]
      %v1763 = vld [vmem:[%s358 + $0x8] sm:$0xf]
      %v1764 = vld [vmem:[%s358 + $0xc] sm:$0xf]
      %v1769 = vunpack.c.l.b16 %v1761
      %v1770 = vunpack.c.l.b16 %v1762
      %v1771 = vunpack.c.l.b16 %v1763
      %v1772 = vunpack.c.l.b16 %v1764
      %v1773 = vpack.c.b16 %v1770, %v1769
      %v1774 = vpack.c.b16 %v1772, %v1771
      %v1778 = vsel %vm194, %v1760, 0
      %1780 = vmatpush.bf16.msra.mxu0 0
      %1781 = vmatpush.bf16.msra.mxu0 0
      %1782 = vmatpush.bf16.msra.mxu0 0
      %1783 = vmatpush.bf16.msra.mxu0 0
      %1784 = vmatpush.bf16.msra.mxu0 0
      %1785 = vmatpush.bf16.msra.mxu0 0
      %1786 = vmatpush.bf16.msra.mxu0 %v1774
      %1787 = vmatpush.bf16.msra.mxu0 %v1773
      %1788 = vmatmul.bf16.gmra.mxu0 %v1778
      %v1789 = vpop.f32.mrf.mxu0
      %v1790 = vadd.f32 0.0, %v1789
      %v1791 = vpop.f32.mrf.mxu0
      %1792 = vdwg.mxu0
      %v1793 = vadd.f32 %v1758, %v1790
      %s1794 = scalar_lea.vmem %s165, 104
      %v1795 = vld [vmem:[%s1794] sm:$0xf]
      %v1796 = vld [vmem:[%s394] sm:$0xf]
      %v1797 = vld [vmem:[%s394 + $0x4] sm:$0xf]
      %v1798 = vld [vmem:[%s394 + $0x8] sm:$0xf]
      %v1799 = vld [vmem:[%s394 + $0xc] sm:$0xf]
      %v1804 = vunpack.c.l.b16 %v1796
      %v1805 = vunpack.c.l.b16 %v1797
      %v1806 = vunpack.c.l.b16 %v1798
      %v1807 = vunpack.c.l.b16 %v1799
      %v1808 = vpack.c.b16 %v1805, %v1804
      %v1809 = vpack.c.b16 %v1807, %v1806
      %v1813 = vsel %vm194, %v1795, 0
      %1815 = vmatpush.bf16.msra.mxu0 0
      %1816 = vmatpush.bf16.msra.mxu0 0
      %1817 = vmatpush.bf16.msra.mxu0 0
      %1818 = vmatpush.bf16.msra.mxu0 0
      %1819 = vmatpush.bf16.msra.mxu0 0
      %1820 = vmatpush.bf16.msra.mxu0 0
      %1821 = vmatpush.bf16.msra.mxu0 %v1809
      %1822 = vmatpush.bf16.msra.mxu0 %v1808
      %1823 = vmatmul.bf16.gmra.mxu0 %v1813
      %v1824 = vpop.f32.mrf.mxu0
      %v1825 = vadd.f32 0.0, %v1824
      %v1826 = vpop.f32.mrf.mxu0
      %1827 = vdwg.mxu0
      %v1828 = vadd.f32 %v1793, %v1825
      %s1829 = scalar_lea.vmem %s165, 108
      %v1830 = vld [vmem:[%s1829] sm:$0xf]
      %v1831 = vld [vmem:[%s430] sm:$0xf]
      %v1832 = vld [vmem:[%s430 + $0x4] sm:$0xf]
      %v1833 = vld [vmem:[%s430 + $0x8] sm:$0xf]
      %v1834 = vld [vmem:[%s430 + $0xc] sm:$0xf]
      %v1839 = vunpack.c.l.b16 %v1831
      %v1840 = vunpack.c.l.b16 %v1832
      %v1841 = vunpack.c.l.b16 %v1833
      %v1842 = vunpack.c.l.b16 %v1834
      %v1843 = vpack.c.b16 %v1840, %v1839
      %v1844 = vpack.c.b16 %v1842, %v1841
      %v1848 = vsel %vm194, %v1830, 0
      %1850 = vmatpush.bf16.msra.mxu0 0
      %1851 = vmatpush.bf16.msra.mxu0 0
      %1852 = vmatpush.bf16.msra.mxu0 0
      %1853 = vmatpush.bf16.msra.mxu0 0
      %1854 = vmatpush.bf16.msra.mxu0 0
      %1855 = vmatpush.bf16.msra.mxu0 0
      %1856 = vmatpush.bf16.msra.mxu0 %v1844
      %1857 = vmatpush.bf16.msra.mxu0 %v1843
      %1858 = vmatmul.bf16.gmra.mxu0 %v1848
      %v1859 = vpop.f32.mrf.mxu0
      %v1860 = vadd.f32 0.0, %v1859
      %v1861 = vpop.f32.mrf.mxu0
      %1862 = vdwg.mxu0
      %v1863 = vadd.f32 %v1828, %v1860
      %v1864 = vmax.f32 %v1863, 0.0
      %v1865 = vpack.c.bf16 %v1864, %v1864
      %s1866 = scalar_lea.vmem %s170, 20
      %1867 = vst.msk [vmem:[%s1866] sm:$0xf] %vm466, %v1865
      %v1868 = vld [vmem:[%s1724] sm:$0xf]
      %v1869 = vld [vmem:[%s1] sm:$0xf]
      %v1870 = vld [vmem:[%s1 + $0x4] sm:$0xf]
      %v1871 = vld [vmem:[%s1 + $0x8] sm:$0xf]
      %v1872 = vld [vmem:[%s1 + $0xc] sm:$0xf]
      %v1877 = vunpack.c.l.b16 %v1869
      %v1878 = vunpack.c.l.b16 %v1870
      %v1879 = vunpack.c.l.b16 %v1871
      %v1880 = vunpack.c.l.b16 %v1872
      %v1881 = vpack.c.b16 %v1878, %v1877
      %v1882 = vpack.c.b16 %v1880, %v1879
      %v1886 = vsel %vm194, %v1868, 0
      %1888 = vmatpush.bf16.msra.mxu0 0
      %1889 = vmatpush.bf16.msra.mxu0 0
      %1890 = vmatpush.bf16.msra.mxu0 0
      %1891 = vmatpush.bf16.msra.mxu0 0
      %1892 = vmatpush.bf16.msra.mxu0 0
      %1893 = vmatpush.bf16.msra.mxu0 0
      %1894 = vmatpush.bf16.msra.mxu0 %v1882
      %1895 = vmatpush.bf16.msra.mxu0 %v1881
      %1896 = vmatmul.bf16.gmra.mxu0 %v1886
      %v1897 = vpop.f32.mrf.mxu0
      %v1898 = vadd.f32 0.0, %v1897
      %v1899 = vpop.f32.mrf.mxu0
      %1900 = vdwg.mxu0
      %v1901 = vadd.f32 %v176, %v1898
      %v1902 = vld [vmem:[%s1759] sm:$0xf]
      %v1903 = vld [vmem:[%s214] sm:$0xf]
      %v1904 = vld [vmem:[%s214 + $0x4] sm:$0xf]
      %v1905 = vld [vmem:[%s214 + $0x8] sm:$0xf]
      %v1906 = vld [vmem:[%s214 + $0xc] sm:$0xf]
      %v1911 = vunpack.c.l.b16 %v1903
      %v1912 = vunpack.c.l.b16 %v1904
      %v1913 = vunpack.c.l.b16 %v1905
      %v1914 = vunpack.c.l.b16 %v1906
      %v1915 = vpack.c.b16 %v1912, %v1911
      %v1916 = vpack.c.b16 %v1914, %v1913
      %v1920 = vsel %vm194, %v1902, 0
      %1922 = vmatpush.bf16.msra.mxu0 0
      %1923 = vmatpush.bf16.msra.mxu0 0
      %1924 = vmatpush.bf16.msra.mxu0 0
      %1925 = vmatpush.bf16.msra.mxu0 0
      %1926 = vmatpush.bf16.msra.mxu0 0
      %1927 = vmatpush.bf16.msra.mxu0 0
      %1928 = vmatpush.bf16.msra.mxu0 %v1916
      %1929 = vmatpush.bf16.msra.mxu0 %v1915
      %1930 = vmatmul.bf16.gmra.mxu0 %v1920
      %v1931 = vpop.f32.mrf.mxu0
      %v1932 = vadd.f32 0.0, %v1931
      %v1933 = vpop.f32.mrf.mxu0
      %1934 = vdwg.mxu0
      %v1935 = vadd.f32 %v1901, %v1932
      %v1936 = vld [vmem:[%s1794] sm:$0xf]
      %v1937 = vld [vmem:[%s250] sm:$0xf]
      %v1938 = vld [vmem:[%s250 + $0x4] sm:$0xf]
      %v1939 = vld [vmem:[%s250 + $0x8] sm:$0xf]
      %v1940 = vld [vmem:[%s250 + $0xc] sm:$0xf]
      %v1945 = vunpack.c.l.b16 %v1937
      %v1946 = vunpack.c.l.b16 %v1938
      %v1947 = vunpack.c.l.b16 %v1939
      %v1948 = vunpack.c.l.b16 %v1940
      %v1949 = vpack.c.b16 %v1946, %v1945
      %v1950 = vpack.c.b16 %v1948, %v1947
      %v1954 = vsel %vm194, %v1936, 0
      %1956 = vmatpush.bf16.msra.mxu0 0
      %1957 = vmatpush.bf16.msra.mxu0 0
      %1958 = vmatpush.bf16.msra.mxu0 0
      %1959 = vmatpush.bf16.msra.mxu0 0
      %1960 = vmatpush.bf16.msra.mxu0 0
      %1961 = vmatpush.bf16.msra.mxu0 0
      %1962 = vmatpush.bf16.msra.mxu0 %v1950
      %1963 = vmatpush.bf16.msra.mxu0 %v1949
      %1964 = vmatmul.bf16.gmra.mxu0 %v1954
      %v1965 = vpop.f32.mrf.mxu0
      %v1966 = vadd.f32 0.0, %v1965
      %v1967 = vpop.f32.mrf.mxu0
      %1968 = vdwg.mxu0
      %v1969 = vadd.f32 %v1935, %v1966
      %v1970 = vld [vmem:[%s1829] sm:$0xf]
      %v1971 = vld [vmem:[%s286] sm:$0xf]
      %v1972 = vld [vmem:[%s286 + $0x4] sm:$0xf]
      %v1973 = vld [vmem:[%s286 + $0x8] sm:$0xf]
      %v1974 = vld [vmem:[%s286 + $0xc] sm:$0xf]
      %v1979 = vunpack.c.l.b16 %v1971
      %v1980 = vunpack.c.l.b16 %v1972
      %v1981 = vunpack.c.l.b16 %v1973
      %v1982 = vunpack.c.l.b16 %v1974
      %v1983 = vpack.c.b16 %v1980, %v1979
      %v1984 = vpack.c.b16 %v1982, %v1981
      %v1988 = vsel %vm194, %v1970, 0
      %1990 = vmatpush.bf16.msra.mxu0 0
      %1991 = vmatpush.bf16.msra.mxu0 0
      %1992 = vmatpush.bf16.msra.mxu0 0
      %1993 = vmatpush.bf16.msra.mxu0 0
      %1994 = vmatpush.bf16.msra.mxu0 0
      %1995 = vmatpush.bf16.msra.mxu0 0
      %1996 = vmatpush.bf16.msra.mxu0 %v1984
      %1997 = vmatpush.bf16.msra.mxu0 %v1983
      %1998 = vmatmul.bf16.gmra.mxu0 %v1988
      %v1999 = vpop.f32.mrf.mxu0
      %v2000 = vadd.f32 0.0, %v1999
      %v2001 = vpop.f32.mrf.mxu0
      %2002 = vdwg.mxu0
      %v2003 = vadd.f32 %v1969, %v2000
      %s2004 = scalar_lea.vmem %s165, 112
      %v2005 = vld [vmem:[%s2004] sm:$0xf]
      %v2006 = vld [vmem:[%s322] sm:$0xf]
      %v2007 = vld [vmem:[%s322 + $0x4] sm:$0xf]
      %v2008 = vld [vmem:[%s322 + $0x8] sm:$0xf]
      %v2009 = vld [vmem:[%s322 + $0xc] sm:$0xf]
      %v2014 = vunpack.c.l.b16 %v2006
      %v2015 = vunpack.c.l.b16 %v2007
      %v2016 = vunpack.c.l.b16 %v2008
      %v2017 = vunpack.c.l.b16 %v2009
      %v2018 = vpack.c.b16 %v2015, %v2014
      %v2019 = vpack.c.b16 %v2017, %v2016
      %v2023 = vsel %vm194, %v2005, 0
      %2025 = vmatpush.bf16.msra.mxu0 0
      %2026 = vmatpush.bf16.msra.mxu0 0
      %2027 = vmatpush.bf16.msra.mxu0 0
      %2028 = vmatpush.bf16.msra.mxu0 0
      %2029 = vmatpush.bf16.msra.mxu0 0
      %2030 = vmatpush.bf16.msra.mxu0 0
      %2031 = vmatpush.bf16.msra.mxu0 %v2019
      %2032 = vmatpush.bf16.msra.mxu0 %v2018
      %2033 = vmatmul.bf16.gmra.mxu0 %v2023
      %v2034 = vpop.f32.mrf.mxu0
      %v2035 = vadd.f32 0.0, %v2034
      %v2036 = vpop.f32.mrf.mxu0
      %2037 = vdwg.mxu0
      %v2038 = vadd.f32 %v2003, %v2035
      %s2039 = scalar_lea.vmem %s165, 116
      %v2040 = vld [vmem:[%s2039] sm:$0xf]
      %v2041 = vld [vmem:[%s358] sm:$0xf]
      %v2042 = vld [vmem:[%s358 + $0x4] sm:$0xf]
      %v2043 = vld [vmem:[%s358 + $0x8] sm:$0xf]
      %v2044 = vld [vmem:[%s358 + $0xc] sm:$0xf]
      %v2049 = vunpack.c.l.b16 %v2041
      %v2050 = vunpack.c.l.b16 %v2042
      %v2051 = vunpack.c.l.b16 %v2043
      %v2052 = vunpack.c.l.b16 %v2044
      %v2053 = vpack.c.b16 %v2050, %v2049
      %v2054 = vpack.c.b16 %v2052, %v2051
      %v2058 = vsel %vm194, %v2040, 0
      %2060 = vmatpush.bf16.msra.mxu0 0
      %2061 = vmatpush.bf16.msra.mxu0 0
      %2062 = vmatpush.bf16.msra.mxu0 0
      %2063 = vmatpush.bf16.msra.mxu0 0
      %2064 = vmatpush.bf16.msra.mxu0 0
      %2065 = vmatpush.bf16.msra.mxu0 0
      %2066 = vmatpush.bf16.msra.mxu0 %v2054
      %2067 = vmatpush.bf16.msra.mxu0 %v2053
      %2068 = vmatmul.bf16.gmra.mxu0 %v2058
      %v2069 = vpop.f32.mrf.mxu0
      %v2070 = vadd.f32 0.0, %v2069
      %v2071 = vpop.f32.mrf.mxu0
      %2072 = vdwg.mxu0
      %v2073 = vadd.f32 %v2038, %v2070
      %s2074 = scalar_lea.vmem %s165, 120
      %v2075 = vld [vmem:[%s2074] sm:$0xf]
      %v2076 = vld [vmem:[%s394] sm:$0xf]
      %v2077 = vld [vmem:[%s394 + $0x4] sm:$0xf]
      %v2078 = vld [vmem:[%s394 + $0x8] sm:$0xf]
      %v2079 = vld [vmem:[%s394 + $0xc] sm:$0xf]
      %v2084 = vunpack.c.l.b16 %v2076
      %v2085 = vunpack.c.l.b16 %v2077
      %v2086 = vunpack.c.l.b16 %v2078
      %v2087 = vunpack.c.l.b16 %v2079
      %v2088 = vpack.c.b16 %v2085, %v2084
      %v2089 = vpack.c.b16 %v2087, %v2086
      %v2093 = vsel %vm194, %v2075, 0
      %2095 = vmatpush.bf16.msra.mxu0 0
      %2096 = vmatpush.bf16.msra.mxu0 0
      %2097 = vmatpush.bf16.msra.mxu0 0
      %2098 = vmatpush.bf16.msra.mxu0 0
      %2099 = vmatpush.bf16.msra.mxu0 0
      %2100 = vmatpush.bf16.msra.mxu0 0
      %2101 = vmatpush.bf16.msra.mxu0 %v2089
      %2102 = vmatpush.bf16.msra.mxu0 %v2088
      %2103 = vmatmul.bf16.gmra.mxu0 %v2093
      %v2104 = vpop.f32.mrf.mxu0
      %v2105 = vadd.f32 0.0, %v2104
      %v2106 = vpop.f32.mrf.mxu0
      %2107 = vdwg.mxu0
      %v2108 = vadd.f32 %v2073, %v2105
      %s2109 = scalar_lea.vmem %s165, 124
      %v2110 = vld [vmem:[%s2109] sm:$0xf]
      %v2111 = vld [vmem:[%s430] sm:$0xf]
      %v2112 = vld [vmem:[%s430 + $0x4] sm:$0xf]
      %v2113 = vld [vmem:[%s430 + $0x8] sm:$0xf]
      %v2114 = vld [vmem:[%s430 + $0xc] sm:$0xf]
      %v2119 = vunpack.c.l.b16 %v2111
      %v2120 = vunpack.c.l.b16 %v2112
      %v2121 = vunpack.c.l.b16 %v2113
      %v2122 = vunpack.c.l.b16 %v2114
      %v2123 = vpack.c.b16 %v2120, %v2119
      %v2124 = vpack.c.b16 %v2122, %v2121
      %v2128 = vsel %vm194, %v2110, 0
      %2130 = vmatpush.bf16.msra.mxu0 0
      %2131 = vmatpush.bf16.msra.mxu0 0
      %2132 = vmatpush.bf16.msra.mxu0 0
      %2133 = vmatpush.bf16.msra.mxu0 0
      %2134 = vmatpush.bf16.msra.mxu0 0
      %2135 = vmatpush.bf16.msra.mxu0 0
      %2136 = vmatpush.bf16.msra.mxu0 %v2124
      %2137 = vmatpush.bf16.msra.mxu0 %v2123
      %2138 = vmatmul.bf16.gmra.mxu0 %v2128
      %v2139 = vpop.f32.mrf.mxu0
      %v2140 = vadd.f32 0.0, %v2139
      %v2141 = vpop.f32.mrf.mxu0
      %2142 = vdwg.mxu0
      %v2143 = vadd.f32 %v2108, %v2140
      %v2144 = vmax.f32 %v2143, 0.0
      %v2145 = vpack.c.bf16 %v2144, %v2144
      %s2146 = scalar_lea.vmem %s170, 24
      %2147 = vst.msk [vmem:[%s2146] sm:$0xf] %vm466, %v2145
      %v2148 = vld [vmem:[%s2004] sm:$0xf]
      %v2149 = vld [vmem:[%s1] sm:$0xf]
      %v2150 = vld [vmem:[%s1 + $0x4] sm:$0xf]
      %v2151 = vld [vmem:[%s1 + $0x8] sm:$0xf]
      %v2152 = vld [vmem:[%s1 + $0xc] sm:$0xf]
      %v2157 = vunpack.c.l.b16 %v2149
      %v2158 = vunpack.c.l.b16 %v2150
      %v2159 = vunpack.c.l.b16 %v2151
      %v2160 = vunpack.c.l.b16 %v2152
      %v2161 = vpack.c.b16 %v2158, %v2157
      %v2162 = vpack.c.b16 %v2160, %v2159
      %v2166 = vsel %vm194, %v2148, 0
      %2168 = vmatpush.bf16.msra.mxu0 0
      %2169 = vmatpush.bf16.msra.mxu0 0
      %2170 = vmatpush.bf16.msra.mxu0 0
      %2171 = vmatpush.bf16.msra.mxu0 0
      %2172 = vmatpush.bf16.msra.mxu0 0
      %2173 = vmatpush.bf16.msra.mxu0 0
      %2174 = vmatpush.bf16.msra.mxu0 %v2162
      %2175 = vmatpush.bf16.msra.mxu0 %v2161
      %2176 = vmatmul.bf16.gmra.mxu0 %v2166
      %v2177 = vpop.f32.mrf.mxu0
      %v2178 = vadd.f32 0.0, %v2177
      %v2179 = vpop.f32.mrf.mxu0
      %2180 = vdwg.mxu0
      %v2181 = vadd.f32 %v176, %v2178
      %v2182 = vld [vmem:[%s2039] sm:$0xf]
      %v2183 = vld [vmem:[%s214] sm:$0xf]
      %v2184 = vld [vmem:[%s214 + $0x4] sm:$0xf]
      %v2185 = vld [vmem:[%s214 + $0x8] sm:$0xf]
      %v2186 = vld [vmem:[%s214 + $0xc] sm:$0xf]
      %v2191 = vunpack.c.l.b16 %v2183
      %v2192 = vunpack.c.l.b16 %v2184
      %v2193 = vunpack.c.l.b16 %v2185
      %v2194 = vunpack.c.l.b16 %v2186
      %v2195 = vpack.c.b16 %v2192, %v2191
      %v2196 = vpack.c.b16 %v2194, %v2193
      %v2200 = vsel %vm194, %v2182, 0
      %2202 = vmatpush.bf16.msra.mxu0 0
      %2203 = vmatpush.bf16.msra.mxu0 0
      %2204 = vmatpush.bf16.msra.mxu0 0
      %2205 = vmatpush.bf16.msra.mxu0 0
      %2206 = vmatpush.bf16.msra.mxu0 0
      %2207 = vmatpush.bf16.msra.mxu0 0
      %2208 = vmatpush.bf16.msra.mxu0 %v2196
      %2209 = vmatpush.bf16.msra.mxu0 %v2195
      %2210 = vmatmul.bf16.gmra.mxu0 %v2200
      %v2211 = vpop.f32.mrf.mxu0
      %v2212 = vadd.f32 0.0, %v2211
      %v2213 = vpop.f32.mrf.mxu0
      %2214 = vdwg.mxu0
      %v2215 = vadd.f32 %v2181, %v2212
      %v2216 = vld [vmem:[%s2074] sm:$0xf]
      %v2217 = vld [vmem:[%s250] sm:$0xf]
      %v2218 = vld [vmem:[%s250 + $0x4] sm:$0xf]
      %v2219 = vld [vmem:[%s250 + $0x8] sm:$0xf]
      %v2220 = vld [vmem:[%s250 + $0xc] sm:$0xf]
      %v2225 = vunpack.c.l.b16 %v2217
      %v2226 = vunpack.c.l.b16 %v2218
      %v2227 = vunpack.c.l.b16 %v2219
      %v2228 = vunpack.c.l.b16 %v2220
      %v2229 = vpack.c.b16 %v2226, %v2225
      %v2230 = vpack.c.b16 %v2228, %v2227
      %v2234 = vsel %vm194, %v2216, 0
      %2236 = vmatpush.bf16.msra.mxu0 0
      %2237 = vmatpush.bf16.msra.mxu0 0
      %2238 = vmatpush.bf16.msra.mxu0 0
      %2239 = vmatpush.bf16.msra.mxu0 0
      %2240 = vmatpush.bf16.msra.mxu0 0
      %2241 = vmatpush.bf16.msra.mxu0 0
      %2242 = vmatpush.bf16.msra.mxu0 %v2230
      %2243 = vmatpush.bf16.msra.mxu0 %v2229
      %2244 = vmatmul.bf16.gmra.mxu0 %v2234
      %v2245 = vpop.f32.mrf.mxu0
      %v2246 = vadd.f32 0.0, %v2245
      %v2247 = vpop.f32.mrf.mxu0
      %2248 = vdwg.mxu0
      %v2249 = vadd.f32 %v2215, %v2246
      %v2250 = vld [vmem:[%s2109] sm:$0xf]
      %v2251 = vld [vmem:[%s286] sm:$0xf]
      %v2252 = vld [vmem:[%s286 + $0x4] sm:$0xf]
      %v2253 = vld [vmem:[%s286 + $0x8] sm:$0xf]
      %v2254 = vld [vmem:[%s286 + $0xc] sm:$0xf]
      %v2259 = vunpack.c.l.b16 %v2251
      %v2260 = vunpack.c.l.b16 %v2252
      %v2261 = vunpack.c.l.b16 %v2253
      %v2262 = vunpack.c.l.b16 %v2254
      %v2263 = vpack.c.b16 %v2260, %v2259
      %v2264 = vpack.c.b16 %v2262, %v2261
      %v2268 = vsel %vm194, %v2250, 0
      %2270 = vmatpush.bf16.msra.mxu0 0
      %2271 = vmatpush.bf16.msra.mxu0 0
      %2272 = vmatpush.bf16.msra.mxu0 0
      %2273 = vmatpush.bf16.msra.mxu0 0
      %2274 = vmatpush.bf16.msra.mxu0 0
      %2275 = vmatpush.bf16.msra.mxu0 0
      %2276 = vmatpush.bf16.msra.mxu0 %v2264
      %2277 = vmatpush.bf16.msra.mxu0 %v2263
      %2278 = vmatmul.bf16.gmra.mxu0 %v2268
      %v2279 = vpop.f32.mrf.mxu0
      %v2280 = vadd.f32 0.0, %v2279
      %v2281 = vpop.f32.mrf.mxu0
      %2282 = vdwg.mxu0
      %v2283 = vadd.f32 %v2249, %v2280
      %s2284 = scalar_lea.vmem %s165, 128
      %v2285 = vld [vmem:[%s2284] sm:$0xf]
      %v2286 = vld [vmem:[%s322] sm:$0xf]
      %v2287 = vld [vmem:[%s322 + $0x4] sm:$0xf]
      %v2288 = vld [vmem:[%s322 + $0x8] sm:$0xf]
      %v2289 = vld [vmem:[%s322 + $0xc] sm:$0xf]
      %v2294 = vunpack.c.l.b16 %v2286
      %v2295 = vunpack.c.l.b16 %v2287
      %v2296 = vunpack.c.l.b16 %v2288
      %v2297 = vunpack.c.l.b16 %v2289
      %v2298 = vpack.c.b16 %v2295, %v2294
      %v2299 = vpack.c.b16 %v2297, %v2296
      %v2303 = vsel %vm194, %v2285, 0
      %2305 = vmatpush.bf16.msra.mxu0 0
      %2306 = vmatpush.bf16.msra.mxu0 0
      %2307 = vmatpush.bf16.msra.mxu0 0
      %2308 = vmatpush.bf16.msra.mxu0 0
      %2309 = vmatpush.bf16.msra.mxu0 0
      %2310 = vmatpush.bf16.msra.mxu0 0
      %2311 = vmatpush.bf16.msra.mxu0 %v2299
      %2312 = vmatpush.bf16.msra.mxu0 %v2298
      %2313 = vmatmul.bf16.gmra.mxu0 %v2303
      %v2314 = vpop.f32.mrf.mxu0
      %v2315 = vadd.f32 0.0, %v2314
      %v2316 = vpop.f32.mrf.mxu0
      %2317 = vdwg.mxu0
      %v2318 = vadd.f32 %v2283, %v2315
      %s2319 = scalar_lea.vmem %s165, 132
      %v2320 = vld [vmem:[%s2319] sm:$0xf]
      %v2321 = vld [vmem:[%s358] sm:$0xf]
      %v2322 = vld [vmem:[%s358 + $0x4] sm:$0xf]
      %v2323 = vld [vmem:[%s358 + $0x8] sm:$0xf]
      %v2324 = vld [vmem:[%s358 + $0xc] sm:$0xf]
      %v2329 = vunpack.c.l.b16 %v2321
      %v2330 = vunpack.c.l.b16 %v2322
      %v2331 = vunpack.c.l.b16 %v2323
      %v2332 = vunpack.c.l.b16 %v2324
      %v2333 = vpack.c.b16 %v2330, %v2329
      %v2334 = vpack.c.b16 %v2332, %v2331
      %v2338 = vsel %vm194, %v2320, 0
      %2340 = vmatpush.bf16.msra.mxu0 0
      %2341 = vmatpush.bf16.msra.mxu0 0
      %2342 = vmatpush.bf16.msra.mxu0 0
      %2343 = vmatpush.bf16.msra.mxu0 0
      %2344 = vmatpush.bf16.msra.mxu0 0
      %2345 = vmatpush.bf16.msra.mxu0 0
      %2346 = vmatpush.bf16.msra.mxu0 %v2334
      %2347 = vmatpush.bf16.msra.mxu0 %v2333
      %2348 = vmatmul.bf16.gmra.mxu0 %v2338
      %v2349 = vpop.f32.mrf.mxu0
      %v2350 = vadd.f32 0.0, %v2349
      %v2351 = vpop.f32.mrf.mxu0
      %2352 = vdwg.mxu0
      %v2353 = vadd.f32 %v2318, %v2350
      %s2354 = scalar_lea.vmem %s165, 136
      %v2355 = vld [vmem:[%s2354] sm:$0xf]
      %v2356 = vld [vmem:[%s394] sm:$0xf]
      %v2357 = vld [vmem:[%s394 + $0x4] sm:$0xf]
      %v2358 = vld [vmem:[%s394 + $0x8] sm:$0xf]
      %v2359 = vld [vmem:[%s394 + $0xc] sm:$0xf]
      %v2364 = vunpack.c.l.b16 %v2356
      %v2365 = vunpack.c.l.b16 %v2357
      %v2366 = vunpack.c.l.b16 %v2358
      %v2367 = vunpack.c.l.b16 %v2359
      %v2368 = vpack.c.b16 %v2365, %v2364
      %v2369 = vpack.c.b16 %v2367, %v2366
      %v2373 = vsel %vm194, %v2355, 0
      %2375 = vmatpush.bf16.msra.mxu0 0
      %2376 = vmatpush.bf16.msra.mxu0 0
      %2377 = vmatpush.bf16.msra.mxu0 0
      %2378 = vmatpush.bf16.msra.mxu0 0
      %2379 = vmatpush.bf16.msra.mxu0 0
      %2380 = vmatpush.bf16.msra.mxu0 0
      %2381 = vmatpush.bf16.msra.mxu0 %v2369
      %2382 = vmatpush.bf16.msra.mxu0 %v2368
      %2383 = vmatmul.bf16.gmra.mxu0 %v2373
      %v2384 = vpop.f32.mrf.mxu0
      %v2385 = vadd.f32 0.0, %v2384
      %v2386 = vpop.f32.mrf.mxu0
      %2387 = vdwg.mxu0
      %v2388 = vadd.f32 %v2353, %v2385
      %s2389 = scalar_lea.vmem %s165, 140
      %v2390 = vld [vmem:[%s2389] sm:$0xf]
      %v2391 = vld [vmem:[%s430] sm:$0xf]
      %v2392 = vld [vmem:[%s430 + $0x4] sm:$0xf]
      %v2393 = vld [vmem:[%s430 + $0x8] sm:$0xf]
      %v2394 = vld [vmem:[%s430 + $0xc] sm:$0xf]
      %v2399 = vunpack.c.l.b16 %v2391
      %v2400 = vunpack.c.l.b16 %v2392
      %v2401 = vunpack.c.l.b16 %v2393
      %v2402 = vunpack.c.l.b16 %v2394
      %v2403 = vpack.c.b16 %v2400, %v2399
      %v2404 = vpack.c.b16 %v2402, %v2401
      %v2408 = vsel %vm194, %v2390, 0
      %2410 = vmatpush.bf16.msra.mxu0 0
      %2411 = vmatpush.bf16.msra.mxu0 0
      %2412 = vmatpush.bf16.msra.mxu0 0
      %2413 = vmatpush.bf16.msra.mxu0 0
      %2414 = vmatpush.bf16.msra.mxu0 0
      %2415 = vmatpush.bf16.msra.mxu0 0
      %2416 = vmatpush.bf16.msra.mxu0 %v2404
      %2417 = vmatpush.bf16.msra.mxu0 %v2403
      %2418 = vmatmul.bf16.gmra.mxu0 %v2408
      %v2419 = vpop.f32.mrf.mxu0
      %v2420 = vadd.f32 0.0, %v2419
      %v2421 = vpop.f32.mrf.mxu0
      %2422 = vdwg.mxu0
      %v2423 = vadd.f32 %v2388, %v2420
      %v2424 = vmax.f32 %v2423, 0.0
      %v2425 = vpack.c.bf16 %v2424, %v2424
      %s2426 = scalar_lea.vmem %s170, 28
      %2427 = vst.msk [vmem:[%s2426] sm:$0xf] %vm466, %v2425
      %p2428 = scmp.lt.s32.totalorder %s14, 1
      %s2429 = scalar_select %p2428, %s14, 1
      %s2430 = smul.addr %s2429, 8
      %s2431 = smul.addr %s2430, 4
      %s2432 = scalar_lea.vmem %s3, %s2431
      // Predicated region
      $region33: #{feature_extractor.3} parent=31 // pred_check
        %p2433 = pneg %p100
      $region34: #{feature_extractor.3} parent=31 // pred_check_branch
        %2435 = sbr.rel (%p2433) target = $region36
      $region35: #{feature_extractor.3} parent=31 // pred_region
        _
      $region36: #{feature_extractor.3} parent=31 // pred_fallthru
        _
    $region32: #{feature_extractor.3} parent=5 // pred_fallthru
      _
    %p2436 = scmp.le.s32.totalorder 2, %s9
    // Predicated region
    $region37: #{feature_extractor.3} parent=5 // pred_check
      %p2437 = pneg %p2436
    $region38: #{feature_extractor.3} parent=5 // pred_check_branch
      %2439 = sbr.rel (%p2437) target = $region40
    $region39: #{feature_extractor.3} parent=5 // pred_region
      %s2440 = ssub.s32 %s9, 2
      // Predicated region
      $region41: #{feature_extractor.3} parent=39 // pred_check
        %p2441 = pneg %p106
      $region42: #{feature_extractor.3} parent=39 // pred_check_branch
        %2443 = sbr.rel (%p2441) target = $region44
      $region43: #{feature_extractor.3} parent=39 // pred_region
        %p2444 = scmp.lt.s32.totalorder %s15, 1
        %s2445 = scalar_select %p2444, %s15, 1
        %s2446 = smul.addr %s2445, 8
        %s2447 = smul.addr %s2446, 4
        %s2448 = scalar_lea.vmem %s3, %s2447
      $region44: #{feature_extractor.3} parent=39 // pred_fallthru
        _
    $region40: #{feature_extractor.3} parent=5 // pred_fallthru
      _
  $region6: #{feature_extractor.3} parent=0 // loop_footer
    %s13 = sadd.s32 1, %s9
  $region7: #{feature_extractor.3} parent=0 // loop_footer_branch
    %8 = sbr.rel target = $region3
  $region8: #{feature_extractor.3} parent=0 // loop_exit
    _

</llo_original>
